<compile_context>
chip_gen: v5e
topology: v5e:2x2
jax: 0.10.0
libtpu: 0.0.40
codegen_flags: <defaults>
</compile_context>

<pallas_src>
import jax
import jax.numpy as jnp
from jax.experimental import pallas as pl
from jax.experimental.pallas import tpu as pltpu


GP = 128   # per-gate lane padding -> every gate slice is a whole, aligned vreg
BT = 8     # batch tile (one f32 sublane group); the grid shards batch in BT rows


# ---------------------------------------------------------------------------
# Fused kernel: encoder LSTM -> combine -> decoder LSTM -> out_fc
# ---------------------------------------------------------------------------
def _trajgen_kernel(tf_ref, src_ref, tgt_ref, extra_ref,
                    enc_wx_ref, enc_wh_ref, enc_b_ref,
                    dec_wx_ref, dec_b_ref, dec_wbig_ref, dec_bfold_ref,
                    wfc_ref, bfc_ref, out_ref):
    f32 = jnp.float32
    S = src_ref.shape[0]
    T, bt, D = tgt_ref.shape

    # Hoisted weight loads / bias broadcast (reused by every unrolled iteration).
    enc_wh = enc_wh_ref[...]                                   # (GP, 4*GP)
    dec_wbig = dec_wbig_ref[...]                               # (GP, 8*GP)
    bfold = jnp.broadcast_to(dec_bfold_ref[...], (bt, 4 * GP))  # (bt, 4*GP)

    def lstm_gates(pre, c):
        # One full-width sigmoid; tanh(g) = 2*sigmoid(2g) - 1 (g columns were
        # pre-scaled by 2 at pack time).  Only tanh(c_new) remains.
        sig = jax.nn.sigmoid(pre)
        i = sig[:, 0 * GP:1 * GP]
        f = sig[:, 1 * GP:2 * GP]
        g = 2.0 * sig[:, 2 * GP:3 * GP] - 1.0
        o = sig[:, 3 * GP:4 * GP]
        c_new = f * c + i * g
        h_new = o * jnp.tanh(c_new)
        return h_new, c_new

    # ---------------- encoder --------------------------------------------
    # Input projection for all S steps in one MXU call, off the recurrent chain.
    x_all = jnp.concatenate([src_ref[t] for t in range(S)], axis=0)      # (S*bt, I)
    xp_all = (jnp.dot(x_all, enc_wx_ref[...], preferred_element_type=f32)
              + enc_b_ref[...])                                          # (S*bt, 4GP)

    c = jnp.zeros((bt, GP), f32)
    h, c = lstm_gates(xp_all[0:bt], c)                   # h0 == 0 -> skip h @ Wh
    for t in range(1, S):
        pre = (xp_all[t * bt:(t + 1) * bt]
               + jnp.dot(h, enc_wh, preferred_element_type=f32))
        h, c = lstm_gates(pre, c)
    # features == output[:, -1, :] of nn.LSTM == final hidden state h

    # combined = [features | mode | random]: extra_ref is already padded to GP
    # lanes and h's lanes >= hidden_size are exactly zero, so this is a pure add.
    combined = h + extra_ref[...]

    # ---------------- decoder --------------------------------------------
    # Teacher-forced input projections (+ decoder bias), one matmul for all steps.
    t_all = jnp.concatenate([tgt_ref[t] for t in range(T - 1)], axis=0)   # ((T-1)*bt, D)
    tp_all = (jnp.dot(t_all, dec_wx_ref[...], preferred_element_type=f32)
              + dec_b_ref[...])                                           # ((T-1)*bt, 4GP)

    hd = combined
    cd = combined          # PyTorch module sets hidden = cell = combined
    hds = []
    for t in range(T - 1):
        # One matmul per step: [h-recurrence | out_fc-folded x-projection].
        big = jnp.dot(hd, dec_wbig, preferred_element_type=f32)           # (bt, 8GP)
        h_contrib = big[:, :4 * GP]
        if t == 0:
            x_contrib = tp_all[0:bt]                  # decoder_input = target[:, 0]
        else:
            fold = big[:, 4 * GP:] + bfold            # == pred_{t-1} @ Wx_dec + b_dec
            x_contrib = jnp.where(tf_ref[t - 1] == 1,
                                  tp_all[t * bt:(t + 1) * bt], fold)
        hd, cd = lstm_gates(h_contrib + x_contrib, cd)
        hds.append(hd)

    # out_fc over all decoder states in one matmul (off the serial chain).
    h_all = jnp.concatenate(hds, axis=0)                                  # ((T-1)*bt, GP)
    preds = (jnp.dot(h_all, wfc_ref[...], preferred_element_type=f32)
             + bfc_ref[...])                                              # ((T-1)*bt, D)

    out_ref[0] = jnp.zeros((bt, D), f32)              # row 0 stays zero (torch.zeros)
    for t in range(T - 1):
        out_ref[t + 1] = preds[t * bt:(t + 1) * bt]


def _run_trajgen(tf_flags, src, tgt, extra, w):
    S, B, I = src.shape
    T, _, D = tgt.shape
    assert B % BT == 0, "batch must be a multiple of the batch tile (8)"

    def wspec(arr):
        n = arr.ndim
        return pl.BlockSpec(arr.shape, lambda b, tf, n=n: (0,) * n)

    grid_spec = pltpu.PrefetchScalarGridSpec(
        num_scalar_prefetch=1,                       # teacher-forcing flags (SMEM)
        grid=(B // BT,),
        in_specs=[
            pl.BlockSpec((S, BT, I), lambda b, tf: (0, b, 0)),   # source (time-major)
            pl.BlockSpec((T, BT, D), lambda b, tf: (0, b, 0)),   # target (time-major)
            pl.BlockSpec((BT, GP), lambda b, tf: (b, 0)),        # padded [mode|random]
            wspec(w["enc_wx"]), wspec(w["enc_wh"]), wspec(w["enc_b"]),
            wspec(w["dec_wx"]), wspec(w["dec_b"]), wspec(w["dec_wbig"]),
            wspec(w["dec_bfold"]), wspec(w["wfc"]), wspec(w["bfc"]),
        ],
        out_specs=pl.BlockSpec((T, BT, D), lambda b, tf: (0, b, 0)),
    )
    return pl.pallas_call(
        _trajgen_kernel,
        out_shape=jax.ShapeDtypeStruct((T, B, D), jnp.float32),
        grid_spec=grid_spec,
        compiler_params=pltpu.CompilerParams(dimension_semantics=("parallel",)),
    )(tf_flags, src, tgt, extra,
      w["enc_wx"], w["enc_wh"], w["enc_b"],
      w["dec_wx"], w["dec_b"], w["dec_wbig"], w["dec_bfold"],
      w["wfc"], w["bfc"])


# ---------------------------------------------------------------------------
# Parameter init (torch-like per-gate layout) and one-time packing.
# ---------------------------------------------------------------------------
def init_params(key, input_size, hidden_size, output_size):
    Hd = hidden_size + 16
    ks = jax.random.split(key, 9)
    s = 0.1
    f32 = jnp.float32
    return {
        # encoder LSTM(input_size -> hidden_size), per-gate, pre-transposed
        "enc_wih": jax.random.normal(ks[0], (4, input_size, hidden_size), f32) * s,
        "enc_whh": jax.random.normal(ks[1], (4, hidden_size, hidden_size), f32) * s,
        "enc_b":   jax.random.normal(ks[2], (4, 1, hidden_size), f32) * s,
        # decoder LSTM(output_size -> hidden_size + 16)
        "dec_wih": jax.random.normal(ks[3], (4, output_size, Hd), f32) * s,
        "dec_whh": jax.random.normal(ks[4], (4, Hd, Hd), f32) * s,
        "dec_b":   jax.random.normal(ks[5], (4, 1, Hd), f32) * s,
        # nn.Embedding(4, 8)
        "emb":     jax.random.normal(ks[6], (4, 8), f32) * s,
        # out_fc: Linear(hidden_size + 16 -> output_size), pre-transposed
        "out_fc_w": jax.random.normal(ks[7], (Hd, output_size), f32) * s,
        "out_fc_b": jax.random.normal(ks[8], (1, output_size), f32) * s,
        # TODO(synk): self.in_fc exists in __init__ but is unused in forward().
    }


def _pack_gates(blocks, rows):
    """blocks: 4 arrays (r_k, width_k). Returns (rows, 4*GP) with gate k placed at
    lanes [k*GP, k*GP + width_k); the g-gate (k=2) is pre-scaled by 2 so the
    kernel can realise tanh(g) as 2*sigmoid(2g) - 1."""
    out = jnp.zeros((rows, 4 * GP), jnp.float32)
    for k, blk in enumerate(blocks):
        scale = 2.0 if k == 2 else 1.0
        out = out.at[:blk.shape[0], k * GP:k * GP + blk.shape[1]].set(blk * scale)
    return out


def pack_params(p, hidden_size):
    """Pack once (outside the jitted per-call path)."""
    Hd = hidden_size + 16
    I = p["enc_wih"].shape[1]
    D = p["dec_wih"].shape[1]

    enc_wx = _pack_gates([p["enc_wih"][k] for k in range(4)], I)       # (I, 4*GP)
    enc_wh = _pack_gates([p["enc_whh"][k] for k in range(4)], GP)      # (GP, 4*GP)
    enc_b = _pack_gates([p["enc_b"][k] for k in range(4)], 1)          # (1, 4*GP)

    dec_wx = _pack_gates([p["dec_wih"][k] for k in range(4)], D)       # (D, 4*GP)
    dec_wh = _pack_gates([p["dec_whh"][k] for k in range(4)], GP)      # (GP, 4*GP)
    dec_b = _pack_gates([p["dec_b"][k] for k in range(4)], 1)          # (1, 4*GP)

    wfc = jnp.zeros((GP, D), jnp.float32).at[:Hd].set(p["out_fc_w"])   # (GP, D)
    bfc = p["out_fc_b"]                                                # (1, D)

    # Fold out_fc into the decoder x-projection for the non-teacher-forced path:
    #   pred @ Wx_dec == hd @ (Wfc @ Wx_dec) + bfc @ Wx_dec
    wfold = wfc @ dec_wx                                               # (GP, 4*GP)
    dec_wbig = jnp.concatenate([dec_wh, wfold], axis=1)                # (GP, 8*GP)
    dec_bfold = bfc @ dec_wx + dec_b                                   # (1, 4*GP)

    return {"enc_wx": enc_wx, "enc_wh": enc_wh, "enc_b": enc_b,
            "dec_wx": dec_wx, "dec_b": dec_b, "dec_wbig": dec_wbig,
            "dec_bfold": dec_bfold, "wfc": wfc, "bfc": bfc, "emb": p["emb"]}


def trajectory_generator_forward(packed, source, target, mode, rng,
                                 hidden_size, teacher_forcing_ratio=0.2):
    """source: (B, S, input_size), target: (B, T, output_size), mode: (B,) int32."""
    B, T, _ = target.shape
    k_rand, k_tf = jax.random.split(rng)

    # random_vector = randn(B, 8) * stddev + mean  (stddev=1, mean=0)
    random_vector = jax.random.normal(k_rand, (B, 8), jnp.float32)
    mode_vector = packed["emb"][mode]                            # embedding lookup
    # [mode|random] pre-placed at lanes [H, H+16) of a GP-wide, zero-padded slab so
    # the kernel forms `combined` with a single add (no lane concat).
    extra = jnp.zeros((B, GP), jnp.float32)
    extra = extra.at[:, hidden_size:hidden_size + 8].set(mode_vector)
    extra = extra.at[:, hidden_size + 8:hidden_size + 16].set(random_vector)

    # teacher-forcing coin flips: torch.rand(1) < ratio, one coin per decode step
    tf_flags = (jax.random.uniform(k_tf, (T - 1,)) < teacher_forcing_ratio
                ).astype(jnp.int32)

    src_tbf = jnp.transpose(source, (1, 0, 2))                   # (S, B, I)
    tgt_tbd = jnp.transpose(target, (1, 0, 2))                   # (T, B, D)

    out_tbd = _run_trajgen(tf_flags, src_tbf, tgt_tbd, extra, packed)
    return jnp.transpose(out_tbd, (1, 0, 2))                     # (B, T, D)


def reference_forward(params, source, target, mode, rng, teacher_forcing_ratio=0.2):
    """Pure-JAX reference mirroring the PyTorch forward (same RNG usage)."""
    B, T, D = target.shape
    k_rand, k_tf = jax.random.split(rng)

    def cell(x, h, c, wih, whh, b):
        def pre(k):
            return x @ wih[k] + h @ whh[k] + b[k]
        i = jax.nn.sigmoid(pre(0)); f = jax.nn.sigmoid(pre(1))
        g = jnp.tanh(pre(2)); o = jax.nn.sigmoid(pre(3))
        c = f * c + i * g
        return o * jnp.tanh(c), c

    H = params["enc_whh"].shape[-1]
    h = jnp.zeros((B, H), jnp.float32)
    c = jnp.zeros((B, H), jnp.float32)
    for t in range(source.shape[1]):
        h, c = cell(source[:, t], h, c,
                    params["enc_wih"], params["enc_whh"], params["enc_b"])
    features = h

    random_vector = jax.random.normal(k_rand, (B, 8), jnp.float32)
    mode_vector = params["emb"][mode]
    combined = jnp.concatenate([features, mode_vector, random_vector], axis=1)
    tf_flags = (jax.random.uniform(k_tf, (T - 1,)) < teacher_forcing_ratio
                ).astype(jnp.int32)

    h = combined
    c = combined
    dec_in = target[:, 0]
    outputs = jnp.zeros((B, T, D), jnp.float32)
    for t in range(T - 1):
        h, c = cell(dec_in, h, c,
                    params["dec_wih"], params["dec_whh"], params["dec_b"])
        pred = h @ params["out_fc_w"] + params["out_fc_b"]
        outputs = outputs.at[:, t + 1].set(pred)
        dec_in = jnp.where(tf_flags[t] == 1, target[:, t + 1], pred)
    return outputs


if __name__ == "__main__":
    # Small shapes consistent with the module's forward.  B=16 -> grid of 2 batch
    # tiles (exercises the parallel batch axis; both TCs on v7x).
    B, S, T = 16, 6, 8          # batch, source seq len, target seq len
    INPUT_SIZE, HIDDEN_SIZE, OUTPUT_SIZE = 8, 32, 4

    root = jax.random.PRNGKey(0)
    k_param, k_src, k_tgt, k_mode, k_fwd = jax.random.split(root, 5)

    params = init_params(k_param, INPUT_SIZE, HIDDEN_SIZE, OUTPUT_SIZE)
    packed = pack_params(params, HIDDEN_SIZE)        # pack weights ONCE, outside jit

    source = jax.random.normal(k_src, (B, S, INPUT_SIZE), jnp.float32)
    target = jax.random.normal(k_tgt, (B, T, OUTPUT_SIZE), jnp.float32)
    mode = jax.random.randint(k_mode, (B,), 0, 4, jnp.int32)

    fwd = jax.jit(trajectory_generator_forward, static_argnums=(5, 6))
    out = fwd(packed, source, target, mode, k_fwd, HIDDEN_SIZE, 0.2)
    out = jax.block_until_ready(out)

    ref = reference_forward(params, source, target, mode, k_fwd, 0.2)
    assert out.shape == (B, T, OUTPUT_SIZE)
    assert bool(jnp.allclose(out, ref, atol=1e-3, rtol=1e-3)), "mismatch vs reference"

    print("KERNEL_OK")
</pallas_src>

<mosaic_0001>
module attributes {stable_mosaic.version = 11 : i64} {
  func.func @_trajgen_kernel(%arg0: i32, %arg1: memref<7xi32, #tpu.memory_space<smem>>, %arg2: memref<6x8x8xf32, #tpu.memory_space<vmem>>, %arg3: memref<8x8x4xf32, #tpu.memory_space<vmem>>, %arg4: memref<8x128xf32, #tpu.memory_space<vmem>>, %arg5: memref<8x512xf32, #tpu.memory_space<vmem>>, %arg6: memref<128x512xf32, #tpu.memory_space<vmem>>, %arg7: memref<1x512xf32, #tpu.memory_space<vmem>>, %arg8: memref<4x512xf32, #tpu.memory_space<vmem>>, %arg9: memref<1x512xf32, #tpu.memory_space<vmem>>, %arg10: memref<128x1024xf32, #tpu.memory_space<vmem>>, %arg11: memref<1x512xf32, #tpu.memory_space<vmem>>, %arg12: memref<128x4xf32, #tpu.memory_space<vmem>>, %arg13: memref<1x4xf32, #tpu.memory_space<vmem>>, %arg14: memref<8x8x4xf32, #tpu.memory_space<vmem>>) attributes {dimension_semantics = [#tpu.dimension_semantics<parallel>], iteration_bounds = array<i64: 2>, scalar_prefetch = 1 : i64, scratch_operands = 0 : i64, tpu.core_type = #tpu.core_type<tc>, window_params = [{transform_indices = @transform_0, window_bounds = array<i64: 6, 8, 8>}, {transform_indices = @transform_1, window_bounds = array<i64: 8, 8, 4>}, {transform_indices = @transform_2, window_bounds = array<i64: 8, 128>}, {pipeline_mode = #tpu.pipeline_mode<synchronous>, transform_indices = @transform_3, window_bounds = array<i64: 8, 512>}, {pipeline_mode = #tpu.pipeline_mode<synchronous>, transform_indices = @transform_4, window_bounds = array<i64: 128, 512>}, {pipeline_mode = #tpu.pipeline_mode<synchronous>, transform_indices = @transform_5, window_bounds = array<i64: 1, 512>}, {pipeline_mode = #tpu.pipeline_mode<synchronous>, transform_indices = @transform_6, window_bounds = array<i64: 4, 512>}, {pipeline_mode = #tpu.pipeline_mode<synchronous>, transform_indices = @transform_7, window_bounds = array<i64: 1, 512>}, {pipeline_mode = #tpu.pipeline_mode<synchronous>, transform_indices = @transform_8, window_bounds = array<i64: 128, 1024>}, {pipeline_mode = #tpu.pipeline_mode<synchronous>, transform_indices = @transform_9, window_bounds = array<i64: 1, 512>}, {pipeline_mode = #tpu.pipeline_mode<synchronous>, transform_indices = @transform_10, window_bounds = array<i64: 128, 4>}, {pipeline_mode = #tpu.pipeline_mode<synchronous>, transform_indices = @transform_11, window_bounds = array<i64: 1, 4>}, {transform_indices = @transform_12, window_bounds = array<i64: 8, 8, 4>}]} {
    %c0 = arith.constant 0 : index
    %c0_0 = arith.constant 0 : index
    %0 = vector.load %arg6[%c0, %c0_0] : memref<128x512xf32, #tpu.memory_space<vmem>>, vector<128x512xf32>
    %c0_1 = arith.constant 0 : index
    %c0_2 = arith.constant 0 : index
    %1 = vector.load %arg10[%c0_1, %c0_2] : memref<128x1024xf32, #tpu.memory_space<vmem>>, vector<128x1024xf32>
    %c0_3 = arith.constant 0 : index
    %c0_4 = arith.constant 0 : index
    %2 = vector.load %arg11[%c0_3, %c0_4] : memref<1x512xf32, #tpu.memory_space<vmem>>, vector<1x512xf32>
    %3 = vector.shape_cast %2 : vector<1x512xf32> to vector<1x512xf32>
    %4 = vector.broadcast %3 : vector<1x512xf32> to vector<8x512xf32>
    %c0_5 = arith.constant 0 : index
    %c0_6 = arith.constant 0 : index
    %c0_7 = arith.constant 0 : index
    %5 = vector.load %arg2[%c0_5, %c0_6, %c0_7] : memref<6x8x8xf32, #tpu.memory_space<vmem>>, vector<1x8x8xf32>
    %6 = vector.shape_cast %5 : vector<1x8x8xf32> to vector<8x8xf32>
    %c1 = arith.constant 1 : index
    %c0_8 = arith.constant 0 : index
    %c0_9 = arith.constant 0 : index
    %7 = vector.load %arg2[%c1, %c0_8, %c0_9] : memref<6x8x8xf32, #tpu.memory_space<vmem>>, vector<1x8x8xf32>
    %8 = vector.shape_cast %7 : vector<1x8x8xf32> to vector<8x8xf32>
    %c2 = arith.constant 2 : index
    %c0_10 = arith.constant 0 : index
    %c0_11 = arith.constant 0 : index
    %9 = vector.load %arg2[%c2, %c0_10, %c0_11] : memref<6x8x8xf32, #tpu.memory_space<vmem>>, vector<1x8x8xf32>
    %10 = vector.shape_cast %9 : vector<1x8x8xf32> to vector<8x8xf32>
    %c3 = arith.constant 3 : index
    %c0_12 = arith.constant 0 : index
    %c0_13 = arith.constant 0 : index
    %11 = vector.load %arg2[%c3, %c0_12, %c0_13] : memref<6x8x8xf32, #tpu.memory_space<vmem>>, vector<1x8x8xf32>
    %12 = vector.shape_cast %11 : vector<1x8x8xf32> to vector<8x8xf32>
    %c4 = arith.constant 4 : index
    %c0_14 = arith.constant 0 : index
    %c0_15 = arith.constant 0 : index
    %13 = vector.load %arg2[%c4, %c0_14, %c0_15] : memref<6x8x8xf32, #tpu.memory_space<vmem>>, vector<1x8x8xf32>
    %14 = vector.shape_cast %13 : vector<1x8x8xf32> to vector<8x8xf32>
    %c5 = arith.constant 5 : index
    %c0_16 = arith.constant 0 : index
    %c0_17 = arith.constant 0 : index
    %15 = vector.load %arg2[%c5, %c0_16, %c0_17] : memref<6x8x8xf32, #tpu.memory_space<vmem>>, vector<1x8x8xf32>
    %16 = vector.shape_cast %15 : vector<1x8x8xf32> to vector<8x8xf32>
    %17 = tpu.concatenate %6, %8, %10, %12, %14, %16 in 0 : vector<8x8xf32>, vector<8x8xf32>, vector<8x8xf32>, vector<8x8xf32>, vector<8x8xf32>, vector<8x8xf32> -> vector<48x8xf32>
    %c0_18 = arith.constant 0 : index
    %c0_19 = arith.constant 0 : index
    %18 = vector.load %arg5[%c0_18, %c0_19] : memref<8x512xf32, #tpu.memory_space<vmem>>, vector<8x512xf32>
    %cst = arith.constant dense<0.000000e+00> : vector<48x512xf32>
    %19 = tpu.matmul %17, %18, %cst {dimension_numbers = #tpu.dot_dimension_numbers<[1], [0], [0], [1], [0, 0, 1, 1], [], []>} : vector<48x8xf32>, vector<8x512xf32>, vector<48x512xf32> -> vector<48x512xf32>
    %c0_20 = arith.constant 0 : index
    %c0_21 = arith.constant 0 : index
    %20 = vector.load %arg7[%c0_20, %c0_21] : memref<1x512xf32, #tpu.memory_space<vmem>>, vector<1x512xf32>
    %21 = vector.broadcast %20 : vector<1x512xf32> to vector<48x512xf32>
    %22 = arith.addf %19, %21 : vector<48x512xf32>
    %cst_22 = arith.constant 0.000000e+00 : f32
    %23 = vector.broadcast %cst_22 : f32 to vector<8x128xf32>
    %24 = vector.extract_strided_slice %22 {offsets = [0, 0], sizes = [8, 512], strides = [1, 1]} : vector<48x512xf32> to vector<8x512xf32>
    %25 = arith.negf %24 : vector<8x512xf32>
    %26 = math.exp %25 : vector<8x512xf32>
    %cst_23 = arith.constant 1.000000e+00 : f32
    %27 = vector.broadcast %cst_23 : f32 to vector<8x512xf32>
    %28 = arith.addf %27, %26 : vector<8x512xf32>
    %29 = arith.divf %27, %28 : vector<8x512xf32>
    %30 = vector.extract_strided_slice %29 {offsets = [0, 0], sizes = [8, 128], strides = [1, 1]} : vector<8x512xf32> to vector<8x128xf32>
    %31 = vector.extract_strided_slice %29 {offsets = [0, 128], sizes = [8, 128], strides = [1, 1]} : vector<8x512xf32> to vector<8x128xf32>
    %32 = vector.extract_strided_slice %29 {offsets = [0, 256], sizes = [8, 128], strides = [1, 1]} : vector<8x512xf32> to vector<8x128xf32>
    %cst_24 = arith.constant 2.000000e+00 : f32
    %33 = vector.broadcast %cst_24 : f32 to vector<8x128xf32>
    %34 = arith.mulf %33, %32 : vector<8x128xf32>
    %cst_25 = arith.constant 1.000000e+00 : f32
    %35 = vector.broadcast %cst_25 : f32 to vector<8x128xf32>
    %36 = arith.subf %34, %35 : vector<8x128xf32>
    %37 = vector.extract_strided_slice %29 {offsets = [0, 384], sizes = [8, 128], strides = [1, 1]} : vector<8x512xf32> to vector<8x128xf32>
    %38 = arith.mulf %31, %23 : vector<8x128xf32>
    %39 = arith.mulf %30, %36 : vector<8x128xf32>
    %40 = arith.addf %38, %39 : vector<8x128xf32>
    %41 = math.tanh %40 : vector<8x128xf32>
    %42 = arith.mulf %37, %41 : vector<8x128xf32>
    %43 = vector.extract_strided_slice %22 {offsets = [8, 0], sizes = [8, 512], strides = [1, 1]} : vector<48x512xf32> to vector<8x512xf32>
    %cst_26 = arith.constant dense<0.000000e+00> : vector<8x512xf32>
    %44 = tpu.matmul %42, %0, %cst_26 {dimension_numbers = #tpu.dot_dimension_numbers<[1], [0], [0], [1], [0, 0, 1, 1], [], []>} : vector<8x128xf32>, vector<128x512xf32>, vector<8x512xf32> -> vector<8x512xf32>
    %45 = arith.addf %43, %44 : vector<8x512xf32>
    %46 = arith.negf %45 : vector<8x512xf32>
    %47 = math.exp %46 : vector<8x512xf32>
    %cst_27 = arith.constant 1.000000e+00 : f32
    %48 = vector.broadcast %cst_27 : f32 to vector<8x512xf32>
    %49 = arith.addf %48, %47 : vector<8x512xf32>
    %50 = arith.divf %48, %49 : vector<8x512xf32>
    %51 = vector.extract_strided_slice %50 {offsets = [0, 0], sizes = [8, 128], strides = [1, 1]} : vector<8x512xf32> to vector<8x128xf32>
    %52 = vector.extract_strided_slice %50 {offsets = [0, 128], sizes = [8, 128], strides = [1, 1]} : vector<8x512xf32> to vector<8x128xf32>
    %53 = vector.extract_strided_slice %50 {offsets = [0, 256], sizes = [8, 128], strides = [1, 1]} : vector<8x512xf32> to vector<8x128xf32>
    %cst_28 = arith.constant 2.000000e+00 : f32
    %54 = vector.broadcast %cst_28 : f32 to vector<8x128xf32>
    %55 = arith.mulf %54, %53 : vector<8x128xf32>
    %cst_29 = arith.constant 1.000000e+00 : f32
    %56 = vector.broadcast %cst_29 : f32 to vector<8x128xf32>
    %57 = arith.subf %55, %56 : vector<8x128xf32>
    %58 = vector.extract_strided_slice %50 {offsets = [0, 384], sizes = [8, 128], strides = [1, 1]} : vector<8x512xf32> to vector<8x128xf32>
    %59 = arith.mulf %52, %40 : vector<8x128xf32>
    %60 = arith.mulf %51, %57 : vector<8x128xf32>
    %61 = arith.addf %59, %60 : vector<8x128xf32>
    %62 = math.tanh %61 : vector<8x128xf32>
    %63 = arith.mulf %58, %62 : vector<8x128xf32>
    %64 = vector.extract_strided_slice %22 {offsets = [16, 0], sizes = [8, 512], strides = [1, 1]} : vector<48x512xf32> to vector<8x512xf32>
    %cst_30 = arith.constant dense<0.000000e+00> : vector<8x512xf32>
    %65 = tpu.matmul %63, %0, %cst_30 {dimension_numbers = #tpu.dot_dimension_numbers<[1], [0], [0], [1], [0, 0, 1, 1], [], []>} : vector<8x128xf32>, vector<128x512xf32>, vector<8x512xf32> -> vector<8x512xf32>
    %66 = arith.addf %64, %65 : vector<8x512xf32>
    %67 = arith.negf %66 : vector<8x512xf32>
    %68 = math.exp %67 : vector<8x512xf32>
    %cst_31 = arith.constant 1.000000e+00 : f32
    %69 = vector.broadcast %cst_31 : f32 to vector<8x512xf32>
    %70 = arith.addf %69, %68 : vector<8x512xf32>
    %71 = arith.divf %69, %70 : vector<8x512xf32>
    %72 = vector.extract_strided_slice %71 {offsets = [0, 0], sizes = [8, 128], strides = [1, 1]} : vector<8x512xf32> to vector<8x128xf32>
    %73 = vector.extract_strided_slice %71 {offsets = [0, 128], sizes = [8, 128], strides = [1, 1]} : vector<8x512xf32> to vector<8x128xf32>
    %74 = vector.extract_strided_slice %71 {offsets = [0, 256], sizes = [8, 128], strides = [1, 1]} : vector<8x512xf32> to vector<8x128xf32>
    %cst_32 = arith.constant 2.000000e+00 : f32
    %75 = vector.broadcast %cst_32 : f32 to vector<8x128xf32>
    %76 = arith.mulf %75, %74 : vector<8x128xf32>
    %cst_33 = arith.constant 1.000000e+00 : f32
    %77 = vector.broadcast %cst_33 : f32 to vector<8x128xf32>
    %78 = arith.subf %76, %77 : vector<8x128xf32>
    %79 = vector.extract_strided_slice %71 {offsets = [0, 384], sizes = [8, 128], strides = [1, 1]} : vector<8x512xf32> to vector<8x128xf32>
    %80 = arith.mulf %73, %61 : vector<8x128xf32>
    %81 = arith.mulf %72, %78 : vector<8x128xf32>
    %82 = arith.addf %80, %81 : vector<8x128xf32>
    %83 = math.tanh %82 : vector<8x128xf32>
    %84 = arith.mulf %79, %83 : vector<8x128xf32>
    %85 = vector.extract_strided_slice %22 {offsets = [24, 0], sizes = [8, 512], strides = [1, 1]} : vector<48x512xf32> to vector<8x512xf32>
    %cst_34 = arith.constant dense<0.000000e+00> : vector<8x512xf32>
    %86 = tpu.matmul %84, %0, %cst_34 {dimension_numbers = #tpu.dot_dimension_numbers<[1], [0], [0], [1], [0, 0, 1, 1], [], []>} : vector<8x128xf32>, vector<128x512xf32>, vector<8x512xf32> -> vector<8x512xf32>
    %87 = arith.addf %85, %86 : vector<8x512xf32>
    %88 = arith.negf %87 : vector<8x512xf32>
    %89 = math.exp %88 : vector<8x512xf32>
    %cst_35 = arith.constant 1.000000e+00 : f32
    %90 = vector.broadcast %cst_35 : f32 to vector<8x512xf32>
    %91 = arith.addf %90, %89 : vector<8x512xf32>
    %92 = arith.divf %90, %91 : vector<8x512xf32>
    %93 = vector.extract_strided_slice %92 {offsets = [0, 0], sizes = [8, 128], strides = [1, 1]} : vector<8x512xf32> to vector<8x128xf32>
    %94 = vector.extract_strided_slice %92 {offsets = [0, 128], sizes = [8, 128], strides = [1, 1]} : vector<8x512xf32> to vector<8x128xf32>
    %95 = vector.extract_strided_slice %92 {offsets = [0, 256], sizes = [8, 128], strides = [1, 1]} : vector<8x512xf32> to vector<8x128xf32>
    %cst_36 = arith.constant 2.000000e+00 : f32
    %96 = vector.broadcast %cst_36 : f32 to vector<8x128xf32>
    %97 = arith.mulf %96, %95 : vector<8x128xf32>
    %cst_37 = arith.constant 1.000000e+00 : f32
    %98 = vector.broadcast %cst_37 : f32 to vector<8x128xf32>
    %99 = arith.subf %97, %98 : vector<8x128xf32>
    %100 = vector.extract_strided_slice %92 {offsets = [0, 384], sizes = [8, 128], strides = [1, 1]} : vector<8x512xf32> to vector<8x128xf32>
    %101 = arith.mulf %94, %82 : vector<8x128xf32>
    %102 = arith.mulf %93, %99 : vector<8x128xf32>
    %103 = arith.addf %101, %102 : vector<8x128xf32>
    %104 = math.tanh %103 : vector<8x128xf32>
    %105 = arith.mulf %100, %104 : vector<8x128xf32>
    %106 = vector.extract_strided_slice %22 {offsets = [32, 0], sizes = [8, 512], strides = [1, 1]} : vector<48x512xf32> to vector<8x512xf32>
    %cst_38 = arith.constant dense<0.000000e+00> : vector<8x512xf32>
    %107 = tpu.matmul %105, %0, %cst_38 {dimension_numbers = #tpu.dot_dimension_numbers<[1], [0], [0], [1], [0, 0, 1, 1], [], []>} : vector<8x128xf32>, vector<128x512xf32>, vector<8x512xf32> -> vector<8x512xf32>
    %108 = arith.addf %106, %107 : vector<8x512xf32>
    %109 = arith.negf %108 : vector<8x512xf32>
    %110 = math.exp %109 : vector<8x512xf32>
    %cst_39 = arith.constant 1.000000e+00 : f32
    %111 = vector.broadcast %cst_39 : f32 to vector<8x512xf32>
    %112 = arith.addf %111, %110 : vector<8x512xf32>
    %113 = arith.divf %111, %112 : vector<8x512xf32>
    %114 = vector.extract_strided_slice %113 {offsets = [0, 0], sizes = [8, 128], strides = [1, 1]} : vector<8x512xf32> to vector<8x128xf32>
    %115 = vector.extract_strided_slice %113 {offsets = [0, 128], sizes = [8, 128], strides = [1, 1]} : vector<8x512xf32> to vector<8x128xf32>
    %116 = vector.extract_strided_slice %113 {offsets = [0, 256], sizes = [8, 128], strides = [1, 1]} : vector<8x512xf32> to vector<8x128xf32>
    %cst_40 = arith.constant 2.000000e+00 : f32
    %117 = vector.broadcast %cst_40 : f32 to vector<8x128xf32>
    %118 = arith.mulf %117, %116 : vector<8x128xf32>
    %cst_41 = arith.constant 1.000000e+00 : f32
    %119 = vector.broadcast %cst_41 : f32 to vector<8x128xf32>
    %120 = arith.subf %118, %119 : vector<8x128xf32>
    %121 = vector.extract_strided_slice %113 {offsets = [0, 384], sizes = [8, 128], strides = [1, 1]} : vector<8x512xf32> to vector<8x128xf32>
    %122 = arith.mulf %115, %103 : vector<8x128xf32>
    %123 = arith.mulf %114, %120 : vector<8x128xf32>
    %124 = arith.addf %122, %123 : vector<8x128xf32>
    %125 = math.tanh %124 : vector<8x128xf32>
    %126 = arith.mulf %121, %125 : vector<8x128xf32>
    %127 = vector.extract_strided_slice %22 {offsets = [40, 0], sizes = [8, 512], strides = [1, 1]} : vector<48x512xf32> to vector<8x512xf32>
    %cst_42 = arith.constant dense<0.000000e+00> : vector<8x512xf32>
    %128 = tpu.matmul %126, %0, %cst_42 {dimension_numbers = #tpu.dot_dimension_numbers<[1], [0], [0], [1], [0, 0, 1, 1], [], []>} : vector<8x128xf32>, vector<128x512xf32>, vector<8x512xf32> -> vector<8x512xf32>
    %129 = arith.addf %127, %128 : vector<8x512xf32>
    %130 = arith.negf %129 : vector<8x512xf32>
    %131 = math.exp %130 : vector<8x512xf32>
    %cst_43 = arith.constant 1.000000e+00 : f32
    %132 = vector.broadcast %cst_43 : f32 to vector<8x512xf32>
    %133 = arith.addf %132, %131 : vector<8x512xf32>
    %134 = arith.divf %132, %133 : vector<8x512xf32>
    %135 = vector.extract_strided_slice %134 {offsets = [0, 0], sizes = [8, 128], strides = [1, 1]} : vector<8x512xf32> to vector<8x128xf32>
    %136 = vector.extract_strided_slice %134 {offsets = [0, 128], sizes = [8, 128], strides = [1, 1]} : vector<8x512xf32> to vector<8x128xf32>
    %137 = vector.extract_strided_slice %134 {offsets = [0, 256], sizes = [8, 128], strides = [1, 1]} : vector<8x512xf32> to vector<8x128xf32>
    %cst_44 = arith.constant 2.000000e+00 : f32
    %138 = vector.broadcast %cst_44 : f32 to vector<8x128xf32>
    %139 = arith.mulf %138, %137 : vector<8x128xf32>
    %cst_45 = arith.constant 1.000000e+00 : f32
    %140 = vector.broadcast %cst_45 : f32 to vector<8x128xf32>
    %141 = arith.subf %139, %140 : vector<8x128xf32>
    %142 = vector.extract_strided_slice %134 {offsets = [0, 384], sizes = [8, 128], strides = [1, 1]} : vector<8x512xf32> to vector<8x128xf32>
    %143 = arith.mulf %136, %124 : vector<8x128xf32>
    %144 = arith.mulf %135, %141 : vector<8x128xf32>
    %145 = arith.addf %143, %144 : vector<8x128xf32>
    %146 = math.tanh %145 : vector<8x128xf32>
    %147 = arith.mulf %142, %146 : vector<8x128xf32>
    %c0_46 = arith.constant 0 : index
    %c0_47 = arith.constant 0 : index
    %148 = vector.load %arg4[%c0_46, %c0_47] : memref<8x128xf32, #tpu.memory_space<vmem>>, vector<8x128xf32>
    %149 = arith.addf %147, %148 : vector<8x128xf32>
    %c0_48 = arith.constant 0 : index
    %c0_49 = arith.constant 0 : index
    %c0_50 = arith.constant 0 : index
    %150 = vector.load %arg3[%c0_48, %c0_49, %c0_50] : memref<8x8x4xf32, #tpu.memory_space<vmem>>, vector<1x8x4xf32>
    %151 = vector.shape_cast %150 : vector<1x8x4xf32> to vector<8x4xf32>
    %c1_51 = arith.constant 1 : index
    %c0_52 = arith.constant 0 : index
    %c0_53 = arith.constant 0 : index
    %152 = vector.load %arg3[%c1_51, %c0_52, %c0_53] : memref<8x8x4xf32, #tpu.memory_space<vmem>>, vector<1x8x4xf32>
    %153 = vector.shape_cast %152 : vector<1x8x4xf32> to vector<8x4xf32>
    %c2_54 = arith.constant 2 : index
    %c0_55 = arith.constant 0 : index
    %c0_56 = arith.constant 0 : index
    %154 = vector.load %arg3[%c2_54, %c0_55, %c0_56] : memref<8x8x4xf32, #tpu.memory_space<vmem>>, vector<1x8x4xf32>
    %155 = vector.shape_cast %154 : vector<1x8x4xf32> to vector<8x4xf32>
    %c3_57 = arith.constant 3 : index
    %c0_58 = arith.constant 0 : index
    %c0_59 = arith.constant 0 : index
    %156 = vector.load %arg3[%c3_57, %c0_58, %c0_59] : memref<8x8x4xf32, #tpu.memory_space<vmem>>, vector<1x8x4xf32>
    %157 = vector.shape_cast %156 : vector<1x8x4xf32> to vector<8x4xf32>
    %c4_60 = arith.constant 4 : index
    %c0_61 = arith.constant 0 : index
    %c0_62 = arith.constant 0 : index
    %158 = vector.load %arg3[%c4_60, %c0_61, %c0_62] : memref<8x8x4xf32, #tpu.memory_space<vmem>>, vector<1x8x4xf32>
    %159 = vector.shape_cast %158 : vector<1x8x4xf32> to vector<8x4xf32>
    %c5_63 = arith.constant 5 : index
    %c0_64 = arith.constant 0 : index
    %c0_65 = arith.constant 0 : index
    %160 = vector.load %arg3[%c5_63, %c0_64, %c0_65] : memref<8x8x4xf32, #tpu.memory_space<vmem>>, vector<1x8x4xf32>
    %161 = vector.shape_cast %160 : vector<1x8x4xf32> to vector<8x4xf32>
    %c6 = arith.constant 6 : index
    %c0_66 = arith.constant 0 : index
    %c0_67 = arith.constant 0 : index
    %162 = vector.load %arg3[%c6, %c0_66, %c0_67] : memref<8x8x4xf32, #tpu.memory_space<vmem>>, vector<1x8x4xf32>
    %163 = vector.shape_cast %162 : vector<1x8x4xf32> to vector<8x4xf32>
    %164 = tpu.concatenate %151, %153, %155, %157, %159, %161, %163 in 0 : vector<8x4xf32>, vector<8x4xf32>, vector<8x4xf32>, vector<8x4xf32>, vector<8x4xf32>, vector<8x4xf32>, vector<8x4xf32> -> vector<56x4xf32>
    %c0_68 = arith.constant 0 : index
    %c0_69 = arith.constant 0 : index
    %165 = vector.load %arg8[%c0_68, %c0_69] : memref<4x512xf32, #tpu.memory_space<vmem>>, vector<4x512xf32>
    %cst_70 = arith.constant dense<0.000000e+00> : vector<56x512xf32>
    %166 = tpu.matmul %164, %165, %cst_70 {dimension_numbers = #tpu.dot_dimension_numbers<[1], [0], [0], [1], [0, 0, 1, 1], [], []>} : vector<56x4xf32>, vector<4x512xf32>, vector<56x512xf32> -> vector<56x512xf32>
    %c0_71 = arith.constant 0 : index
    %c0_72 = arith.constant 0 : index
    %167 = vector.load %arg9[%c0_71, %c0_72] : memref<1x512xf32, #tpu.memory_space<vmem>>, vector<1x512xf32>
    %168 = vector.broadcast %167 : vector<1x512xf32> to vector<56x512xf32>
    %169 = arith.addf %166, %168 : vector<56x512xf32>
    %cst_73 = arith.constant dense<0.000000e+00> : vector<8x1024xf32>
    %170 = tpu.matmul %149, %1, %cst_73 {dimension_numbers = #tpu.dot_dimension_numbers<[1], [0], [0], [1], [0, 0, 1, 1], [], []>} : vector<8x128xf32>, vector<128x1024xf32>, vector<8x1024xf32> -> vector<8x1024xf32>
    %171 = vector.extract_strided_slice %170 {offsets = [0, 0], sizes = [8, 512], strides = [1, 1]} : vector<8x1024xf32> to vector<8x512xf32>
    %172 = vector.extract_strided_slice %169 {offsets = [0, 0], sizes = [8, 512], strides = [1, 1]} : vector<56x512xf32> to vector<8x512xf32>
    %173 = arith.addf %171, %172 : vector<8x512xf32>
    %174 = arith.negf %173 : vector<8x512xf32>
    %175 = math.exp %174 : vector<8x512xf32>
    %cst_74 = arith.constant 1.000000e+00 : f32
    %176 = vector.broadcast %cst_74 : f32 to vector<8x512xf32>
    %177 = arith.addf %176, %175 : vector<8x512xf32>
    %178 = arith.divf %176, %177 : vector<8x512xf32>
    %179 = vector.extract_strided_slice %178 {offsets = [0, 0], sizes = [8, 128], strides = [1, 1]} : vector<8x512xf32> to vector<8x128xf32>
    %180 = vector.extract_strided_slice %178 {offsets = [0, 128], sizes = [8, 128], strides = [1, 1]} : vector<8x512xf32> to vector<8x128xf32>
    %181 = vector.extract_strided_slice %178 {offsets = [0, 256], sizes = [8, 128], strides = [1, 1]} : vector<8x512xf32> to vector<8x128xf32>
    %cst_75 = arith.constant 2.000000e+00 : f32
    %182 = vector.broadcast %cst_75 : f32 to vector<8x128xf32>
    %183 = arith.mulf %182, %181 : vector<8x128xf32>
    %cst_76 = arith.constant 1.000000e+00 : f32
    %184 = vector.broadcast %cst_76 : f32 to vector<8x128xf32>
    %185 = arith.subf %183, %184 : vector<8x128xf32>
    %186 = vector.extract_strided_slice %178 {offsets = [0, 384], sizes = [8, 128], strides = [1, 1]} : vector<8x512xf32> to vector<8x128xf32>
    %187 = arith.mulf %180, %149 : vector<8x128xf32>
    %188 = arith.mulf %179, %185 : vector<8x128xf32>
    %189 = arith.addf %187, %188 : vector<8x128xf32>
    %190 = math.tanh %189 : vector<8x128xf32>
    %191 = arith.mulf %186, %190 : vector<8x128xf32>
    %cst_77 = arith.constant dense<0.000000e+00> : vector<8x1024xf32>
    %192 = tpu.matmul %191, %1, %cst_77 {dimension_numbers = #tpu.dot_dimension_numbers<[1], [0], [0], [1], [0, 0, 1, 1], [], []>} : vector<8x128xf32>, vector<128x1024xf32>, vector<8x1024xf32> -> vector<8x1024xf32>
    %193 = vector.extract_strided_slice %192 {offsets = [0, 0], sizes = [8, 512], strides = [1, 1]} : vector<8x1024xf32> to vector<8x512xf32>
    %194 = vector.extract_strided_slice %192 {offsets = [0, 512], sizes = [8, 512], strides = [1, 1]} : vector<8x1024xf32> to vector<8x512xf32>
    %195 = arith.addf %194, %4 : vector<8x512xf32>
    %c0_78 = arith.constant 0 : index
    %196 = memref.load %arg1[%c0_78] : memref<7xi32, #tpu.memory_space<smem>>
    %c1_i32 = arith.constant 1 : i32
    %197 = arith.cmpi eq, %196, %c1_i32 : i32
    %198 = vector.extract_strided_slice %169 {offsets = [8, 0], sizes = [8, 512], strides = [1, 1]} : vector<56x512xf32> to vector<8x512xf32>
    %199 = arith.select %197, %198, %195 : vector<8x512xf32>
    %200 = arith.addf %193, %199 : vector<8x512xf32>
    %201 = arith.negf %200 : vector<8x512xf32>
    %202 = math.exp %201 : vector<8x512xf32>
    %cst_79 = arith.constant 1.000000e+00 : f32
    %203 = vector.broadcast %cst_79 : f32 to vector<8x512xf32>
    %204 = arith.addf %203, %202 : vector<8x512xf32>
    %205 = arith.divf %203, %204 : vector<8x512xf32>
    %206 = vector.extract_strided_slice %205 {offsets = [0, 0], sizes = [8, 128], strides = [1, 1]} : vector<8x512xf32> to vector<8x128xf32>
    %207 = vector.extract_strided_slice %205 {offsets = [0, 128], sizes = [8, 128], strides = [1, 1]} : vector<8x512xf32> to vector<8x128xf32>
    %208 = vector.extract_strided_slice %205 {offsets = [0, 256], sizes = [8, 128], strides = [1, 1]} : vector<8x512xf32> to vector<8x128xf32>
    %cst_80 = arith.constant 2.000000e+00 : f32
    %209 = vector.broadcast %cst_80 : f32 to vector<8x128xf32>
    %210 = arith.mulf %209, %208 : vector<8x128xf32>
    %cst_81 = arith.constant 1.000000e+00 : f32
    %211 = vector.broadcast %cst_81 : f32 to vector<8x128xf32>
    %212 = arith.subf %210, %211 : vector<8x128xf32>
    %213 = vector.extract_strided_slice %205 {offsets = [0, 384], sizes = [8, 128], strides = [1, 1]} : vector<8x512xf32> to vector<8x128xf32>
    %214 = arith.mulf %207, %189 : vector<8x128xf32>
    %215 = arith.mulf %206, %212 : vector<8x128xf32>
    %216 = arith.addf %214, %215 : vector<8x128xf32>
    %217 = math.tanh %216 : vector<8x128xf32>
    %218 = arith.mulf %213, %217 : vector<8x128xf32>
    %cst_82 = arith.constant dense<0.000000e+00> : vector<8x1024xf32>
    %219 = tpu.matmul %218, %1, %cst_82 {dimension_numbers = #tpu.dot_dimension_numbers<[1], [0], [0], [1], [0, 0, 1, 1], [], []>} : vector<8x128xf32>, vector<128x1024xf32>, vector<8x1024xf32> -> vector<8x1024xf32>
    %220 = vector.extract_strided_slice %219 {offsets = [0, 0], sizes = [8, 512], strides = [1, 1]} : vector<8x1024xf32> to vector<8x512xf32>
    %221 = vector.extract_strided_slice %219 {offsets = [0, 512], sizes = [8, 512], strides = [1, 1]} : vector<8x1024xf32> to vector<8x512xf32>
    %222 = arith.addf %221, %4 : vector<8x512xf32>
    %c1_83 = arith.constant 1 : index
    %223 = memref.load %arg1[%c1_83] : memref<7xi32, #tpu.memory_space<smem>>
    %c1_i32_84 = arith.constant 1 : i32
    %224 = arith.cmpi eq, %223, %c1_i32_84 : i32
    %225 = vector.extract_strided_slice %169 {offsets = [16, 0], sizes = [8, 512], strides = [1, 1]} : vector<56x512xf32> to vector<8x512xf32>
    %226 = arith.select %224, %225, %222 : vector<8x512xf32>
    %227 = arith.addf %220, %226 : vector<8x512xf32>
    %228 = arith.negf %227 : vector<8x512xf32>
    %229 = math.exp %228 : vector<8x512xf32>
    %cst_85 = arith.constant 1.000000e+00 : f32
    %230 = vector.broadcast %cst_85 : f32 to vector<8x512xf32>
    %231 = arith.addf %230, %229 : vector<8x512xf32>
    %232 = arith.divf %230, %231 : vector<8x512xf32>
    %233 = vector.extract_strided_slice %232 {offsets = [0, 0], sizes = [8, 128], strides = [1, 1]} : vector<8x512xf32> to vector<8x128xf32>
    %234 = vector.extract_strided_slice %232 {offsets = [0, 128], sizes = [8, 128], strides = [1, 1]} : vector<8x512xf32> to vector<8x128xf32>
    %235 = vector.extract_strided_slice %232 {offsets = [0, 256], sizes = [8, 128], strides = [1, 1]} : vector<8x512xf32> to vector<8x128xf32>
    %cst_86 = arith.constant 2.000000e+00 : f32
    %236 = vector.broadcast %cst_86 : f32 to vector<8x128xf32>
    %237 = arith.mulf %236, %235 : vector<8x128xf32>
    %cst_87 = arith.constant 1.000000e+00 : f32
    %238 = vector.broadcast %cst_87 : f32 to vector<8x128xf32>
    %239 = arith.subf %237, %238 : vector<8x128xf32>
    %240 = vector.extract_strided_slice %232 {offsets = [0, 384], sizes = [8, 128], strides = [1, 1]} : vector<8x512xf32> to vector<8x128xf32>
    %241 = arith.mulf %234, %216 : vector<8x128xf32>
    %242 = arith.mulf %233, %239 : vector<8x128xf32>
    %243 = arith.addf %241, %242 : vector<8x128xf32>
    %244 = math.tanh %243 : vector<8x128xf32>
    %245 = arith.mulf %240, %244 : vector<8x128xf32>
    %cst_88 = arith.constant dense<0.000000e+00> : vector<8x1024xf32>
    %246 = tpu.matmul %245, %1, %cst_88 {dimension_numbers = #tpu.dot_dimension_numbers<[1], [0], [0], [1], [0, 0, 1, 1], [], []>} : vector<8x128xf32>, vector<128x1024xf32>, vector<8x1024xf32> -> vector<8x1024xf32>
    %247 = vector.extract_strided_slice %246 {offsets = [0, 0], sizes = [8, 512], strides = [1, 1]} : vector<8x1024xf32> to vector<8x512xf32>
    %248 = vector.extract_strided_slice %246 {offsets = [0, 512], sizes = [8, 512], strides = [1, 1]} : vector<8x1024xf32> to vector<8x512xf32>
    %249 = arith.addf %248, %4 : vector<8x512xf32>
    %c2_89 = arith.constant 2 : index
    %250 = memref.load %arg1[%c2_89] : memref<7xi32, #tpu.memory_space<smem>>
    %c1_i32_90 = arith.constant 1 : i32
    %251 = arith.cmpi eq, %250, %c1_i32_90 : i32
    %252 = vector.extract_strided_slice %169 {offsets = [24, 0], sizes = [8, 512], strides = [1, 1]} : vector<56x512xf32> to vector<8x512xf32>
    %253 = arith.select %251, %252, %249 : vector<8x512xf32>
    %254 = arith.addf %247, %253 : vector<8x512xf32>
    %255 = arith.negf %254 : vector<8x512xf32>
    %256 = math.exp %255 : vector<8x512xf32>
    %cst_91 = arith.constant 1.000000e+00 : f32
    %257 = vector.broadcast %cst_91 : f32 to vector<8x512xf32>
    %258 = arith.addf %257, %256 : vector<8x512xf32>
    %259 = arith.divf %257, %258 : vector<8x512xf32>
    %260 = vector.extract_strided_slice %259 {offsets = [0, 0], sizes = [8, 128], strides = [1, 1]} : vector<8x512xf32> to vector<8x128xf32>
    %261 = vector.extract_strided_slice %259 {offsets = [0, 128], sizes = [8, 128], strides = [1, 1]} : vector<8x512xf32> to vector<8x128xf32>
    %262 = vector.extract_strided_slice %259 {offsets = [0, 256], sizes = [8, 128], strides = [1, 1]} : vector<8x512xf32> to vector<8x128xf32>
    %cst_92 = arith.constant 2.000000e+00 : f32
    %263 = vector.broadcast %cst_92 : f32 to vector<8x128xf32>
    %264 = arith.mulf %263, %262 : vector<8x128xf32>
    %cst_93 = arith.constant 1.000000e+00 : f32
    %265 = vector.broadcast %cst_93 : f32 to vector<8x128xf32>
    %266 = arith.subf %264, %265 : vector<8x128xf32>
    %267 = vector.extract_strided_slice %259 {offsets = [0, 384], sizes = [8, 128], strides = [1, 1]} : vector<8x512xf32> to vector<8x128xf32>
    %268 = arith.mulf %261, %243 : vector<8x128xf32>
    %269 = arith.mulf %260, %266 : vector<8x128xf32>
    %270 = arith.addf %268, %269 : vector<8x128xf32>
    %271 = math.tanh %270 : vector<8x128xf32>
    %272 = arith.mulf %267, %271 : vector<8x128xf32>
    %cst_94 = arith.constant dense<0.000000e+00> : vector<8x1024xf32>
    %273 = tpu.matmul %272, %1, %cst_94 {dimension_numbers = #tpu.dot_dimension_numbers<[1], [0], [0], [1], [0, 0, 1, 1], [], []>} : vector<8x128xf32>, vector<128x1024xf32>, vector<8x1024xf32> -> vector<8x1024xf32>
    %274 = vector.extract_strided_slice %273 {offsets = [0, 0], sizes = [8, 512], strides = [1, 1]} : vector<8x1024xf32> to vector<8x512xf32>
    %275 = vector.extract_strided_slice %273 {offsets = [0, 512], sizes = [8, 512], strides = [1, 1]} : vector<8x1024xf32> to vector<8x512xf32>
    %276 = arith.addf %275, %4 : vector<8x512xf32>
    %c3_95 = arith.constant 3 : index
    %277 = memref.load %arg1[%c3_95] : memref<7xi32, #tpu.memory_space<smem>>
    %c1_i32_96 = arith.constant 1 : i32
    %278 = arith.cmpi eq, %277, %c1_i32_96 : i32
    %279 = vector.extract_strided_slice %169 {offsets = [32, 0], sizes = [8, 512], strides = [1, 1]} : vector<56x512xf32> to vector<8x512xf32>
    %280 = arith.select %278, %279, %276 : vector<8x512xf32>
    %281 = arith.addf %274, %280 : vector<8x512xf32>
    %282 = arith.negf %281 : vector<8x512xf32>
    %283 = math.exp %282 : vector<8x512xf32>
    %cst_97 = arith.constant 1.000000e+00 : f32
    %284 = vector.broadcast %cst_97 : f32 to vector<8x512xf32>
    %285 = arith.addf %284, %283 : vector<8x512xf32>
    %286 = arith.divf %284, %285 : vector<8x512xf32>
    %287 = vector.extract_strided_slice %286 {offsets = [0, 0], sizes = [8, 128], strides = [1, 1]} : vector<8x512xf32> to vector<8x128xf32>
    %288 = vector.extract_strided_slice %286 {offsets = [0, 128], sizes = [8, 128], strides = [1, 1]} : vector<8x512xf32> to vector<8x128xf32>
    %289 = vector.extract_strided_slice %286 {offsets = [0, 256], sizes = [8, 128], strides = [1, 1]} : vector<8x512xf32> to vector<8x128xf32>
    %cst_98 = arith.constant 2.000000e+00 : f32
    %290 = vector.broadcast %cst_98 : f32 to vector<8x128xf32>
    %291 = arith.mulf %290, %289 : vector<8x128xf32>
    %cst_99 = arith.constant 1.000000e+00 : f32
    %292 = vector.broadcast %cst_99 : f32 to vector<8x128xf32>
    %293 = arith.subf %291, %292 : vector<8x128xf32>
    %294 = vector.extract_strided_slice %286 {offsets = [0, 384], sizes = [8, 128], strides = [1, 1]} : vector<8x512xf32> to vector<8x128xf32>
    %295 = arith.mulf %288, %270 : vector<8x128xf32>
    %296 = arith.mulf %287, %293 : vector<8x128xf32>
    %297 = arith.addf %295, %296 : vector<8x128xf32>
    %298 = math.tanh %297 : vector<8x128xf32>
    %299 = arith.mulf %294, %298 : vector<8x128xf32>
    %cst_100 = arith.constant dense<0.000000e+00> : vector<8x1024xf32>
    %300 = tpu.matmul %299, %1, %cst_100 {dimension_numbers = #tpu.dot_dimension_numbers<[1], [0], [0], [1], [0, 0, 1, 1], [], []>} : vector<8x128xf32>, vector<128x1024xf32>, vector<8x1024xf32> -> vector<8x1024xf32>
    %301 = vector.extract_strided_slice %300 {offsets = [0, 0], sizes = [8, 512], strides = [1, 1]} : vector<8x1024xf32> to vector<8x512xf32>
    %302 = vector.extract_strided_slice %300 {offsets = [0, 512], sizes = [8, 512], strides = [1, 1]} : vector<8x1024xf32> to vector<8x512xf32>
    %303 = arith.addf %302, %4 : vector<8x512xf32>
    %c4_101 = arith.constant 4 : index
    %304 = memref.load %arg1[%c4_101] : memref<7xi32, #tpu.memory_space<smem>>
    %c1_i32_102 = arith.constant 1 : i32
    %305 = arith.cmpi eq, %304, %c1_i32_102 : i32
    %306 = vector.extract_strided_slice %169 {offsets = [40, 0], sizes = [8, 512], strides = [1, 1]} : vector<56x512xf32> to vector<8x512xf32>
    %307 = arith.select %305, %306, %303 : vector<8x512xf32>
    %308 = arith.addf %301, %307 : vector<8x512xf32>
    %309 = arith.negf %308 : vector<8x512xf32>
    %310 = math.exp %309 : vector<8x512xf32>
    %cst_103 = arith.constant 1.000000e+00 : f32
    %311 = vector.broadcast %cst_103 : f32 to vector<8x512xf32>
    %312 = arith.addf %311, %310 : vector<8x512xf32>
    %313 = arith.divf %311, %312 : vector<8x512xf32>
    %314 = vector.extract_strided_slice %313 {offsets = [0, 0], sizes = [8, 128], strides = [1, 1]} : vector<8x512xf32> to vector<8x128xf32>
    %315 = vector.extract_strided_slice %313 {offsets = [0, 128], sizes = [8, 128], strides = [1, 1]} : vector<8x512xf32> to vector<8x128xf32>
    %316 = vector.extract_strided_slice %313 {offsets = [0, 256], sizes = [8, 128], strides = [1, 1]} : vector<8x512xf32> to vector<8x128xf32>
    %cst_104 = arith.constant 2.000000e+00 : f32
    %317 = vector.broadcast %cst_104 : f32 to vector<8x128xf32>
    %318 = arith.mulf %317, %316 : vector<8x128xf32>
    %cst_105 = arith.constant 1.000000e+00 : f32
    %319 = vector.broadcast %cst_105 : f32 to vector<8x128xf32>
    %320 = arith.subf %318, %319 : vector<8x128xf32>
    %321 = vector.extract_strided_slice %313 {offsets = [0, 384], sizes = [8, 128], strides = [1, 1]} : vector<8x512xf32> to vector<8x128xf32>
    %322 = arith.mulf %315, %297 : vector<8x128xf32>
    %323 = arith.mulf %314, %320 : vector<8x128xf32>
    %324 = arith.addf %322, %323 : vector<8x128xf32>
    %325 = math.tanh %324 : vector<8x128xf32>
    %326 = arith.mulf %321, %325 : vector<8x128xf32>
    %cst_106 = arith.constant dense<0.000000e+00> : vector<8x1024xf32>
    %327 = tpu.matmul %326, %1, %cst_106 {dimension_numbers = #tpu.dot_dimension_numbers<[1], [0], [0], [1], [0, 0, 1, 1], [], []>} : vector<8x128xf32>, vector<128x1024xf32>, vector<8x1024xf32> -> vector<8x1024xf32>
    %328 = vector.extract_strided_slice %327 {offsets = [0, 0], sizes = [8, 512], strides = [1, 1]} : vector<8x1024xf32> to vector<8x512xf32>
    %329 = vector.extract_strided_slice %327 {offsets = [0, 512], sizes = [8, 512], strides = [1, 1]} : vector<8x1024xf32> to vector<8x512xf32>
    %330 = arith.addf %329, %4 : vector<8x512xf32>
    %c5_107 = arith.constant 5 : index
    %331 = memref.load %arg1[%c5_107] : memref<7xi32, #tpu.memory_space<smem>>
    %c1_i32_108 = arith.constant 1 : i32
    %332 = arith.cmpi eq, %331, %c1_i32_108 : i32
    %333 = vector.extract_strided_slice %169 {offsets = [48, 0], sizes = [8, 512], strides = [1, 1]} : vector<56x512xf32> to vector<8x512xf32>
    %334 = arith.select %332, %333, %330 : vector<8x512xf32>
    %335 = arith.addf %328, %334 : vector<8x512xf32>
    %336 = arith.negf %335 : vector<8x512xf32>
    %337 = math.exp %336 : vector<8x512xf32>
    %cst_109 = arith.constant 1.000000e+00 : f32
    %338 = vector.broadcast %cst_109 : f32 to vector<8x512xf32>
    %339 = arith.addf %338, %337 : vector<8x512xf32>
    %340 = arith.divf %338, %339 : vector<8x512xf32>
    %341 = vector.extract_strided_slice %340 {offsets = [0, 0], sizes = [8, 128], strides = [1, 1]} : vector<8x512xf32> to vector<8x128xf32>
    %342 = vector.extract_strided_slice %340 {offsets = [0, 128], sizes = [8, 128], strides = [1, 1]} : vector<8x512xf32> to vector<8x128xf32>
    %343 = vector.extract_strided_slice %340 {offsets = [0, 256], sizes = [8, 128], strides = [1, 1]} : vector<8x512xf32> to vector<8x128xf32>
    %cst_110 = arith.constant 2.000000e+00 : f32
    %344 = vector.broadcast %cst_110 : f32 to vector<8x128xf32>
    %345 = arith.mulf %344, %343 : vector<8x128xf32>
    %cst_111 = arith.constant 1.000000e+00 : f32
    %346 = vector.broadcast %cst_111 : f32 to vector<8x128xf32>
    %347 = arith.subf %345, %346 : vector<8x128xf32>
    %348 = vector.extract_strided_slice %340 {offsets = [0, 384], sizes = [8, 128], strides = [1, 1]} : vector<8x512xf32> to vector<8x128xf32>
    %349 = arith.mulf %342, %324 : vector<8x128xf32>
    %350 = arith.mulf %341, %347 : vector<8x128xf32>
    %351 = arith.addf %349, %350 : vector<8x128xf32>
    %352 = math.tanh %351 : vector<8x128xf32>
    %353 = arith.mulf %348, %352 : vector<8x128xf32>
    %354 = tpu.concatenate %191, %218, %245, %272, %299, %326, %353 in 0 : vector<8x128xf32>, vector<8x128xf32>, vector<8x128xf32>, vector<8x128xf32>, vector<8x128xf32>, vector<8x128xf32>, vector<8x128xf32> -> vector<56x128xf32>
    %c0_112 = arith.constant 0 : index
    %c0_113 = arith.constant 0 : index
    %355 = vector.load %arg12[%c0_112, %c0_113] : memref<128x4xf32, #tpu.memory_space<vmem>>, vector<128x4xf32>
    %cst_114 = arith.constant dense<0.000000e+00> : vector<56x4xf32>
    %356 = tpu.matmul %354, %355, %cst_114 {dimension_numbers = #tpu.dot_dimension_numbers<[1], [0], [0], [1], [0, 0, 1, 1], [], []>} : vector<56x128xf32>, vector<128x4xf32>, vector<56x4xf32> -> vector<56x4xf32>
    %c0_115 = arith.constant 0 : index
    %c0_116 = arith.constant 0 : index
    %357 = vector.load %arg13[%c0_115, %c0_116] : memref<1x4xf32, #tpu.memory_space<vmem>>, vector<1x4xf32>
    %358 = vector.broadcast %357 : vector<1x4xf32> to vector<56x4xf32>
    %359 = arith.addf %356, %358 : vector<56x4xf32>
    %cst_117 = arith.constant 0.000000e+00 : f32
    %360 = vector.broadcast %cst_117 : f32 to vector<8x4xf32>
    %c0_118 = arith.constant 0 : index
    %c0_119 = arith.constant 0 : index
    %c0_120 = arith.constant 0 : index
    %361 = vector.load %arg14[%c0_118, %c0_119, %c0_120] : memref<8x8x4xf32, #tpu.memory_space<vmem>>, vector<1x8x4xf32>
    %362 = vector.shape_cast %361 : vector<1x8x4xf32> to vector<8x4xf32>
    %363 = vector.shape_cast %360 : vector<8x4xf32> to vector<1x8x4xf32>
    tpu.vector_store %arg14[%c0_118, %c0_119, %c0_120], %363 {strides = array<i32>} : memref<8x8x4xf32, #tpu.memory_space<vmem>>, vector<1x8x4xf32>,
    %364 = vector.extract_strided_slice %359 {offsets = [0, 0], sizes = [8, 4], strides = [1, 1]} : vector<56x4xf32> to vector<8x4xf32>
    %c1_121 = arith.constant 1 : index
    %c0_122 = arith.constant 0 : index
    %c0_123 = arith.constant 0 : index
    %365 = vector.load %arg14[%c1_121, %c0_122, %c0_123] : memref<8x8x4xf32, #tpu.memory_space<vmem>>, vector<1x8x4xf32>
    %366 = vector.shape_cast %365 : vector<1x8x4xf32> to vector<8x4xf32>
    %367 = vector.shape_cast %364 : vector<8x4xf32> to vector<1x8x4xf32>
    tpu.vector_store %arg14[%c1_121, %c0_122, %c0_123], %367 {strides = array<i32>} : memref<8x8x4xf32, #tpu.memory_space<vmem>>, vector<1x8x4xf32>,
    %368 = vector.extract_strided_slice %359 {offsets = [8, 0], sizes = [8, 4], strides = [1, 1]} : vector<56x4xf32> to vector<8x4xf32>
    %c2_124 = arith.constant 2 : index
    %c0_125 = arith.constant 0 : index
    %c0_126 = arith.constant 0 : index
    %369 = vector.load %arg14[%c2_124, %c0_125, %c0_126] : memref<8x8x4xf32, #tpu.memory_space<vmem>>, vector<1x8x4xf32>
    %370 = vector.shape_cast %369 : vector<1x8x4xf32> to vector<8x4xf32>
    %371 = vector.shape_cast %368 : vector<8x4xf32> to vector<1x8x4xf32>
    tpu.vector_store %arg14[%c2_124, %c0_125, %c0_126], %371 {strides = array<i32>} : memref<8x8x4xf32, #tpu.memory_space<vmem>>, vector<1x8x4xf32>,
    %372 = vector.extract_strided_slice %359 {offsets = [16, 0], sizes = [8, 4], strides = [1, 1]} : vector<56x4xf32> to vector<8x4xf32>
    %c3_127 = arith.constant 3 : index
    %c0_128 = arith.constant 0 : index
    %c0_129 = arith.constant 0 : index
    %373 = vector.load %arg14[%c3_127, %c0_128, %c0_129] : memref<8x8x4xf32, #tpu.memory_space<vmem>>, vector<1x8x4xf32>
    %374 = vector.shape_cast %373 : vector<1x8x4xf32> to vector<8x4xf32>
    %375 = vector.shape_cast %372 : vector<8x4xf32> to vector<1x8x4xf32>
    tpu.vector_store %arg14[%c3_127, %c0_128, %c0_129], %375 {strides = array<i32>} : memref<8x8x4xf32, #tpu.memory_space<vmem>>, vector<1x8x4xf32>,
    %376 = vector.extract_strided_slice %359 {offsets = [24, 0], sizes = [8, 4], strides = [1, 1]} : vector<56x4xf32> to vector<8x4xf32>
    %c4_130 = arith.constant 4 : index
    %c0_131 = arith.constant 0 : index
    %c0_132 = arith.constant 0 : index
    %377 = vector.load %arg14[%c4_130, %c0_131, %c0_132] : memref<8x8x4xf32, #tpu.memory_space<vmem>>, vector<1x8x4xf32>
    %378 = vector.shape_cast %377 : vector<1x8x4xf32> to vector<8x4xf32>
    %379 = vector.shape_cast %376 : vector<8x4xf32> to vector<1x8x4xf32>
    tpu.vector_store %arg14[%c4_130, %c0_131, %c0_132], %379 {strides = array<i32>} : memref<8x8x4xf32, #tpu.memory_space<vmem>>, vector<1x8x4xf32>,
    %380 = vector.extract_strided_slice %359 {offsets = [32, 0], sizes = [8, 4], strides = [1, 1]} : vector<56x4xf32> to vector<8x4xf32>
    %c5_133 = arith.constant 5 : index
    %c0_134 = arith.constant 0 : index
    %c0_135 = arith.constant 0 : index
    %381 = vector.load %arg14[%c5_133, %c0_134, %c0_135] : memref<8x8x4xf32, #tpu.memory_space<vmem>>, vector<1x8x4xf32>
    %382 = vector.shape_cast %381 : vector<1x8x4xf32> to vector<8x4xf32>
    %383 = vector.shape_cast %380 : vector<8x4xf32> to vector<1x8x4xf32>
    tpu.vector_store %arg14[%c5_133, %c0_134, %c0_135], %383 {strides = array<i32>} : memref<8x8x4xf32, #tpu.memory_space<vmem>>, vector<1x8x4xf32>,
    %384 = vector.extract_strided_slice %359 {offsets = [40, 0], sizes = [8, 4], strides = [1, 1]} : vector<56x4xf32> to vector<8x4xf32>
    %c6_136 = arith.constant 6 : index
    %c0_137 = arith.constant 0 : index
    %c0_138 = arith.constant 0 : index
    %385 = vector.load %arg14[%c6_136, %c0_137, %c0_138] : memref<8x8x4xf32, #tpu.memory_space<vmem>>, vector<1x8x4xf32>
    %386 = vector.shape_cast %385 : vector<1x8x4xf32> to vector<8x4xf32>
    %387 = vector.shape_cast %384 : vector<8x4xf32> to vector<1x8x4xf32>
    tpu.vector_store %arg14[%c6_136, %c0_137, %c0_138], %387 {strides = array<i32>} : memref<8x8x4xf32, #tpu.memory_space<vmem>>, vector<1x8x4xf32>,
    %388 = vector.extract_strided_slice %359 {offsets = [48, 0], sizes = [8, 4], strides = [1, 1]} : vector<56x4xf32> to vector<8x4xf32>
    %c7 = arith.constant 7 : index
    %c0_139 = arith.constant 0 : index
    %c0_140 = arith.constant 0 : index
    %389 = vector.load %arg14[%c7, %c0_139, %c0_140] : memref<8x8x4xf32, #tpu.memory_space<vmem>>, vector<1x8x4xf32>
    %390 = vector.shape_cast %389 : vector<1x8x4xf32> to vector<8x4xf32>
    %391 = vector.shape_cast %388 : vector<8x4xf32> to vector<1x8x4xf32>
    tpu.vector_store %arg14[%c7, %c0_139, %c0_140], %391 {strides = array<i32>} : memref<8x8x4xf32, #tpu.memory_space<vmem>>, vector<1x8x4xf32>,
    return
  }
  func.func @transform_0(%arg0: i32, %arg1: memref<7xi32, #tpu.memory_space<smem>>) -> (i32, i32, i32) {
    %c0_i32 = arith.constant 0 : i32
    %c0_i32_0 = arith.constant 0 : i32
    %c0_i32_1 = arith.constant 0 : i32
    return %c0_i32, %arg0, %c0_i32_0 : i32, i32, i32
  }
  func.func @transform_1(%arg0: i32, %arg1: memref<7xi32, #tpu.memory_space<smem>>) -> (i32, i32, i32) {
    %c0_i32 = arith.constant 0 : i32
    %c0_i32_0 = arith.constant 0 : i32
    %c0_i32_1 = arith.constant 0 : i32
    return %c0_i32, %arg0, %c0_i32_0 : i32, i32, i32
  }
  func.func @transform_2(%arg0: i32, %arg1: memref<7xi32, #tpu.memory_space<smem>>) -> (i32, i32) {
    %c0_i32 = arith.constant 0 : i32
    %c0_i32_0 = arith.constant 0 : i32
    return %arg0, %c0_i32 : i32, i32
  }
  func.func @transform_3(%arg0: i32, %arg1: memref<7xi32, #tpu.memory_space<smem>>) -> (i32, i32) {
    %c0_i32 = arith.constant 0 : i32
    %c0_i32_0 = arith.constant 0 : i32
    %c0_i32_1 = arith.constant 0 : i32
    return %c0_i32, %c0_i32_0 : i32, i32
  }
  func.func @transform_4(%arg0: i32, %arg1: memref<7xi32, #tpu.memory_space<smem>>) -> (i32, i32) {
    %c0_i32 = arith.constant 0 : i32
    %c0_i32_0 = arith.constant 0 : i32
    %c0_i32_1 = arith.constant 0 : i32
    return %c0_i32, %c0_i32_0 : i32, i32
  }
  func.func @transform_5(%arg0: i32, %arg1: memref<7xi32, #tpu.memory_space<smem>>) -> (i32, i32) {
    %c0_i32 = arith.constant 0 : i32
    %c0_i32_0 = arith.constant 0 : i32
    %c0_i32_1 = arith.constant 0 : i32
    return %c0_i32, %c0_i32_0 : i32, i32
  }
  func.func @transform_6(%arg0: i32, %arg1: memref<7xi32, #tpu.memory_space<smem>>) -> (i32, i32) {
    %c0_i32 = arith.constant 0 : i32
    %c0_i32_0 = arith.constant 0 : i32
    %c0_i32_1 = arith.constant 0 : i32
    return %c0_i32, %c0_i32_0 : i32, i32
  }
  func.func @transform_7(%arg0: i32, %arg1: memref<7xi32, #tpu.memory_space<smem>>) -> (i32, i32) {
    %c0_i32 = arith.constant 0 : i32
    %c0_i32_0 = arith.constant 0 : i32
    %c0_i32_1 = arith.constant 0 : i32
    return %c0_i32, %c0_i32_0 : i32, i32
  }
  func.func @transform_8(%arg0: i32, %arg1: memref<7xi32, #tpu.memory_space<smem>>) -> (i32, i32) {
    %c0_i32 = arith.constant 0 : i32
    %c0_i32_0 = arith.constant 0 : i32
    %c0_i32_1 = arith.constant 0 : i32
    return %c0_i32, %c0_i32_0 : i32, i32
  }
  func.func @transform_9(%arg0: i32, %arg1: memref<7xi32, #tpu.memory_space<smem>>) -> (i32, i32) {
    %c0_i32 = arith.constant 0 : i32
    %c0_i32_0 = arith.constant 0 : i32
    %c0_i32_1 = arith.constant 0 : i32
    return %c0_i32, %c0_i32_0 : i32, i32
  }
  func.func @transform_10(%arg0: i32, %arg1: memref<7xi32, #tpu.memory_space<smem>>) -> (i32, i32) {
    %c0_i32 = arith.constant 0 : i32
    %c0_i32_0 = arith.constant 0 : i32
    %c0_i32_1 = arith.constant 0 : i32
    return %c0_i32, %c0_i32_0 : i32, i32
  }
  func.func @transform_11(%arg0: i32, %arg1: memref<7xi32, #tpu.memory_space<smem>>) -> (i32, i32) {
    %c0_i32 = arith.constant 0 : i32
    %c0_i32_0 = arith.constant 0 : i32
    %c0_i32_1 = arith.constant 0 : i32
    return %c0_i32, %c0_i32_0 : i32, i32
  }
  func.func @transform_12(%arg0: i32, %arg1: memref<7xi32, #tpu.memory_space<smem>>) -> (i32, i32, i32) {
    %c0_i32 = arith.constant 0 : i32
    %c0_i32_0 = arith.constant 0 : i32
    %c0_i32_1 = arith.constant 0 : i32
    return %c0_i32, %arg0, %c0_i32_0 : i32, i32, i32
  }
}

</mosaic_0001>

<llo_original>
// kernel: trajectory_generator_forward.1
$region0: #{trajectory_generator_forward.1}
  #allocation0 [shape = 'u32[]', space=smem, size = 0x4, offset = 0x4, fixed_abs, tag = 'smem constant byte address 0x4 - core index']
  #allocation1 [shape = 'u32[72,128]{1,0:T(1,128)}', space=vmem, size = 0x9000, scoped, tag = 'internal scratch']
  #allocation2 [shape = 's32[1]{0}', space=sflag, size = 0x4, scoped, tag = 'scoped memory for trajectory_generator_forward.1']
  #allocation3 [shape = 'u8[512]{0}', space=smem, size = 0x200, scoped, tag = 'prefetched SMEM operand 0']
  %s0 = inlined_call_operand.vmem [shape: s32[7], index: 0, kind: input, shape index: {}]
  %s1 = inlined_call_operand.vmem [shape: f32[6,16,8], index: 1, kind: input, shape index: {}]
  %s2 = inlined_call_operand.vmem [shape: f32[8,16,4], index: 2, kind: input, shape index: {}]
  %s3 = inlined_call_operand.vmem [shape: f32[16,128], index: 3, kind: input, shape index: {}]
  %s4 = inlined_call_operand.vmem [shape: f32[8,512], index: 4, kind: input, shape index: {}]
  %s5 = inlined_call_operand.hbm [shape: f32[128,512], index: 5, kind: input, shape index: {}]
  %s6 = inlined_call_operand.vmem [shape: f32[1,512], index: 6, kind: input, shape index: {}]
  %s7 = inlined_call_operand.vmem [shape: f32[4,512], index: 7, kind: input, shape index: {}]
  %s8 = inlined_call_operand.vmem [shape: f32[1,512], index: 8, kind: input, shape index: {}]
  %s9 = inlined_call_operand.hbm [shape: f32[128,1024], index: 9, kind: input, shape index: {}]
  %s10 = inlined_call_operand.vmem [shape: f32[1,512], index: 10, kind: input, shape index: {}]
  %s11 = inlined_call_operand.vmem [shape: f32[128,4], index: 11, kind: input, shape index: {}]
  %s12 = inlined_call_operand.vmem [shape: f32[1,4], index: 12, kind: input, shape index: {}]
  %s13 = inlined_call_operand.vmem [shape: f32[8,16,4], index: 13, kind: output, shape index: {}]
  %s14 = sld [smem:[#allocation0]]
  $region199: #{trajectory_generator_forward.1} parent=0
    _
  %s16 = ssub.s32 1, %s14
  %s17 = scalar_select 0, %s16, %s14
  %s19 = sshll.u32 %s0, 4
  %s20 = int_to_ptr.vmem [resolvable:$true] %s19
  %22 = dma.vmem_to_smem %s20, 16, [#allocation3], [#allocation2]
  %24 = dma.done [#allocation2], 16
  %25 = sfence
  $region1: #{trajectory_generator_forward.1} parent=0
    #allocation4 [shape = 'u8[49152]{0}', space=vmem, size = 0xc000, scoped, tag = 'input window, operand 1']
    #allocation5 [shape = 'u8[65536]{0}', space=vmem, size = 0x10000, scoped, tag = 'input window, operand 2']
    #allocation6 [shape = 'u8[262144]{0}', space=vmem, size = 0x40000, scoped, tag = 'input window, operand 5, single buffered']
    #allocation7 [shape = 's32[2]{0}', space=sflag, size = 0x8, scoped, tag = 'scoped memory for trajectory_generator_forward.1']
    #allocation8 [shape = 'u8[524288]{0}', space=vmem, size = 0x80000, scoped, tag = 'input window, operand 9, single buffered']
    #allocation9 [shape = 's32[1]{0}', space=sflag, size = 0x4, scoped, tag = 'scoped memory for trajectory_generator_forward.1']
    #allocation10 [shape = 'u8[65536]{0}', space=vmem, size = 0x10000, scoped, tag = 'output window, operand 0']
    %26 = vsyncpa [#allocation7], 0
    %27 = vsyncpa [#allocation9], 0
    loop: start=0, step=1, limit=4
    $region2: #{trajectory_generator_forward.1} parent=1 // loop_pre_header
      _
    $region3: #{trajectory_generator_forward.1} parent=1 // loop_header
      %s29 = sphi 0, %s33
      %p30 = scmp.ge.s32.totalorder %s29, 4
      %s39 = sphi 0, %s41
      %s42 = sphi 0, %s39
      %s43 = sphi 0, %s42
      %s59 = sphi 0, %s43
      %s65 = sphi 0, %s67
      %s68 = sphi 0, %s65
      %s69 = sphi 0, %s68
      %s85 = sphi 0, %s69
      %s91 = sphi 0, %s93
      %s94 = sphi 0, %s91
      %s95 = sphi 0, %s94
      %s111 = sphi 0, %s95
      %s115 = sphi 0, %s115
      %s117 = sphi 0, %s115
      %s118 = sphi 0, %s117
      %s132 = sphi 0, %s118
      %s136 = sphi 0, %s136
      %s138 = sphi 0, %s136
      %s139 = sphi 0, %s138
      %s153 = sphi 0, %s139
      %s157 = sphi 0, %s157
      %s159 = sphi 0, %s157
      %s160 = sphi 0, %s159
      %s174 = sphi 0, %s160
      %s178 = sphi 0, %s178
      %s180 = sphi 0, %s178
      %s181 = sphi 0, %s180
      %s195 = sphi 0, %s181
      %s199 = sphi 0, %s199
      %s201 = sphi 0, %s199
      %s202 = sphi 0, %s201
      %s216 = sphi 0, %s202
      %s220 = sphi 0, %s220
      %s222 = sphi 0, %s220
      %s223 = sphi 0, %s222
      %s237 = sphi 0, %s223
      %s241 = sphi 0, %s241
      %s243 = sphi 0, %s241
      %s244 = sphi 0, %s243
      %s258 = sphi 0, %s244
      %s262 = sphi 0, %s262
      %s264 = sphi 0, %s262
      %s265 = sphi 0, %s264
      %s279 = sphi 0, %s265
      %s283 = sphi 0, %s283
      %s285 = sphi 0, %s283
      %s286 = sphi 0, %s285
      %s300 = sphi 0, %s286
      %s306 = sphi 0, %s308
      %s309 = sphi 0, %s306
      %s310 = sphi 0, %s309
      %s326 = sphi 0, %s310
    $region4: #{trajectory_generator_forward.1} parent=1 // loop_header_branch
      %32 = sbr.rel (%p30) target = $region8
    $region5: #{trajectory_generator_forward.1} parent=1 // loop_body
      %s34 = ssub.s32 %s29, 1
      %s35 = ssub.s32 %s29, 2
      %s36 = sadd.s32 %s29, 1
      %s37 = ssub.s32 %s29, %s36
      %p38 = scmp.eq.s32.totalorder %s37, 0
      %s40 = sadd.s32 %s39, 1
      %s41 = scalar_select %p38, %s39, %s40
      %p44 = pneg %p38
      %p45 = scmp.eq.s32.totalorder %s29, 1
      %p46 = por %p44, %p45
      %p47 = scmp.ne.s32.totalorder %s39, %s42
      %p48 = scmp.eq.s32.totalorder %s29, 0
      %p49 = por %p47, %p48
      %p50 = scmp.ne.s32.totalorder %s39, %s42
      %p51 = scmp.eq.s32.totalorder %s34, 1
      %p52 = por %p50, %p51
      %p53 = scmp.ne.s32.totalorder %s42, %s43
      %p54 = scmp.eq.s32.totalorder %s34, 0
      %p55 = por %p53, %p54
      %p56 = scmp.ne.s32.totalorder %s42, %s43
      %p57 = scmp.eq.s32.totalorder %s35, 1
      %p58 = por %p56, %p57
      %p60 = scmp.ne.s32.totalorder %s43, %s59
      %p61 = scmp.eq.s32.totalorder %s35, 0
      %p62 = por %p60, %p61
      %s63 = ssub.s32 %s29, %s36
      %p64 = scmp.eq.s32.totalorder %s63, 0
      %s66 = sadd.s32 %s65, 1
      %s67 = scalar_select %p64, %s65, %s66
      %p70 = pneg %p64
      %p71 = scmp.eq.s32.totalorder %s29, 1
      %p72 = por %p70, %p71
      %p73 = scmp.ne.s32.totalorder %s65, %s68
      %p74 = scmp.eq.s32.totalorder %s29, 0
      %p75 = por %p73, %p74
      %p76 = scmp.ne.s32.totalorder %s65, %s68
      %p77 = scmp.eq.s32.totalorder %s34, 1
      %p78 = por %p76, %p77
      %p79 = scmp.ne.s32.totalorder %s68, %s69
      %p80 = scmp.eq.s32.totalorder %s34, 0
      %p81 = por %p79, %p80
      %p82 = scmp.ne.s32.totalorder %s68, %s69
      %p83 = scmp.eq.s32.totalorder %s35, 1
      %p84 = por %p82, %p83
      %p86 = scmp.ne.s32.totalorder %s69, %s85
      %p87 = scmp.eq.s32.totalorder %s35, 0
      %p88 = por %p86, %p87
      %s89 = ssub.s32 %s29, %s36
      %p90 = scmp.eq.s32.totalorder %s89, 0
      %s92 = sadd.s32 %s91, 1
      %s93 = scalar_select %p90, %s91, %s92
      %p96 = pneg %p90
      %p97 = scmp.eq.s32.totalorder %s29, 1
      %p98 = por %p96, %p97
      %p99 = scmp.ne.s32.totalorder %s91, %s94
      %p100 = scmp.eq.s32.totalorder %s29, 0
      %p101 = por %p99, %p100
      %p102 = scmp.ne.s32.totalorder %s91, %s94
      %p103 = scmp.eq.s32.totalorder %s34, 1
      %p104 = por %p102, %p103
      %p105 = scmp.ne.s32.totalorder %s94, %s95
      %p106 = scmp.eq.s32.totalorder %s34, 0
      %p107 = por %p105, %p106
      %p108 = scmp.ne.s32.totalorder %s94, %s95
      %p109 = scmp.eq.s32.totalorder %s35, 1
      %p110 = por %p108, %p109
      %p112 = scmp.ne.s32.totalorder %s95, %s111
      %p113 = scmp.eq.s32.totalorder %s35, 0
      %p114 = por %p112, %p113
      %s116 = sadd.s32 %s115, 1
      %p119 = scmp.eq.s32.totalorder %s29, 1
      %p120 = scmp.ne.s32.totalorder %s115, %s117
      %p121 = scmp.eq.s32.totalorder %s29, 0
      %p122 = por %p120, %p121
      %p123 = scmp.ne.s32.totalorder %s115, %s117
      %p124 = scmp.eq.s32.totalorder %s34, 1
      %p125 = por %p123, %p124
      %p126 = scmp.ne.s32.totalorder %s117, %s118
      %p127 = scmp.eq.s32.totalorder %s34, 0
      %p128 = por %p126, %p127
      %p129 = scmp.ne.s32.totalorder %s117, %s118
      %p130 = scmp.eq.s32.totalorder %s35, 1
      %p131 = por %p129, %p130
      %p133 = scmp.ne.s32.totalorder %s118, %s132
      %p134 = scmp.eq.s32.totalorder %s35, 0
      %p135 = por %p133, %p134
      %s137 = sadd.s32 %s136, 1
      %p140 = scmp.eq.s32.totalorder %s29, 1
      %p141 = scmp.ne.s32.totalorder %s136, %s138
      %p142 = scmp.eq.s32.totalorder %s29, 0
      %p143 = por %p141, %p142
      %p144 = scmp.ne.s32.totalorder %s136, %s138
      %p145 = scmp.eq.s32.totalorder %s34, 1
      %p146 = por %p144, %p145
      %p147 = scmp.ne.s32.totalorder %s138, %s139
      %p148 = scmp.eq.s32.totalorder %s34, 0
      %p149 = por %p147, %p148
      %p150 = scmp.ne.s32.totalorder %s138, %s139
      %p151 = scmp.eq.s32.totalorder %s35, 1
      %p152 = por %p150, %p151
      %p154 = scmp.ne.s32.totalorder %s139, %s153
      %p155 = scmp.eq.s32.totalorder %s35, 0
      %p156 = por %p154, %p155
      %s158 = sadd.s32 %s157, 1
      %p161 = scmp.eq.s32.totalorder %s29, 1
      %p162 = scmp.ne.s32.totalorder %s157, %s159
      %p163 = scmp.eq.s32.totalorder %s29, 0
      %p164 = por %p162, %p163
      %p165 = scmp.ne.s32.totalorder %s157, %s159
      %p166 = scmp.eq.s32.totalorder %s34, 1
      %p167 = por %p165, %p166
      %p168 = scmp.ne.s32.totalorder %s159, %s160
      %p169 = scmp.eq.s32.totalorder %s34, 0
      %p170 = por %p168, %p169
      %p171 = scmp.ne.s32.totalorder %s159, %s160
      %p172 = scmp.eq.s32.totalorder %s35, 1
      %p173 = por %p171, %p172
      %p175 = scmp.ne.s32.totalorder %s160, %s174
      %p176 = scmp.eq.s32.totalorder %s35, 0
      %p177 = por %p175, %p176
      %s179 = sadd.s32 %s178, 1
      %p182 = scmp.eq.s32.totalorder %s29, 1
      %p183 = scmp.ne.s32.totalorder %s178, %s180
      %p184 = scmp.eq.s32.totalorder %s29, 0
      %p185 = por %p183, %p184
      %p186 = scmp.ne.s32.totalorder %s178, %s180
      %p187 = scmp.eq.s32.totalorder %s34, 1
      %p188 = por %p186, %p187
      %p189 = scmp.ne.s32.totalorder %s180, %s181
      %p190 = scmp.eq.s32.totalorder %s34, 0
      %p191 = por %p189, %p190
      %p192 = scmp.ne.s32.totalorder %s180, %s181
      %p193 = scmp.eq.s32.totalorder %s35, 1
      %p194 = por %p192, %p193
      %p196 = scmp.ne.s32.totalorder %s181, %s195
      %p197 = scmp.eq.s32.totalorder %s35, 0
      %p198 = por %p196, %p197
      %s200 = sadd.s32 %s199, 1
      %p203 = scmp.eq.s32.totalorder %s29, 1
      %p204 = scmp.ne.s32.totalorder %s199, %s201
      %p205 = scmp.eq.s32.totalorder %s29, 0
      %p206 = por %p204, %p205
      %p207 = scmp.ne.s32.totalorder %s199, %s201
      %p208 = scmp.eq.s32.totalorder %s34, 1
      %p209 = por %p207, %p208
      %p210 = scmp.ne.s32.totalorder %s201, %s202
      %p211 = scmp.eq.s32.totalorder %s34, 0
      %p212 = por %p210, %p211
      %p213 = scmp.ne.s32.totalorder %s201, %s202
      %p214 = scmp.eq.s32.totalorder %s35, 1
      %p215 = por %p213, %p214
      %p217 = scmp.ne.s32.totalorder %s202, %s216
      %p218 = scmp.eq.s32.totalorder %s35, 0
      %p219 = por %p217, %p218
      %s221 = sadd.s32 %s220, 1
      %p224 = scmp.eq.s32.totalorder %s29, 1
      %p225 = scmp.ne.s32.totalorder %s220, %s222
      %p226 = scmp.eq.s32.totalorder %s29, 0
      %p227 = por %p225, %p226
      %p228 = scmp.ne.s32.totalorder %s220, %s222
      %p229 = scmp.eq.s32.totalorder %s34, 1
      %p230 = por %p228, %p229
      %p231 = scmp.ne.s32.totalorder %s222, %s223
      %p232 = scmp.eq.s32.totalorder %s34, 0
      %p233 = por %p231, %p232
      %p234 = scmp.ne.s32.totalorder %s222, %s223
      %p235 = scmp.eq.s32.totalorder %s35, 1
      %p236 = por %p234, %p235
      %p238 = scmp.ne.s32.totalorder %s223, %s237
      %p239 = scmp.eq.s32.totalorder %s35, 0
      %p240 = por %p238, %p239
      %s242 = sadd.s32 %s241, 1
      %p245 = scmp.eq.s32.totalorder %s29, 1
      %p246 = scmp.ne.s32.totalorder %s241, %s243
      %p247 = scmp.eq.s32.totalorder %s29, 0
      %p248 = por %p246, %p247
      %p249 = scmp.ne.s32.totalorder %s241, %s243
      %p250 = scmp.eq.s32.totalorder %s34, 1
      %p251 = por %p249, %p250
      %p252 = scmp.ne.s32.totalorder %s243, %s244
      %p253 = scmp.eq.s32.totalorder %s34, 0
      %p254 = por %p252, %p253
      %p255 = scmp.ne.s32.totalorder %s243, %s244
      %p256 = scmp.eq.s32.totalorder %s35, 1
      %p257 = por %p255, %p256
      %p259 = scmp.ne.s32.totalorder %s244, %s258
      %p260 = scmp.eq.s32.totalorder %s35, 0
      %p261 = por %p259, %p260
      %s263 = sadd.s32 %s262, 1
      %p266 = scmp.eq.s32.totalorder %s29, 1
      %p267 = scmp.ne.s32.totalorder %s262, %s264
      %p268 = scmp.eq.s32.totalorder %s29, 0
      %p269 = por %p267, %p268
      %p270 = scmp.ne.s32.totalorder %s262, %s264
      %p271 = scmp.eq.s32.totalorder %s34, 1
      %p272 = por %p270, %p271
      %p273 = scmp.ne.s32.totalorder %s264, %s265
      %p274 = scmp.eq.s32.totalorder %s34, 0
      %p275 = por %p273, %p274
      %p276 = scmp.ne.s32.totalorder %s264, %s265
      %p277 = scmp.eq.s32.totalorder %s35, 1
      %p278 = por %p276, %p277
      %p280 = scmp.ne.s32.totalorder %s265, %s279
      %p281 = scmp.eq.s32.totalorder %s35, 0
      %p282 = por %p280, %p281
      %s284 = sadd.s32 %s283, 1
      %p287 = scmp.eq.s32.totalorder %s29, 1
      %p288 = scmp.ne.s32.totalorder %s283, %s285
      %p289 = scmp.eq.s32.totalorder %s29, 0
      %p290 = por %p288, %p289
      %p291 = scmp.ne.s32.totalorder %s283, %s285
      %p292 = scmp.eq.s32.totalorder %s34, 1
      %p293 = por %p291, %p292
      %p294 = scmp.ne.s32.totalorder %s285, %s286
      %p295 = scmp.eq.s32.totalorder %s34, 0
      %p296 = por %p294, %p295
      %p297 = scmp.ne.s32.totalorder %s285, %s286
      %p298 = scmp.eq.s32.totalorder %s35, 1
      %p299 = por %p297, %p298
      %p301 = scmp.ne.s32.totalorder %s286, %s300
      %p302 = scmp.eq.s32.totalorder %s35, 0
      %p303 = por %p301, %p302
      %s304 = ssub.s32 %s29, %s36
      %p305 = scmp.eq.s32.totalorder %s304, 0
      %s307 = sadd.s32 %s306, 1
      %s308 = scalar_select %p305, %s306, %s307
      %p311 = pneg %p305
      %p312 = scmp.eq.s32.totalorder %s29, 1
      %p313 = por %p311, %p312
      %p314 = scmp.ne.s32.totalorder %s306, %s309
      %p315 = scmp.eq.s32.totalorder %s29, 0
      %p316 = por %p314, %p315
      %p317 = scmp.ne.s32.totalorder %s306, %s309
      %p318 = scmp.eq.s32.totalorder %s34, 1
      %p319 = por %p317, %p318
      %p320 = scmp.ne.s32.totalorder %s309, %s310
      %p321 = scmp.eq.s32.totalorder %s34, 0
      %p322 = por %p320, %p321
      %p323 = scmp.ne.s32.totalorder %s309, %s310
      %p324 = scmp.eq.s32.totalorder %s35, 1
      %p325 = por %p323, %p324
      %p327 = scmp.ne.s32.totalorder %s310, %s326
      %p328 = scmp.eq.s32.totalorder %s35, 0
      %p329 = por %p327, %p328
      %p330 = scmp.le.s32.totalorder 1, %s29
      %p331 = scmp.lt.s32.totalorder %s29, 3
      %p332 = pnand %p330, %p331
      %p333 = pneg %p332
      // Predicated region
      $region9: #{trajectory_generator_forward.1} parent=5 // pred_check
        _
      $region10: #{trajectory_generator_forward.1} parent=5 // pred_check_branch
        %335 = sbr.rel (%p332) target = $region12
      $region11: #{trajectory_generator_forward.1} parent=5 // pred_region
        %s336 = ssub.s32 %s29, 1
        // Predicated region
        $region13: #{trajectory_generator_forward.1} parent=11 // pred_check
          %p337 = pneg %p128
        $region14: #{trajectory_generator_forward.1} parent=11 // pred_check_branch
          %339 = sbr.rel (%p337) target = $region16
        $region15: #{trajectory_generator_forward.1} parent=11 // pred_region
          _
        $region16: #{trajectory_generator_forward.1} parent=11 // pred_fallthru
          _
        // Predicated region
        $region17: #{trajectory_generator_forward.1} parent=11 // pred_check
          %p340 = pneg %p149
        $region18: #{trajectory_generator_forward.1} parent=11 // pred_check_branch
          %342 = sbr.rel (%p340) target = $region20
        $region19: #{trajectory_generator_forward.1} parent=11 // pred_region
          %344 = vsyncadd [#allocation7], 0
          %s345 = sshll.u32 %s5, 4
          %s346 = int_to_ptr.hbm [resolvable:$true] %s345
          %s347 = sshll.u32 [#allocation6], 4
          %s348 = int_to_ptr.vmem [resolvable:$true] %s347
          %353 = dma.hbm_to_vmem [thread:$0]  %s346, 8192, %s348, [#allocation7], 512, 512, 32
        $region20: #{trajectory_generator_forward.1} parent=11 // pred_fallthru
          _
        // Predicated region
        $region21: #{trajectory_generator_forward.1} parent=11 // pred_check
          %p354 = pneg %p170
        $region22: #{trajectory_generator_forward.1} parent=11 // pred_check_branch
          %356 = sbr.rel (%p354) target = $region24
        $region23: #{trajectory_generator_forward.1} parent=11 // pred_region
          _
        $region24: #{trajectory_generator_forward.1} parent=11 // pred_fallthru
          _
        // Predicated region
        $region25: #{trajectory_generator_forward.1} parent=11 // pred_check
          %p357 = pneg %p191
        $region26: #{trajectory_generator_forward.1} parent=11 // pred_check_branch
          %359 = sbr.rel (%p357) target = $region28
        $region27: #{trajectory_generator_forward.1} parent=11 // pred_region
          _
        $region28: #{trajectory_generator_forward.1} parent=11 // pred_fallthru
          _
        // Predicated region
        $region29: #{trajectory_generator_forward.1} parent=11 // pred_check
          %p360 = pneg %p212
        $region30: #{trajectory_generator_forward.1} parent=11 // pred_check_branch
          %362 = sbr.rel (%p360) target = $region32
        $region31: #{trajectory_generator_forward.1} parent=11 // pred_region
          _
        $region32: #{trajectory_generator_forward.1} parent=11 // pred_fallthru
          _
        // Predicated region
        $region33: #{trajectory_generator_forward.1} parent=11 // pred_check
          %p363 = pneg %p233
        $region34: #{trajectory_generator_forward.1} parent=11 // pred_check_branch
          %365 = sbr.rel (%p363) target = $region36
        $region35: #{trajectory_generator_forward.1} parent=11 // pred_region
          %367 = vsyncadd [#allocation9], 0
          %s368 = sshll.u32 %s9, 4
          %s369 = int_to_ptr.hbm [resolvable:$true] %s368
          %s370 = sshll.u32 [#allocation8], 4
          %s371 = int_to_ptr.vmem [resolvable:$true] %s370
          %376 = dma.hbm_to_vmem [thread:$0]  %s369, 16384, %s371, [#allocation9], 1024, 1024, 64
        $region36: #{trajectory_generator_forward.1} parent=11 // pred_fallthru
          _
        // Predicated region
        $region37: #{trajectory_generator_forward.1} parent=11 // pred_check
          %p377 = pneg %p254
        $region38: #{trajectory_generator_forward.1} parent=11 // pred_check_branch
          %379 = sbr.rel (%p377) target = $region40
        $region39: #{trajectory_generator_forward.1} parent=11 // pred_region
          _
        $region40: #{trajectory_generator_forward.1} parent=11 // pred_fallthru
          _
        // Predicated region
        $region41: #{trajectory_generator_forward.1} parent=11 // pred_check
          %p380 = pneg %p275
        $region42: #{trajectory_generator_forward.1} parent=11 // pred_check_branch
          %382 = sbr.rel (%p380) target = $region44
        $region43: #{trajectory_generator_forward.1} parent=11 // pred_region
          _
        $region44: #{trajectory_generator_forward.1} parent=11 // pred_fallthru
          _
        // Predicated region
        $region45: #{trajectory_generator_forward.1} parent=11 // pred_check
          %p383 = pneg %p296
        $region46: #{trajectory_generator_forward.1} parent=11 // pred_check_branch
          %385 = sbr.rel (%p383) target = $region48
        $region47: #{trajectory_generator_forward.1} parent=11 // pred_region
          _
        $region48: #{trajectory_generator_forward.1} parent=11 // pred_fallthru
          _
      $region12: #{trajectory_generator_forward.1} parent=5 // pred_fallthru
        _
      %p386 = scmp.lt.s32.totalorder %s29, 2
      // Predicated region
      $region49: #{trajectory_generator_forward.1} parent=5 // pred_check
        %p387 = pneg %p386
      $region50: #{trajectory_generator_forward.1} parent=5 // pred_check_branch
        %389 = sbr.rel (%p387) target = $region52
      $region51: #{trajectory_generator_forward.1} parent=5 // pred_region
        // Predicated region
        $region53: #{trajectory_generator_forward.1} parent=51 // pred_check
          %p390 = pneg %p49
        $region54: #{trajectory_generator_forward.1} parent=51 // pred_check_branch
          %392 = sbr.rel (%p390) target = $region56
        $region55: #{trajectory_generator_forward.1} parent=51 // pred_region
          %s393 = sand.u32 %s39, 1
          %s394 = sand.u32 %s39, 1
          %s395 = smul.addr %s394, 48
          %s396 = scalar_lea.vmem [#allocation4], %s395
          %s397 = smul.addr %s29, 8
          %s398 = scalar_lea.vmem %s1, %s397
          // Predicated region
          $region57: #{trajectory_generator_forward.1} parent=55 // pred_check
            _
          $region58: #{trajectory_generator_forward.1} parent=55 // pred_check_branch
            %400 = sbr.rel (0) target = $region60
          $region59: #{trajectory_generator_forward.1} parent=55 // pred_region
            // Predicated region
            $region61: #{trajectory_generator_forward.1} parent=59 // pred_check
              _
            $region62: #{trajectory_generator_forward.1} parent=59 // pred_check_branch
              %402 = sbr.rel (0) target = $region64
            $region63: #{trajectory_generator_forward.1} parent=59 // pred_region
              // Predicated region
              $region76: #{trajectory_generator_forward.1} parent=63 // pred_check
                _
              $region77: #{trajectory_generator_forward.1} parent=63 // pred_check_branch
                %428 = sbr.rel (0) target = $region79
              $region78: #{trajectory_generator_forward.1} parent=63 // pred_region
                loop: start=0, step=1, limit=1
                $region80: #{trajectory_generator_forward.1} parent=78 // loop_pre_header
                  _
                $region81: #{trajectory_generator_forward.1} parent=78 // loop_header
                  %s430 = sphi 0, %s434
                  %p431 = scmp.ge.s32.totalorder %s430, 1
                  %s435 = sphi %s398, %s398
                  %s436 = sphi %s396, %s396
                $region82: #{trajectory_generator_forward.1} parent=78 // loop_header_branch
                  %433 = sbr.rel (%p431) target = $region86
                $region83: #{trajectory_generator_forward.1} parent=78 // loop_body
                  %v437 = vld [vmem:[%s435] sm:$0xff]
                  %438 = vst [vmem:[%s436] sm:$0xff] %v437
                  %v439 = vld [vmem:[%s435 + $0x10] sm:$0xff]
                  %440 = vst [vmem:[%s436 + $0x8] sm:$0xff] %v439
                  %v441 = vld [vmem:[%s435 + $0x20] sm:$0xff]
                  %442 = vst [vmem:[%s436 + $0x10] sm:$0xff] %v441
                  %v443 = vld [vmem:[%s435 + $0x30] sm:$0xff]
                  %444 = vst [vmem:[%s436 + $0x18] sm:$0xff] %v443
                  %v445 = vld [vmem:[%s435 + $0x40] sm:$0xff]
                  %446 = vst [vmem:[%s436 + $0x20] sm:$0xff] %v445
                  %v447 = vld [vmem:[%s435 + $0x50] sm:$0xff]
                  %448 = vst [vmem:[%s436 + $0x28] sm:$0xff] %v447
                $region84: #{trajectory_generator_forward.1} parent=78 // loop_footer
                  %s434 = sadd.s32 1, %s430
                $region85: #{trajectory_generator_forward.1} parent=78 // loop_footer_branch
                  %429 = sbr.rel target = $region81
                $region86: #{trajectory_generator_forward.1} parent=78 // loop_exit
                  _
              $region79: #{trajectory_generator_forward.1} parent=63 // pred_fallthru
                _
              // Predicated region
              $region87: #{trajectory_generator_forward.1} parent=63 // pred_check
                _
              $region88: #{trajectory_generator_forward.1} parent=63 // pred_check_branch
                %450 = sbr.rel target = $region90
              $region89: #{trajectory_generator_forward.1} parent=63 // pred_region
                _
              $region90: #{trajectory_generator_forward.1} parent=63 // pred_fallthru
                _
            $region64: #{trajectory_generator_forward.1} parent=59 // pred_fallthru
              _
            // Predicated region
            $region65: #{trajectory_generator_forward.1} parent=59 // pred_check
              _
            $region66: #{trajectory_generator_forward.1} parent=59 // pred_check_branch
              %404 = sbr.rel target = $region68
            $region67: #{trajectory_generator_forward.1} parent=59 // pred_region
              %s406 = ssub.s32 256, 1
              loop: start=0, step=1, limit=1
              $region69: #{trajectory_generator_forward.1} parent=67 // loop_pre_header
                _
              $region70: #{trajectory_generator_forward.1} parent=67 // loop_header
                %s408 = sphi 0, %s412
                %p409 = scmp.ge.s32.totalorder %s408, 1
                %s413 = sphi %s398, %s398
                %s414 = sphi %s396, %s396
              $region71: #{trajectory_generator_forward.1} parent=67 // loop_header_branch
                %411 = sbr.rel (%p409) target = $region75
              $region72: #{trajectory_generator_forward.1} parent=67 // loop_body
                %v415 = vld [vmem:[%s413] sm:%s406]
                %416 = vst [vmem:[%s414] sm:%s406] %v415
                %v417 = vld [vmem:[%s413 + $0x10] sm:%s406]
                %418 = vst [vmem:[%s414 + $0x8] sm:%s406] %v417
                %v419 = vld [vmem:[%s413 + $0x20] sm:%s406]
                %420 = vst [vmem:[%s414 + $0x10] sm:%s406] %v419
                %v421 = vld [vmem:[%s413 + $0x30] sm:%s406]
                %422 = vst [vmem:[%s414 + $0x18] sm:%s406] %v421
                %v423 = vld [vmem:[%s413 + $0x40] sm:%s406]
                %424 = vst [vmem:[%s414 + $0x20] sm:%s406] %v423
                %v425 = vld [vmem:[%s413 + $0x50] sm:%s406]
                %426 = vst [vmem:[%s414 + $0x28] sm:%s406] %v425
              $region73: #{trajectory_generator_forward.1} parent=67 // loop_footer
                %s412 = sadd.s32 1, %s408
              $region74: #{trajectory_generator_forward.1} parent=67 // loop_footer_branch
                %407 = sbr.rel target = $region70
              $region75: #{trajectory_generator_forward.1} parent=67 // loop_exit
                _
            $region68: #{trajectory_generator_forward.1} parent=59 // pred_fallthru
              _
          $region60: #{trajectory_generator_forward.1} parent=55 // pred_fallthru
            _
          %451 = vnop
        $region56: #{trajectory_generator_forward.1} parent=51 // pred_fallthru
          _
        // Predicated region
        $region91: #{trajectory_generator_forward.1} parent=51 // pred_check
          %p452 = pneg %p75
        $region92: #{trajectory_generator_forward.1} parent=51 // pred_check_branch
          %454 = sbr.rel (%p452) target = $region94
        $region93: #{trajectory_generator_forward.1} parent=51 // pred_region
          %s455 = sand.u32 %s65, 1
          %s456 = sand.u32 %s65, 1
          %s457 = smul.addr %s456, 64
          %s458 = scalar_lea.vmem [#allocation5], %s457
          %s459 = smul.addr %s29, 8
          %s460 = scalar_lea.vmem %s2, %s459
          // Predicated region
          $region95: #{trajectory_generator_forward.1} parent=93 // pred_check
            _
          $region96: #{trajectory_generator_forward.1} parent=93 // pred_check_branch
            %462 = sbr.rel (0) target = $region98
          $region97: #{trajectory_generator_forward.1} parent=93 // pred_region
            // Predicated region
            $region99: #{trajectory_generator_forward.1} parent=97 // pred_check
              _
            $region100: #{trajectory_generator_forward.1} parent=97 // pred_check_branch
              %464 = sbr.rel (0) target = $region102
            $region101: #{trajectory_generator_forward.1} parent=97 // pred_region
              // Predicated region
              $region114: #{trajectory_generator_forward.1} parent=101 // pred_check
                _
              $region115: #{trajectory_generator_forward.1} parent=101 // pred_check_branch
                %494 = sbr.rel (0) target = $region117
              $region116: #{trajectory_generator_forward.1} parent=101 // pred_region
                loop: start=0, step=1, limit=1
                $region118: #{trajectory_generator_forward.1} parent=116 // loop_pre_header
                  _
                $region119: #{trajectory_generator_forward.1} parent=116 // loop_header
                  %s496 = sphi 0, %s500
                  %p497 = scmp.ge.s32.totalorder %s496, 1
                  %s501 = sphi %s460, %s460
                  %s502 = sphi %s458, %s458
                $region120: #{trajectory_generator_forward.1} parent=116 // loop_header_branch
                  %499 = sbr.rel (%p497) target = $region124
                $region121: #{trajectory_generator_forward.1} parent=116 // loop_body
                  %v503 = vld [vmem:[%s501] sm:$0xff]
                  %504 = vst [vmem:[%s502] sm:$0xff] %v503
                  %v505 = vld [vmem:[%s501 + $0x10] sm:$0xff]
                  %506 = vst [vmem:[%s502 + $0x8] sm:$0xff] %v505
                  %v507 = vld [vmem:[%s501 + $0x20] sm:$0xff]
                  %508 = vst [vmem:[%s502 + $0x10] sm:$0xff] %v507
                  %v509 = vld [vmem:[%s501 + $0x30] sm:$0xff]
                  %510 = vst [vmem:[%s502 + $0x18] sm:$0xff] %v509
                  %v511 = vld [vmem:[%s501 + $0x40] sm:$0xff]
                  %512 = vst [vmem:[%s502 + $0x20] sm:$0xff] %v511
                  %v513 = vld [vmem:[%s501 + $0x50] sm:$0xff]
                  %514 = vst [vmem:[%s502 + $0x28] sm:$0xff] %v513
                  %v515 = vld [vmem:[%s501 + $0x60] sm:$0xff]
                  %516 = vst [vmem:[%s502 + $0x30] sm:$0xff] %v515
                  %v517 = vld [vmem:[%s501 + $0x70] sm:$0xff]
                  %518 = vst [vmem:[%s502 + $0x38] sm:$0xff] %v517
                $region122: #{trajectory_generator_forward.1} parent=116 // loop_footer
                  %s500 = sadd.s32 1, %s496
                $region123: #{trajectory_generator_forward.1} parent=116 // loop_footer_branch
                  %495 = sbr.rel target = $region119
                $region124: #{trajectory_generator_forward.1} parent=116 // loop_exit
                  _
              $region117: #{trajectory_generator_forward.1} parent=101 // pred_fallthru
                _
              // Predicated region
              $region125: #{trajectory_generator_forward.1} parent=101 // pred_check
                _
              $region126: #{trajectory_generator_forward.1} parent=101 // pred_check_branch
                %520 = sbr.rel target = $region128
              $region127: #{trajectory_generator_forward.1} parent=101 // pred_region
                _
              $region128: #{trajectory_generator_forward.1} parent=101 // pred_fallthru
                _
            $region102: #{trajectory_generator_forward.1} parent=97 // pred_fallthru
              _
            // Predicated region
            $region103: #{trajectory_generator_forward.1} parent=97 // pred_check
              _
            $region104: #{trajectory_generator_forward.1} parent=97 // pred_check_branch
              %466 = sbr.rel target = $region106
            $region105: #{trajectory_generator_forward.1} parent=97 // pred_region
              %s468 = ssub.s32 256, 1
              loop: start=0, step=1, limit=1
              $region107: #{trajectory_generator_forward.1} parent=105 // loop_pre_header
                _
              $region108: #{trajectory_generator_forward.1} parent=105 // loop_header
                %s470 = sphi 0, %s474
                %p471 = scmp.ge.s32.totalorder %s470, 1
                %s475 = sphi %s460, %s460
                %s476 = sphi %s458, %s458
              $region109: #{trajectory_generator_forward.1} parent=105 // loop_header_branch
                %473 = sbr.rel (%p471) target = $region113
              $region110: #{trajectory_generator_forward.1} parent=105 // loop_body
                %v477 = vld [vmem:[%s475] sm:%s468]
                %478 = vst [vmem:[%s476] sm:%s468] %v477
                %v479 = vld [vmem:[%s475 + $0x10] sm:%s468]
                %480 = vst [vmem:[%s476 + $0x8] sm:%s468] %v479
                %v481 = vld [vmem:[%s475 + $0x20] sm:%s468]
                %482 = vst [vmem:[%s476 + $0x10] sm:%s468] %v481
                %v483 = vld [vmem:[%s475 + $0x30] sm:%s468]
                %484 = vst [vmem:[%s476 + $0x18] sm:%s468] %v483
                %v485 = vld [vmem:[%s475 + $0x40] sm:%s468]
                %486 = vst [vmem:[%s476 + $0x20] sm:%s468] %v485
                %v487 = vld [vmem:[%s475 + $0x50] sm:%s468]
                %488 = vst [vmem:[%s476 + $0x28] sm:%s468] %v487
                %v489 = vld [vmem:[%s475 + $0x60] sm:%s468]
                %490 = vst [vmem:[%s476 + $0x30] sm:%s468] %v489
                %v491 = vld [vmem:[%s475 + $0x70] sm:%s468]
                %492 = vst [vmem:[%s476 + $0x38] sm:%s468] %v491
              $region111: #{trajectory_generator_forward.1} parent=105 // loop_footer
                %s474 = sadd.s32 1, %s470
              $region112: #{trajectory_generator_forward.1} parent=105 // loop_footer_branch
                %469 = sbr.rel target = $region108
              $region113: #{trajectory_generator_forward.1} parent=105 // loop_exit
                _
            $region106: #{trajectory_generator_forward.1} parent=97 // pred_fallthru
              _
          $region98: #{trajectory_generator_forward.1} parent=93 // pred_fallthru
            _
          %521 = vnop
        $region94: #{trajectory_generator_forward.1} parent=51 // pred_fallthru
          _
        // Predicated region
        $region129: #{trajectory_generator_forward.1} parent=51 // pred_check
          %p522 = pneg %p101
        $region130: #{trajectory_generator_forward.1} parent=51 // pred_check_branch
          %524 = sbr.rel (%p522) target = $region132
        $region131: #{trajectory_generator_forward.1} parent=51 // pred_region
          %p525 = scmp.lt.s32.totalorder %s29, 1
          %s526 = scalar_select %p525, %s29, 1
          %s527 = smul.addr %s526, 8
          %s528 = scalar_lea.vmem %s3, %s527
        $region132: #{trajectory_generator_forward.1} parent=51 // pred_fallthru
          _
      $region52: #{trajectory_generator_forward.1} parent=5 // pred_fallthru
        _
      %p529 = scmp.le.s32.totalorder 1, %s29
      %p530 = scmp.lt.s32.totalorder %s29, 3
      %p531 = pnand %p529, %p530
      %p532 = pneg %p531
      // Predicated region
      $region133: #{trajectory_generator_forward.1} parent=5 // pred_check
        _
      $region134: #{trajectory_generator_forward.1} parent=5 // pred_check_branch
        %534 = sbr.rel (%p531) target = $region136
      $region135: #{trajectory_generator_forward.1} parent=5 // pred_region
        %s535 = ssub.s32 %s29, 1
        %s536 = sand.u32 %s42, 1
        %s537 = sand.u32 %s42, 1
        %s538 = smul.addr %s537, 48
        %s539 = scalar_lea.vmem [#allocation4], %s538
        // Predicated region
        $region137: #{trajectory_generator_forward.1} parent=135 // pred_check
          %p540 = pneg %p55
        $region138: #{trajectory_generator_forward.1} parent=135 // pred_check_branch
          %542 = sbr.rel (%p540) target = $region140
        $region139: #{trajectory_generator_forward.1} parent=135 // pred_region
          _
        $region140: #{trajectory_generator_forward.1} parent=135 // pred_fallthru
          _
        %s543 = sand.u32 %s68, 1
        %s544 = sand.u32 %s68, 1
        %s545 = smul.addr %s544, 64
        %s546 = scalar_lea.vmem [#allocation5], %s545
        // Predicated region
        $region141: #{trajectory_generator_forward.1} parent=135 // pred_check
          %p547 = pneg %p81
        $region142: #{trajectory_generator_forward.1} parent=135 // pred_check_branch
          %549 = sbr.rel (%p547) target = $region144
        $region143: #{trajectory_generator_forward.1} parent=135 // pred_region
          _
        $region144: #{trajectory_generator_forward.1} parent=135 // pred_fallthru
          _
        // Predicated region
        $region145: #{trajectory_generator_forward.1} parent=135 // pred_check
          %p550 = pneg %p149
        $region146: #{trajectory_generator_forward.1} parent=135 // pred_check_branch
          %552 = sbr.rel (%p550) target = $region148
        $region147: #{trajectory_generator_forward.1} parent=135 // pred_region
          %554 = dma.done [#allocation7], 8192
        $region148: #{trajectory_generator_forward.1} parent=135 // pred_fallthru
          _
        // Predicated region
        $region149: #{trajectory_generator_forward.1} parent=135 // pred_check
          %p555 = pneg %p233
        $region150: #{trajectory_generator_forward.1} parent=135 // pred_check_branch
          %557 = sbr.rel (%p555) target = $region152
        $region151: #{trajectory_generator_forward.1} parent=135 // pred_region
          %559 = dma.done [#allocation9], 16384
        $region152: #{trajectory_generator_forward.1} parent=135 // pred_fallthru
          _
        %s560 = sand.u32 %s42, 1
        %s561 = sand.u32 %s42, 1
        %s562 = smul.addr %s561, 48
        %s563 = scalar_lea.vmem [#allocation4], %s562
        %p564 = pneg %p55
        %p565 = pneg %p52
        %s566 = sand.u32 %s68, 1
        %s567 = sand.u32 %s68, 1
        %s568 = smul.addr %s567, 64
        %s569 = scalar_lea.vmem [#allocation5], %s568
        %p570 = pneg %p81
        %p571 = pneg %p78
        %p572 = scmp.lt.s32.totalorder %s34, 1
        %s573 = scalar_select %p572, %s34, 1
        %s574 = smul.addr %s573, 8
        %s575 = scalar_lea.vmem %s3, %s574
        %p576 = pneg %p107
        %p577 = pneg %p104
        %p578 = pneg %p128
        %p579 = pneg %p125
        %p580 = pneg %p149
        %p581 = pneg %p146
        %p582 = pneg %p170
        %p583 = pneg %p167
        %p584 = pneg %p191
        %p585 = pneg %p188
        %p586 = pneg %p212
        %p587 = pneg %p209
        %p588 = pneg %p233
        %p589 = pneg %p230
        %p590 = pneg %p254
        %p591 = pneg %p251
        %p592 = pneg %p275
        %p593 = pneg %p272
        %p594 = pneg %p296
        %p595 = pneg %p293
        %p596 = pneg %p322
        %p597 = pneg %p319
        %s598 = sand.u32 %s309, 1
        %s599 = sand.u32 %s309, 1
        %s600 = smul.addr %s599, 64
        %s601 = scalar_lea.vmem [#allocation10], %s600
        %p602 = scmp.lt.s32.totalorder %s34, 1
        %s603 = scalar_select %p602, %s34, 1
        %s604 = smul.addr %s603, 8
        %s605 = scalar_lea.vmem %s3, %s604
        %v606 = vld [vmem:[#allocation6] sm:$0xff]
        %v607 = vld [vmem:[#allocation6 + $0x8] sm:$0xff]
        %v608 = vld [vmem:[#allocation6 + $0x10] sm:$0xff]
        %v609 = vld [vmem:[#allocation6 + $0x18] sm:$0xff]
        %v610 = vld [vmem:[#allocation6 + $0x20] sm:$0xff]
        %v611 = vld [vmem:[#allocation6 + $0x28] sm:$0xff]
        %v612 = vld [vmem:[#allocation6 + $0x30] sm:$0xff]
        %v613 = vld [vmem:[#allocation6 + $0x38] sm:$0xff]
        %v614 = vld [vmem:[#allocation6 + $0x40] sm:$0xff]
        %v615 = vld [vmem:[#allocation6 + $0x48] sm:$0xff]
        %v616 = vld [vmem:[#allocation6 + $0x50] sm:$0xff]
        %v617 = vld [vmem:[#allocation6 + $0x58] sm:$0xff]
        %v618 = vld [vmem:[#allocation6 + $0x60] sm:$0xff]
        %v619 = vld [vmem:[#allocation6 + $0x68] sm:$0xff]
        %v620 = vld [vmem:[#allocation6 + $0x70] sm:$0xff]
        %v621 = vld [vmem:[#allocation6 + $0x78] sm:$0xff]
        %v622 = vld [vmem:[#allocation6 + $0x80] sm:$0xff]
        %v623 = vld [vmem:[#allocation6 + $0x88] sm:$0xff]
        %v624 = vld [vmem:[#allocation6 + $0x90] sm:$0xff]
        %v625 = vld [vmem:[#allocation6 + $0x98] sm:$0xff]
        %v626 = vld [vmem:[#allocation6 + $0xa0] sm:$0xff]
        %v627 = vld [vmem:[#allocation6 + $0xa8] sm:$0xff]
        %v628 = vld [vmem:[#allocation6 + $0xb0] sm:$0xff]
        %v629 = vld [vmem:[#allocation6 + $0xb8] sm:$0xff]
        %v630 = vld [vmem:[#allocation6 + $0xc0] sm:$0xff]
        %v631 = vld [vmem:[#allocation6 + $0xc8] sm:$0xff]
        %v632 = vld [vmem:[#allocation6 + $0xd0] sm:$0xff]
        %v633 = vld [vmem:[#allocation6 + $0xd8] sm:$0xff]
        %v634 = vld [vmem:[#allocation6 + $0xe0] sm:$0xff]
        %v635 = vld [vmem:[#allocation6 + $0xe8] sm:$0xff]
        %v636 = vld [vmem:[#allocation6 + $0xf0] sm:$0xff]
        %v637 = vld [vmem:[#allocation6 + $0xf8] sm:$0xff]
        %v638 = vld [vmem:[#allocation6 + $0x100] sm:$0xff]
        %v639 = vld [vmem:[#allocation6 + $0x108] sm:$0xff]
        %v640 = vld [vmem:[#allocation6 + $0x110] sm:$0xff]
        %v641 = vld [vmem:[#allocation6 + $0x118] sm:$0xff]
        %v642 = vld [vmem:[#allocation6 + $0x120] sm:$0xff]
        %v643 = vld [vmem:[#allocation6 + $0x128] sm:$0xff]
        %v644 = vld [vmem:[#allocation6 + $0x130] sm:$0xff]
        %v645 = vld [vmem:[#allocation6 + $0x138] sm:$0xff]
        %v646 = vld [vmem:[#allocation6 + $0x140] sm:$0xff]
        %v647 = vld [vmem:[#allocation6 + $0x148] sm:$0xff]
        %v648 = vld [vmem:[#allocation6 + $0x150] sm:$0xff]
        %v649 = vld [vmem:[#allocation6 + $0x158] sm:$0xff]
        %v650 = vld [vmem:[#allocation6 + $0x160] sm:$0xff]
        %v651 = vld [vmem:[#allocation6 + $0x168] sm:$0xff]
        %v652 = vld [vmem:[#allocation6 + $0x170] sm:$0xff]
        %v653 = vld [vmem:[#allocation6 + $0x178] sm:$0xff]
        %v654 = vld [vmem:[#allocation6 + $0x180] sm:$0xff]
        %v655 = vld [vmem:[#allocation6 + $0x188] sm:$0xff]
        %v656 = vld [vmem:[#allocation6 + $0x190] sm:$0xff]
        %v657 = vld [vmem:[#allocation6 + $0x198] sm:$0xff]
        %v658 = vld [vmem:[#allocation6 + $0x1a0] sm:$0xff]
        %v659 = vld [vmem:[#allocation6 + $0x1a8] sm:$0xff]
        %v660 = vld [vmem:[#allocation6 + $0x1b0] sm:$0xff]
        %v661 = vld [vmem:[#allocation6 + $0x1b8] sm:$0xff]
        %v662 = vld [vmem:[#allocation6 + $0x1c0] sm:$0xff]
        %v663 = vld [vmem:[#allocation6 + $0x1c8] sm:$0xff]
        %v664 = vld [vmem:[#allocation6 + $0x1d0] sm:$0xff]
        %v665 = vld [vmem:[#allocation6 + $0x1d8] sm:$0xff]
        %v666 = vld [vmem:[#allocation6 + $0x1e0] sm:$0xff]
        %v667 = vld [vmem:[#allocation6 + $0x1e8] sm:$0xff]
        %v668 = vld [vmem:[#allocation6 + $0x1f0] sm:$0xff]
        %v669 = vld [vmem:[#allocation6 + $0x1f8] sm:$0xff]
        %v670 = vld [vmem:[#allocation8] sm:$0xff]
        %v671 = vld [vmem:[#allocation8 + $0x8] sm:$0xff]
        %v672 = vld [vmem:[#allocation8 + $0x10] sm:$0xff]
        %v673 = vld [vmem:[#allocation8 + $0x18] sm:$0xff]
        %v674 = vld [vmem:[#allocation8 + $0x20] sm:$0xff]
        %v675 = vld [vmem:[#allocation8 + $0x28] sm:$0xff]
        %v676 = vld [vmem:[#allocation8 + $0x30] sm:$0xff]
        %v677 = vld [vmem:[#allocation8 + $0x38] sm:$0xff]
        %v678 = vld [vmem:[#allocation8 + $0x40] sm:$0xff]
        %v679 = vld [vmem:[#allocation8 + $0x48] sm:$0xff]
        %v680 = vld [vmem:[#allocation8 + $0x50] sm:$0xff]
        %v681 = vld [vmem:[#allocation8 + $0x58] sm:$0xff]
        %v682 = vld [vmem:[#allocation8 + $0x60] sm:$0xff]
        %v683 = vld [vmem:[#allocation8 + $0x68] sm:$0xff]
        %v684 = vld [vmem:[#allocation8 + $0x70] sm:$0xff]
        %v685 = vld [vmem:[#allocation8 + $0x78] sm:$0xff]
        %v686 = vld [vmem:[#allocation8 + $0x80] sm:$0xff]
        %v687 = vld [vmem:[#allocation8 + $0x88] sm:$0xff]
        %v688 = vld [vmem:[#allocation8 + $0x90] sm:$0xff]
        %v689 = vld [vmem:[#allocation8 + $0x98] sm:$0xff]
        %v690 = vld [vmem:[#allocation8 + $0xa0] sm:$0xff]
        %v691 = vld [vmem:[#allocation8 + $0xa8] sm:$0xff]
        %v692 = vld [vmem:[#allocation8 + $0xb0] sm:$0xff]
        %v693 = vld [vmem:[#allocation8 + $0xb8] sm:$0xff]
        %v694 = vld [vmem:[#allocation8 + $0xc0] sm:$0xff]
        %v695 = vld [vmem:[#allocation8 + $0xc8] sm:$0xff]
        %v696 = vld [vmem:[#allocation8 + $0xd0] sm:$0xff]
        %v697 = vld [vmem:[#allocation8 + $0xd8] sm:$0xff]
        %v698 = vld [vmem:[#allocation8 + $0xe0] sm:$0xff]
        %v699 = vld [vmem:[#allocation8 + $0xe8] sm:$0xff]
        %v700 = vld [vmem:[#allocation8 + $0xf0] sm:$0xff]
        %v701 = vld [vmem:[#allocation8 + $0xf8] sm:$0xff]
        %v702 = vld [vmem:[#allocation8 + $0x100] sm:$0xff]
        %v703 = vld [vmem:[#allocation8 + $0x108] sm:$0xff]
        %v704 = vld [vmem:[#allocation8 + $0x110] sm:$0xff]
        %v705 = vld [vmem:[#allocation8 + $0x118] sm:$0xff]
        %v706 = vld [vmem:[#allocation8 + $0x120] sm:$0xff]
        %v707 = vld [vmem:[#allocation8 + $0x128] sm:$0xff]
        %v708 = vld [vmem:[#allocation8 + $0x130] sm:$0xff]
        %v709 = vld [vmem:[#allocation8 + $0x138] sm:$0xff]
        %v710 = vld [vmem:[#allocation8 + $0x140] sm:$0xff]
        %v711 = vld [vmem:[#allocation8 + $0x148] sm:$0xff]
        %v712 = vld [vmem:[#allocation8 + $0x150] sm:$0xff]
        %v713 = vld [vmem:[#allocation8 + $0x158] sm:$0xff]
        %v714 = vld [vmem:[#allocation8 + $0x160] sm:$0xff]
        %v715 = vld [vmem:[#allocation8 + $0x168] sm:$0xff]
        %v716 = vld [vmem:[#allocation8 + $0x170] sm:$0xff]
        %v717 = vld [vmem:[#allocation8 + $0x178] sm:$0xff]
        %v718 = vld [vmem:[#allocation8 + $0x180] sm:$0xff]
        %v719 = vld [vmem:[#allocation8 + $0x188] sm:$0xff]
        %v720 = vld [vmem:[#allocation8 + $0x190] sm:$0xff]
        %v721 = vld [vmem:[#allocation8 + $0x198] sm:$0xff]
        %v722 = vld [vmem:[#allocation8 + $0x1a0] sm:$0xff]
        %v723 = vld [vmem:[#allocation8 + $0x1a8] sm:$0xff]
        %v724 = vld [vmem:[#allocation8 + $0x1b0] sm:$0xff]
        %v725 = vld [vmem:[#allocation8 + $0x1b8] sm:$0xff]
        %v726 = vld [vmem:[#allocation8 + $0x1c0] sm:$0xff]
        %v727 = vld [vmem:[#allocation8 + $0x1c8] sm:$0xff]
        %v728 = vld [vmem:[#allocation8 + $0x1d0] sm:$0xff]
        %v729 = vld [vmem:[#allocation8 + $0x1d8] sm:$0xff]
        %v730 = vld [vmem:[#allocation8 + $0x1e0] sm:$0xff]
        %v731 = vld [vmem:[#allocation8 + $0x1e8] sm:$0xff]
        %v732 = vld [vmem:[#allocation8 + $0x1f0] sm:$0xff]
        %v733 = vld [vmem:[#allocation8 + $0x1f8] sm:$0xff]
        %v734 = vld [vmem:[#allocation8 + $0x200] sm:$0xff]
        %v735 = vld [vmem:[#allocation8 + $0x208] sm:$0xff]
        %v736 = vld [vmem:[#allocation8 + $0x210] sm:$0xff]
        %v737 = vld [vmem:[#allocation8 + $0x218] sm:$0xff]
        %v738 = vld [vmem:[#allocation8 + $0x220] sm:$0xff]
        %v739 = vld [vmem:[#allocation8 + $0x228] sm:$0xff]
        %v740 = vld [vmem:[#allocation8 + $0x230] sm:$0xff]
        %v741 = vld [vmem:[#allocation8 + $0x238] sm:$0xff]
        %v742 = vld [vmem:[#allocation8 + $0x240] sm:$0xff]
        %v743 = vld [vmem:[#allocation8 + $0x248] sm:$0xff]
        %v744 = vld [vmem:[#allocation8 + $0x250] sm:$0xff]
        %v745 = vld [vmem:[#allocation8 + $0x258] sm:$0xff]
        %v746 = vld [vmem:[#allocation8 + $0x260] sm:$0xff]
        %v747 = vld [vmem:[#allocation8 + $0x268] sm:$0xff]
        %v748 = vld [vmem:[#allocation8 + $0x270] sm:$0xff]
        %v749 = vld [vmem:[#allocation8 + $0x278] sm:$0xff]
        %v750 = vld [vmem:[#allocation8 + $0x280] sm:$0xff]
        %v751 = vld [vmem:[#allocation8 + $0x288] sm:$0xff]
        %v752 = vld [vmem:[#allocation8 + $0x290] sm:$0xff]
        %v753 = vld [vmem:[#allocation8 + $0x298] sm:$0xff]
        %v754 = vld [vmem:[#allocation8 + $0x2a0] sm:$0xff]
        %v755 = vld [vmem:[#allocation8 + $0x2a8] sm:$0xff]
        %v756 = vld [vmem:[#allocation8 + $0x2b0] sm:$0xff]
        %v757 = vld [vmem:[#allocation8 + $0x2b8] sm:$0xff]
        %v758 = vld [vmem:[#allocation8 + $0x2c0] sm:$0xff]
        %v759 = vld [vmem:[#allocation8 + $0x2c8] sm:$0xff]
        %v760 = vld [vmem:[#allocation8 + $0x2d0] sm:$0xff]
        %v761 = vld [vmem:[#allocation8 + $0x2d8] sm:$0xff]
        %v762 = vld [vmem:[#allocation8 + $0x2e0] sm:$0xff]
        %v763 = vld [vmem:[#allocation8 + $0x2e8] sm:$0xff]
        %v764 = vld [vmem:[#allocation8 + $0x2f0] sm:$0xff]
        %v765 = vld [vmem:[#allocation8 + $0x2f8] sm:$0xff]
        %v766 = vld [vmem:[#allocation8 + $0x300] sm:$0xff]
        %v767 = vld [vmem:[#allocation8 + $0x308] sm:$0xff]
        %v768 = vld [vmem:[#allocation8 + $0x310] sm:$0xff]
        %v769 = vld [vmem:[#allocation8 + $0x318] sm:$0xff]
        %v770 = vld [vmem:[#allocation8 + $0x320] sm:$0xff]
        %v771 = vld [vmem:[#allocation8 + $0x328] sm:$0xff]
        %v772 = vld [vmem:[#allocation8 + $0x330] sm:$0xff]
        %v773 = vld [vmem:[#allocation8 + $0x338] sm:$0xff]
        %v774 = vld [vmem:[#allocation8 + $0x340] sm:$0xff]
        %v775 = vld [vmem:[#allocation8 + $0x348] sm:$0xff]
        %v776 = vld [vmem:[#allocation8 + $0x350] sm:$0xff]
        %v777 = vld [vmem:[#allocation8 + $0x358] sm:$0xff]
        %v778 = vld [vmem:[#allocation8 + $0x360] sm:$0xff]
        %v779 = vld [vmem:[#allocation8 + $0x368] sm:$0xff]
        %v780 = vld [vmem:[#allocation8 + $0x370] sm:$0xff]
        %v781 = vld [vmem:[#allocation8 + $0x378] sm:$0xff]
        %v782 = vld [vmem:[#allocation8 + $0x380] sm:$0xff]
        %v783 = vld [vmem:[#allocation8 + $0x388] sm:$0xff]
        %v784 = vld [vmem:[#allocation8 + $0x390] sm:$0xff]
        %v785 = vld [vmem:[#allocation8 + $0x398] sm:$0xff]
        %v786 = vld [vmem:[#allocation8 + $0x3a0] sm:$0xff]
        %v787 = vld [vmem:[#allocation8 + $0x3a8] sm:$0xff]
        %v788 = vld [vmem:[#allocation8 + $0x3b0] sm:$0xff]
        %v789 = vld [vmem:[#allocation8 + $0x3b8] sm:$0xff]
        %v790 = vld [vmem:[#allocation8 + $0x3c0] sm:$0xff]
        %v791 = vld [vmem:[#allocation8 + $0x3c8] sm:$0xff]
        %v792 = vld [vmem:[#allocation8 + $0x3d0] sm:$0xff]
        %v793 = vld [vmem:[#allocation8 + $0x3d8] sm:$0xff]
        %v794 = vld [vmem:[#allocation8 + $0x3e0] sm:$0xff]
        %v795 = vld [vmem:[#allocation8 + $0x3e8] sm:$0xff]
        %v796 = vld [vmem:[#allocation8 + $0x3f0] sm:$0xff]
        %v797 = vld [vmem:[#allocation8 + $0x3f8] sm:$0xff]
        %v798 = vld [vmem:[%s10] sm:$0xf]
        %v800 = vperm.slane %v798, 0
        %v801 = vperm.slane %v798, 1
        %v802 = vperm.slane %v798, 2
        %v803 = vperm.slane %v798, 3
        %v808 = vld [vmem:[%s539] sm:$0xff]
        %s809 = scalar_lea.vmem %s539, 8 [#allocation4]
        %v810 = vld [vmem:[%s809] sm:$0xff]
        %s811 = scalar_lea.vmem %s539, 16 [#allocation4]
        %v812 = vld [vmem:[%s811] sm:$0xff]
        %s813 = scalar_lea.vmem %s539, 24 [#allocation4]
        %v814 = vld [vmem:[%s813] sm:$0xff]
        %s815 = scalar_lea.vmem %s539, 32 [#allocation4]
        %v816 = vld [vmem:[%s815] sm:$0xff]
        %s817 = scalar_lea.vmem %s539, 40 [#allocation4]
        %v818 = vld [vmem:[%s817] sm:$0xff]
        %v819 = vld [vmem:[%s4] sm:$0xff]
        %v820 = vld [vmem:[%s4 + $0x8] sm:$0xff]
        %v821 = vld [vmem:[%s4 + $0x10] sm:$0xff]
        %v822 = vld [vmem:[%s4 + $0x18] sm:$0xff]
        %v823 = vld [vmem:[%s6] sm:$0xf]
        %v825 = vperm.slane %v823, 0
        %v826 = vperm.slane %v823, 1
        %v827 = vperm.slane %v823, 2
        %v828 = vperm.slane %v823, 3
        %vm833 = vcmask 64512
        %v835 = vsel %vm833, %v808, 0
        %v838 = vsel %vm833, %v810, 0
        %v841 = vsel %vm833, %v812, 0
        %v844 = vsel %vm833, %v814, 0
        %v847 = vsel %vm833, %v816, 0
        %v850 = vsel %vm833, %v818, 0
        %852 = vmatpush.msra.mxu0 0.0
        %853 = vmatpush.msra.mxu0 0.0
        %854 = vmatpush.msra.mxu0 0.0
        %855 = vmatpush.msra.mxu0 0.0
        %856 = vmatpush.msra.mxu0 0.0
        %857 = vmatpush.msra.mxu0 0.0
        %858 = vmatpush.msra.mxu0 0.0
        %859 = vmatpush.msra.mxu0 0.0
        %860 = vmatpush.msra.mxu0 0.0
        %861 = vmatpush.msra.mxu0 0.0
        %862 = vmatpush.msra.mxu0 0.0
        %863 = vmatpush.msra.mxu0 0.0
        %864 = vmatpush.msra.mxu0 0.0
        %865 = vmatpush.msra.mxu0 0.0
        %866 = vmatpush.msra.mxu0 0.0
        %867 = vmatpush.msra.mxu0 %v819
        %868 = vmatmul.f32.gmra.mxu0 %v835
        %v869 = vpop.f32.mrf.mxu0
        %v870 = vadd.f32 %v825, %v869
        %871 = vmatmul.f32.gmra.mxu0 %v838
        %v872 = vpop.f32.mrf.mxu0
        %v873 = vadd.f32 %v825, %v872
        %874 = vmatmul.f32.gmra.mxu0 %v841
        %v875 = vpop.f32.mrf.mxu0
        %v876 = vadd.f32 %v825, %v875
        %877 = vmatmul.f32.gmra.mxu0 %v844
        %v878 = vpop.f32.mrf.mxu0
        %v879 = vadd.f32 %v825, %v878
        %880 = vmatmul.f32.gmra.mxu0 %v847
        %v881 = vpop.f32.mrf.mxu0
        %v882 = vadd.f32 %v825, %v881
        %883 = vmatmul.f32.gmra.mxu0 %v850
        %v884 = vpop.f32.mrf.mxu0
        %v885 = vadd.f32 %v825, %v884
        %886 = vdwg.mxu0
        %887 = vmatpush.msra.mxu0 0.0
        %888 = vmatpush.msra.mxu0 0.0
        %889 = vmatpush.msra.mxu0 0.0
        %890 = vmatpush.msra.mxu0 0.0
        %891 = vmatpush.msra.mxu0 0.0
        %892 = vmatpush.msra.mxu0 0.0
        %893 = vmatpush.msra.mxu0 0.0
        %894 = vmatpush.msra.mxu0 0.0
        %895 = vmatpush.msra.mxu0 0.0
        %896 = vmatpush.msra.mxu0 0.0
        %897 = vmatpush.msra.mxu0 0.0
        %898 = vmatpush.msra.mxu0 0.0
        %899 = vmatpush.msra.mxu0 0.0
        %900 = vmatpush.msra.mxu0 0.0
        %901 = vmatpush.msra.mxu0 0.0
        %902 = vmatpush.msra.mxu0 %v820
        %903 = vmatmul.f32.gmra.mxu0 %v835
        %v904 = vpop.f32.mrf.mxu0
        %v905 = vadd.f32 %v826, %v904
        %906 = vmatmul.f32.gmra.mxu0 %v838
        %v907 = vpop.f32.mrf.mxu0
        %v908 = vadd.f32 %v826, %v907
        %909 = vmatmul.f32.gmra.mxu0 %v841
        %v910 = vpop.f32.mrf.mxu0
        %v911 = vadd.f32 %v826, %v910
        %912 = vmatmul.f32.gmra.mxu0 %v844
        %v913 = vpop.f32.mrf.mxu0
        %v914 = vadd.f32 %v826, %v913
        %915 = vmatmul.f32.gmra.mxu0 %v847
        %v916 = vpop.f32.mrf.mxu0
        %v917 = vadd.f32 %v826, %v916
        %918 = vmatmul.f32.gmra.mxu0 %v850
        %v919 = vpop.f32.mrf.mxu0
        %v920 = vadd.f32 %v826, %v919
        %921 = vdwg.mxu0
        %922 = vmatpush.msra.mxu0 0.0
        %923 = vmatpush.msra.mxu0 0.0
        %924 = vmatpush.msra.mxu0 0.0
        %925 = vmatpush.msra.mxu0 0.0
        %926 = vmatpush.msra.mxu0 0.0
        %927 = vmatpush.msra.mxu0 0.0
        %928 = vmatpush.msra.mxu0 0.0
        %929 = vmatpush.msra.mxu0 0.0
        %930 = vmatpush.msra.mxu0 0.0
        %931 = vmatpush.msra.mxu0 0.0
        %932 = vmatpush.msra.mxu0 0.0
        %933 = vmatpush.msra.mxu0 0.0
        %934 = vmatpush.msra.mxu0 0.0
        %935 = vmatpush.msra.mxu0 0.0
        %936 = vmatpush.msra.mxu0 0.0
        %937 = vmatpush.msra.mxu0 %v821
        %938 = vmatmul.f32.gmra.mxu0 %v835
        %v939 = vpop.f32.mrf.mxu0
        %v940 = vadd.f32 %v827, %v939
        %941 = vmatmul.f32.gmra.mxu0 %v838
        %v942 = vpop.f32.mrf.mxu0
        %v943 = vadd.f32 %v827, %v942
        %944 = vmatmul.f32.gmra.mxu0 %v841
        %v945 = vpop.f32.mrf.mxu0
        %v946 = vadd.f32 %v827, %v945
        %947 = vmatmul.f32.gmra.mxu0 %v844
        %v948 = vpop.f32.mrf.mxu0
        %v949 = vadd.f32 %v827, %v948
        %950 = vmatmul.f32.gmra.mxu0 %v847
        %v951 = vpop.f32.mrf.mxu0
        %v952 = vadd.f32 %v827, %v951
        %953 = vmatmul.f32.gmra.mxu0 %v850
        %v954 = vpop.f32.mrf.mxu0
        %v955 = vadd.f32 %v827, %v954
        %956 = vdwg.mxu0
        %957 = vmatpush.msra.mxu0 0.0
        %958 = vmatpush.msra.mxu0 0.0
        %959 = vmatpush.msra.mxu0 0.0
        %960 = vmatpush.msra.mxu0 0.0
        %961 = vmatpush.msra.mxu0 0.0
        %962 = vmatpush.msra.mxu0 0.0
        %963 = vmatpush.msra.mxu0 0.0
        %964 = vmatpush.msra.mxu0 0.0
        %965 = vmatpush.msra.mxu0 0.0
        %966 = vmatpush.msra.mxu0 0.0
        %967 = vmatpush.msra.mxu0 0.0
        %968 = vmatpush.msra.mxu0 0.0
        %969 = vmatpush.msra.mxu0 0.0
        %970 = vmatpush.msra.mxu0 0.0
        %971 = vmatpush.msra.mxu0 0.0
        %972 = vmatpush.msra.mxu0 %v822
        %973 = vmatmul.f32.gmra.mxu0 %v835
        %v974 = vpop.f32.mrf.mxu0
        %v975 = vadd.f32 %v828, %v974
        %976 = vmatmul.f32.gmra.mxu0 %v838
        %v977 = vpop.f32.mrf.mxu0
        %v978 = vadd.f32 %v828, %v977
        %979 = vmatmul.f32.gmra.mxu0 %v841
        %v980 = vpop.f32.mrf.mxu0
        %v981 = vadd.f32 %v828, %v980
        %982 = vmatmul.f32.gmra.mxu0 %v844
        %v983 = vpop.f32.mrf.mxu0
        %v984 = vadd.f32 %v828, %v983
        %985 = vmatmul.f32.gmra.mxu0 %v847
        %v986 = vpop.f32.mrf.mxu0
        %v987 = vadd.f32 %v828, %v986
        %988 = vmatmul.f32.gmra.mxu0 %v850
        %v989 = vpop.f32.mrf.mxu0
        %v990 = vadd.f32 %v828, %v989
        %991 = vdwg.mxu0
        %v992 = vxor.u32 %v870, 2147483648
        %v993 = vxor.u32 %v905, 2147483648
        %v994 = vxor.u32 %v940, 2147483648
        %v995 = vxor.u32 %v975, 2147483648
        %v996 = vmul.f32 %v992, 1.442695
        %v997 = vpow.pop %v996
        %v998 = vmul.f32 %v993, 1.442695
        %v999 = vpow.pop %v998
        %v1000 = vmul.f32 %v994, 1.442695
        %v1001 = vpow.pop %v1000
        %v1002 = vmul.f32 %v995, 1.442695
        %v1003 = vpow.pop %v1002
        %v1004 = vadd.f32 %v997, 1.0
        %v1005 = vadd.f32 %v999, 1.0
        %v1006 = vadd.f32 %v1001, 1.0
        %v1007 = vadd.f32 %v1003, 1.0
        %v1008 = vrcp.pop %v1004
        %v1009 = vmul.f32 %v1004, %v1008
        %v1010 = vsub.f32 1.0, %v1009
        %v1011 = vmul.f32 %v1008, %v1010
        %v1012 = vadd.f32 %v1008, %v1011
        %vm1013 = vweird.f32 %v1004
        %vm1014 = vweird.f32 %v1008
        %vm1015 = vmor %vm1013, %vm1014
        %v1016 = vsel %vm1015, %v1008, %v1012
        %v1017 = vand.u32 2147483647, %v1004
        %vm1018 = vcmp.eq.f32.partialorder %v1017, 8.507059e+37
        %v1019 = vand.u32 %v1004, 2147483648
        %v1020 = vor.u32 1.1754944e-38, %v1019
        %v1021 = vsel %vm1018, %v1020, %v1016
        %v1022 = vmul.f32 1.0, %v1021
        %v1023 = vrcp.pop %v1005
        %v1024 = vmul.f32 %v1005, %v1023
        %v1025 = vsub.f32 1.0, %v1024
        %v1026 = vmul.f32 %v1023, %v1025
        %v1027 = vadd.f32 %v1023, %v1026
        %vm1028 = vweird.f32 %v1005
        %vm1029 = vweird.f32 %v1023
        %vm1030 = vmor %vm1028, %vm1029
        %v1031 = vsel %vm1030, %v1023, %v1027
        %v1032 = vand.u32 2147483647, %v1005
        %vm1033 = vcmp.eq.f32.partialorder %v1032, 8.507059e+37
        %v1034 = vand.u32 %v1005, 2147483648
        %v1035 = vor.u32 1.1754944e-38, %v1034
        %v1036 = vsel %vm1033, %v1035, %v1031
        %v1037 = vmul.f32 1.0, %v1036
        %v1038 = vrcp.pop %v1006
        %v1039 = vmul.f32 %v1006, %v1038
        %v1040 = vsub.f32 1.0, %v1039
        %v1041 = vmul.f32 %v1038, %v1040
        %v1042 = vadd.f32 %v1038, %v1041
        %vm1043 = vweird.f32 %v1006
        %vm1044 = vweird.f32 %v1038
        %vm1045 = vmor %vm1043, %vm1044
        %v1046 = vsel %vm1045, %v1038, %v1042
        %v1047 = vand.u32 2147483647, %v1006
        %vm1048 = vcmp.eq.f32.partialorder %v1047, 8.507059e+37
        %v1049 = vand.u32 %v1006, 2147483648
        %v1050 = vor.u32 1.1754944e-38, %v1049
        %v1051 = vsel %vm1048, %v1050, %v1046
        %v1052 = vmul.f32 1.0, %v1051
        %v1053 = vrcp.pop %v1007
        %v1054 = vmul.f32 %v1007, %v1053
        %v1055 = vsub.f32 1.0, %v1054
        %v1056 = vmul.f32 %v1053, %v1055
        %v1057 = vadd.f32 %v1053, %v1056
        %vm1058 = vweird.f32 %v1007
        %vm1059 = vweird.f32 %v1053
        %vm1060 = vmor %vm1058, %vm1059
        %v1061 = vsel %vm1060, %v1053, %v1057
        %v1062 = vand.u32 2147483647, %v1007
        %vm1063 = vcmp.eq.f32.partialorder %v1062, 8.507059e+37
        %v1064 = vand.u32 %v1007, 2147483648
        %v1065 = vor.u32 1.1754944e-38, %v1064
        %v1066 = vsel %vm1063, %v1065, %v1061
        %v1067 = vmul.f32 1.0, %v1066
        %v1068 = vmul.f32 %v1052, 2.0
        %v1069 = vsub.f32 %v1068, 1.0
        %v1070 = vmul.f32 %v1037, 0.0
        %v1071 = vmul.f32 %v1022, %v1069
        %v1072 = vadd.f32 %v1070, %v1071
        %v1073 = vtanh.pop %v1072
        %v1074 = vmul.f32 %v1067, %v1073
        %1075 = vmatpush.msra.mxu0 %v666
        %1076 = vmatpush.msra.mxu0 %v662
        %1077 = vmatpush.msra.mxu0 %v658
        %1078 = vmatpush.msra.mxu0 %v654
        %1079 = vmatpush.msra.mxu0 %v650
        %1080 = vmatpush.msra.mxu0 %v646
        %1081 = vmatpush.msra.mxu0 %v642
        %1082 = vmatpush.msra.mxu0 %v638
        %1083 = vmatpush.msra.mxu0 %v634
        %1084 = vmatpush.msra.mxu0 %v630
        %1085 = vmatpush.msra.mxu0 %v626
        %1086 = vmatpush.msra.mxu0 %v622
        %1087 = vmatpush.msra.mxu0 %v618
        %1088 = vmatpush.msra.mxu0 %v614
        %1089 = vmatpush.msra.mxu0 %v610
        %1090 = vmatpush.msra.mxu0 %v606
        %1091 = vmatmul.f32.gmra.mxu0 %v1074
        %v1092 = vpop.f32.mrf.mxu0
        %v1093 = vadd.f32 0.0, %v1092
        %1094 = vdwg.mxu0
        %1095 = vmatpush.msra.mxu0 %v667
        %1096 = vmatpush.msra.mxu0 %v663
        %1097 = vmatpush.msra.mxu0 %v659
        %1098 = vmatpush.msra.mxu0 %v655
        %1099 = vmatpush.msra.mxu0 %v651
        %1100 = vmatpush.msra.mxu0 %v647
        %1101 = vmatpush.msra.mxu0 %v643
        %1102 = vmatpush.msra.mxu0 %v639
        %1103 = vmatpush.msra.mxu0 %v635
        %1104 = vmatpush.msra.mxu0 %v631
        %1105 = vmatpush.msra.mxu0 %v627
        %1106 = vmatpush.msra.mxu0 %v623
        %1107 = vmatpush.msra.mxu0 %v619
        %1108 = vmatpush.msra.mxu0 %v615
        %1109 = vmatpush.msra.mxu0 %v611
        %1110 = vmatpush.msra.mxu0 %v607
        %1111 = vmatmul.f32.gmra.mxu0 %v1074
        %v1112 = vpop.f32.mrf.mxu0
        %v1113 = vadd.f32 0.0, %v1112
        %1114 = vdwg.mxu0
        %1115 = vmatpush.msra.mxu0 %v668
        %1116 = vmatpush.msra.mxu0 %v664
        %1117 = vmatpush.msra.mxu0 %v660
        %1118 = vmatpush.msra.mxu0 %v656
        %1119 = vmatpush.msra.mxu0 %v652
        %1120 = vmatpush.msra.mxu0 %v648
        %1121 = vmatpush.msra.mxu0 %v644
        %1122 = vmatpush.msra.mxu0 %v640
        %1123 = vmatpush.msra.mxu0 %v636
        %1124 = vmatpush.msra.mxu0 %v632
        %1125 = vmatpush.msra.mxu0 %v628
        %1126 = vmatpush.msra.mxu0 %v624
        %1127 = vmatpush.msra.mxu0 %v620
        %1128 = vmatpush.msra.mxu0 %v616
        %1129 = vmatpush.msra.mxu0 %v612
        %1130 = vmatpush.msra.mxu0 %v608
        %1131 = vmatmul.f32.gmra.mxu0 %v1074
        %v1132 = vpop.f32.mrf.mxu0
        %v1133 = vadd.f32 0.0, %v1132
        %1134 = vdwg.mxu0
        %1135 = vmatpush.msra.mxu0 %v669
        %1136 = vmatpush.msra.mxu0 %v665
        %1137 = vmatpush.msra.mxu0 %v661
        %1138 = vmatpush.msra.mxu0 %v657
        %1139 = vmatpush.msra.mxu0 %v653
        %1140 = vmatpush.msra.mxu0 %v649
        %1141 = vmatpush.msra.mxu0 %v645
        %1142 = vmatpush.msra.mxu0 %v641
        %1143 = vmatpush.msra.mxu0 %v637
        %1144 = vmatpush.msra.mxu0 %v633
        %1145 = vmatpush.msra.mxu0 %v629
        %1146 = vmatpush.msra.mxu0 %v625
        %1147 = vmatpush.msra.mxu0 %v621
        %1148 = vmatpush.msra.mxu0 %v617
        %1149 = vmatpush.msra.mxu0 %v613
        %1150 = vmatpush.msra.mxu0 %v609
        %1151 = vmatmul.f32.gmra.mxu0 %v1074
        %v1152 = vpop.f32.mrf.mxu0
        %v1153 = vadd.f32 0.0, %v1152
        %1154 = vdwg.mxu0
        %v1155 = vadd.f32 %v873, %v1093
        %v1156 = vadd.f32 %v908, %v1113
        %v1157 = vadd.f32 %v943, %v1133
        %v1158 = vadd.f32 %v978, %v1153
        %v1159 = vxor.u32 %v1155, 2147483648
        %v1160 = vxor.u32 %v1156, 2147483648
        %v1161 = vxor.u32 %v1157, 2147483648
        %v1162 = vxor.u32 %v1158, 2147483648
        %v1163 = vmul.f32 %v1159, 1.442695
        %v1164 = vpow.pop %v1163
        %v1165 = vmul.f32 %v1160, 1.442695
        %v1166 = vpow.pop %v1165
        %v1167 = vmul.f32 %v1161, 1.442695
        %v1168 = vpow.pop %v1167
        %v1169 = vmul.f32 %v1162, 1.442695
        %v1170 = vpow.pop %v1169
        %v1171 = vadd.f32 %v1164, 1.0
        %v1172 = vadd.f32 %v1166, 1.0
        %v1173 = vadd.f32 %v1168, 1.0
        %v1174 = vadd.f32 %v1170, 1.0
        %v1175 = vrcp.pop %v1171
        %v1176 = vmul.f32 %v1171, %v1175
        %v1177 = vsub.f32 1.0, %v1176
        %v1178 = vmul.f32 %v1175, %v1177
        %v1179 = vadd.f32 %v1175, %v1178
        %vm1180 = vweird.f32 %v1171
        %vm1181 = vweird.f32 %v1175
        %vm1182 = vmor %vm1180, %vm1181
        %v1183 = vsel %vm1182, %v1175, %v1179
        %v1184 = vand.u32 2147483647, %v1171
        %vm1185 = vcmp.eq.f32.partialorder %v1184, 8.507059e+37
        %v1186 = vand.u32 %v1171, 2147483648
        %v1187 = vor.u32 1.1754944e-38, %v1186
        %v1188 = vsel %vm1185, %v1187, %v1183
        %v1189 = vmul.f32 1.0, %v1188
        %v1190 = vrcp.pop %v1172
        %v1191 = vmul.f32 %v1172, %v1190
        %v1192 = vsub.f32 1.0, %v1191
        %v1193 = vmul.f32 %v1190, %v1192
        %v1194 = vadd.f32 %v1190, %v1193
        %vm1195 = vweird.f32 %v1172
        %vm1196 = vweird.f32 %v1190
        %vm1197 = vmor %vm1195, %vm1196
        %v1198 = vsel %vm1197, %v1190, %v1194
        %v1199 = vand.u32 2147483647, %v1172
        %vm1200 = vcmp.eq.f32.partialorder %v1199, 8.507059e+37
        %v1201 = vand.u32 %v1172, 2147483648
        %v1202 = vor.u32 1.1754944e-38, %v1201
        %v1203 = vsel %vm1200, %v1202, %v1198
        %v1204 = vmul.f32 1.0, %v1203
        %v1205 = vrcp.pop %v1173
        %v1206 = vmul.f32 %v1173, %v1205
        %v1207 = vsub.f32 1.0, %v1206
        %v1208 = vmul.f32 %v1205, %v1207
        %v1209 = vadd.f32 %v1205, %v1208
        %vm1210 = vweird.f32 %v1173
        %vm1211 = vweird.f32 %v1205
        %vm1212 = vmor %vm1210, %vm1211
        %v1213 = vsel %vm1212, %v1205, %v1209
        %v1214 = vand.u32 2147483647, %v1173
        %vm1215 = vcmp.eq.f32.partialorder %v1214, 8.507059e+37
        %v1216 = vand.u32 %v1173, 2147483648
        %v1217 = vor.u32 1.1754944e-38, %v1216
        %v1218 = vsel %vm1215, %v1217, %v1213
        %v1219 = vmul.f32 1.0, %v1218
        %v1220 = vrcp.pop %v1174
        %v1221 = vmul.f32 %v1174, %v1220
        %v1222 = vsub.f32 1.0, %v1221
        %v1223 = vmul.f32 %v1220, %v1222
        %v1224 = vadd.f32 %v1220, %v1223
        %vm1225 = vweird.f32 %v1174
        %vm1226 = vweird.f32 %v1220
        %vm1227 = vmor %vm1225, %vm1226
        %v1228 = vsel %vm1227, %v1220, %v1224
        %v1229 = vand.u32 2147483647, %v1174
        %vm1230 = vcmp.eq.f32.partialorder %v1229, 8.507059e+37
        %v1231 = vand.u32 %v1174, 2147483648
        %v1232 = vor.u32 1.1754944e-38, %v1231
        %v1233 = vsel %vm1230, %v1232, %v1228
        %v1234 = vmul.f32 1.0, %v1233
        %v1235 = vmul.f32 %v1219, 2.0
        %v1236 = vsub.f32 %v1235, 1.0
        %v1237 = vmul.f32 %v1204, %v1072
        %v1238 = vmul.f32 %v1189, %v1236
        %v1239 = vadd.f32 %v1237, %v1238
        %v1240 = vtanh.pop %v1239
        %v1241 = vmul.f32 %v1234, %v1240
        %1242 = vmatpush.msra.mxu0 %v666
        %1243 = vmatpush.msra.mxu0 %v662
        %1244 = vmatpush.msra.mxu0 %v658
        %1245 = vmatpush.msra.mxu0 %v654
        %1246 = vmatpush.msra.mxu0 %v650
        %1247 = vmatpush.msra.mxu0 %v646
        %1248 = vmatpush.msra.mxu0 %v642
        %1249 = vmatpush.msra.mxu0 %v638
        %1250 = vmatpush.msra.mxu0 %v634
        %1251 = vmatpush.msra.mxu0 %v630
        %1252 = vmatpush.msra.mxu0 %v626
        %1253 = vmatpush.msra.mxu0 %v622
        %1254 = vmatpush.msra.mxu0 %v618
        %1255 = vmatpush.msra.mxu0 %v614
        %1256 = vmatpush.msra.mxu0 %v610
        %1257 = vmatpush.msra.mxu0 %v606
        %1258 = vmatmul.f32.gmra.mxu0 %v1241
        %v1259 = vpop.f32.mrf.mxu0
        %v1260 = vadd.f32 0.0, %v1259
        %1261 = vdwg.mxu0
        %1262 = vmatpush.msra.mxu0 %v667
        %1263 = vmatpush.msra.mxu0 %v663
        %1264 = vmatpush.msra.mxu0 %v659
        %1265 = vmatpush.msra.mxu0 %v655
        %1266 = vmatpush.msra.mxu0 %v651
        %1267 = vmatpush.msra.mxu0 %v647
        %1268 = vmatpush.msra.mxu0 %v643
        %1269 = vmatpush.msra.mxu0 %v639
        %1270 = vmatpush.msra.mxu0 %v635
        %1271 = vmatpush.msra.mxu0 %v631
        %1272 = vmatpush.msra.mxu0 %v627
        %1273 = vmatpush.msra.mxu0 %v623
        %1274 = vmatpush.msra.mxu0 %v619
        %1275 = vmatpush.msra.mxu0 %v615
        %1276 = vmatpush.msra.mxu0 %v611
        %1277 = vmatpush.msra.mxu0 %v607
        %1278 = vmatmul.f32.gmra.mxu0 %v1241
        %v1279 = vpop.f32.mrf.mxu0
        %v1280 = vadd.f32 0.0, %v1279
        %1281 = vdwg.mxu0
        %1282 = vmatpush.msra.mxu0 %v668
        %1283 = vmatpush.msra.mxu0 %v664
        %1284 = vmatpush.msra.mxu0 %v660
        %1285 = vmatpush.msra.mxu0 %v656
        %1286 = vmatpush.msra.mxu0 %v652
        %1287 = vmatpush.msra.mxu0 %v648
        %1288 = vmatpush.msra.mxu0 %v644
        %1289 = vmatpush.msra.mxu0 %v640
        %1290 = vmatpush.msra.mxu0 %v636
        %1291 = vmatpush.msra.mxu0 %v632
        %1292 = vmatpush.msra.mxu0 %v628
        %1293 = vmatpush.msra.mxu0 %v624
        %1294 = vmatpush.msra.mxu0 %v620
        %1295 = vmatpush.msra.mxu0 %v616
        %1296 = vmatpush.msra.mxu0 %v612
        %1297 = vmatpush.msra.mxu0 %v608
        %1298 = vmatmul.f32.gmra.mxu0 %v1241
        %v1299 = vpop.f32.mrf.mxu0
        %v1300 = vadd.f32 0.0, %v1299
        %1301 = vdwg.mxu0
        %1302 = vmatpush.msra.mxu0 %v669
        %1303 = vmatpush.msra.mxu0 %v665
        %1304 = vmatpush.msra.mxu0 %v661
        %1305 = vmatpush.msra.mxu0 %v657
        %1306 = vmatpush.msra.mxu0 %v653
        %1307 = vmatpush.msra.mxu0 %v649
        %1308 = vmatpush.msra.mxu0 %v645
        %1309 = vmatpush.msra.mxu0 %v641
        %1310 = vmatpush.msra.mxu0 %v637
        %1311 = vmatpush.msra.mxu0 %v633
        %1312 = vmatpush.msra.mxu0 %v629
        %1313 = vmatpush.msra.mxu0 %v625
        %1314 = vmatpush.msra.mxu0 %v621
        %1315 = vmatpush.msra.mxu0 %v617
        %1316 = vmatpush.msra.mxu0 %v613
        %1317 = vmatpush.msra.mxu0 %v609
        %1318 = vmatmul.f32.gmra.mxu0 %v1241
        %v1319 = vpop.f32.mrf.mxu0
        %v1320 = vadd.f32 0.0, %v1319
        %1321 = vdwg.mxu0
        %v1322 = vadd.f32 %v876, %v1260
        %v1323 = vadd.f32 %v911, %v1280
        %v1324 = vadd.f32 %v946, %v1300
        %v1325 = vadd.f32 %v981, %v1320
        %v1326 = vxor.u32 %v1322, 2147483648
        %v1327 = vxor.u32 %v1323, 2147483648
        %v1328 = vxor.u32 %v1324, 2147483648
        %v1329 = vxor.u32 %v1325, 2147483648
        %v1330 = vmul.f32 %v1326, 1.442695
        %v1331 = vpow.pop %v1330
        %v1332 = vmul.f32 %v1327, 1.442695
        %v1333 = vpow.pop %v1332
        %v1334 = vmul.f32 %v1328, 1.442695
        %v1335 = vpow.pop %v1334
        %v1336 = vmul.f32 %v1329, 1.442695
        %v1337 = vpow.pop %v1336
        %v1338 = vadd.f32 %v1331, 1.0
        %v1339 = vadd.f32 %v1333, 1.0
        %v1340 = vadd.f32 %v1335, 1.0
        %v1341 = vadd.f32 %v1337, 1.0
        %v1342 = vrcp.pop %v1338
        %v1343 = vmul.f32 %v1338, %v1342
        %v1344 = vsub.f32 1.0, %v1343
        %v1345 = vmul.f32 %v1342, %v1344
        %v1346 = vadd.f32 %v1342, %v1345
        %vm1347 = vweird.f32 %v1338
        %vm1348 = vweird.f32 %v1342
        %vm1349 = vmor %vm1347, %vm1348
        %v1350 = vsel %vm1349, %v1342, %v1346
        %v1351 = vand.u32 2147483647, %v1338
        %vm1352 = vcmp.eq.f32.partialorder %v1351, 8.507059e+37
        %v1353 = vand.u32 %v1338, 2147483648
        %v1354 = vor.u32 1.1754944e-38, %v1353
        %v1355 = vsel %vm1352, %v1354, %v1350
        %v1356 = vmul.f32 1.0, %v1355
        %v1357 = vrcp.pop %v1339
        %v1358 = vmul.f32 %v1339, %v1357
        %v1359 = vsub.f32 1.0, %v1358
        %v1360 = vmul.f32 %v1357, %v1359
        %v1361 = vadd.f32 %v1357, %v1360
        %vm1362 = vweird.f32 %v1339
        %vm1363 = vweird.f32 %v1357
        %vm1364 = vmor %vm1362, %vm1363
        %v1365 = vsel %vm1364, %v1357, %v1361
        %v1366 = vand.u32 2147483647, %v1339
        %vm1367 = vcmp.eq.f32.partialorder %v1366, 8.507059e+37
        %v1368 = vand.u32 %v1339, 2147483648
        %v1369 = vor.u32 1.1754944e-38, %v1368
        %v1370 = vsel %vm1367, %v1369, %v1365
        %v1371 = vmul.f32 1.0, %v1370
        %v1372 = vrcp.pop %v1340
        %v1373 = vmul.f32 %v1340, %v1372
        %v1374 = vsub.f32 1.0, %v1373
        %v1375 = vmul.f32 %v1372, %v1374
        %v1376 = vadd.f32 %v1372, %v1375
        %vm1377 = vweird.f32 %v1340
        %vm1378 = vweird.f32 %v1372
        %vm1379 = vmor %vm1377, %vm1378
        %v1380 = vsel %vm1379, %v1372, %v1376
        %v1381 = vand.u32 2147483647, %v1340
        %vm1382 = vcmp.eq.f32.partialorder %v1381, 8.507059e+37
        %v1383 = vand.u32 %v1340, 2147483648
        %v1384 = vor.u32 1.1754944e-38, %v1383
        %v1385 = vsel %vm1382, %v1384, %v1380
        %v1386 = vmul.f32 1.0, %v1385
        %v1387 = vrcp.pop %v1341
        %v1388 = vmul.f32 %v1341, %v1387
        %v1389 = vsub.f32 1.0, %v1388
        %v1390 = vmul.f32 %v1387, %v1389
        %v1391 = vadd.f32 %v1387, %v1390
        %vm1392 = vweird.f32 %v1341
        %vm1393 = vweird.f32 %v1387
        %vm1394 = vmor %vm1392, %vm1393
        %v1395 = vsel %vm1394, %v1387, %v1391
        %v1396 = vand.u32 2147483647, %v1341
        %vm1397 = vcmp.eq.f32.partialorder %v1396, 8.507059e+37
        %v1398 = vand.u32 %v1341, 2147483648
        %v1399 = vor.u32 1.1754944e-38, %v1398
        %v1400 = vsel %vm1397, %v1399, %v1395
        %v1401 = vmul.f32 1.0, %v1400
        %v1402 = vmul.f32 %v1386, 2.0
        %v1403 = vsub.f32 %v1402, 1.0
        %v1404 = vmul.f32 %v1371, %v1239
        %v1405 = vmul.f32 %v1356, %v1403
        %v1406 = vadd.f32 %v1404, %v1405
        %v1407 = vtanh.pop %v1406
        %v1408 = vmul.f32 %v1401, %v1407
        %1409 = vmatpush.msra.mxu0 %v666
        %1410 = vmatpush.msra.mxu0 %v662
        %1411 = vmatpush.msra.mxu0 %v658
        %1412 = vmatpush.msra.mxu0 %v654
        %1413 = vmatpush.msra.mxu0 %v650
        %1414 = vmatpush.msra.mxu0 %v646
        %1415 = vmatpush.msra.mxu0 %v642
        %1416 = vmatpush.msra.mxu0 %v638
        %1417 = vmatpush.msra.mxu0 %v634
        %1418 = vmatpush.msra.mxu0 %v630
        %1419 = vmatpush.msra.mxu0 %v626
        %1420 = vmatpush.msra.mxu0 %v622
        %1421 = vmatpush.msra.mxu0 %v618
        %1422 = vmatpush.msra.mxu0 %v614
        %1423 = vmatpush.msra.mxu0 %v610
        %1424 = vmatpush.msra.mxu0 %v606
        %1425 = vmatmul.f32.gmra.mxu0 %v1408
        %v1426 = vpop.f32.mrf.mxu0
        %v1427 = vadd.f32 0.0, %v1426
        %1428 = vdwg.mxu0
        %1429 = vmatpush.msra.mxu0 %v667
        %1430 = vmatpush.msra.mxu0 %v663
        %1431 = vmatpush.msra.mxu0 %v659
        %1432 = vmatpush.msra.mxu0 %v655
        %1433 = vmatpush.msra.mxu0 %v651
        %1434 = vmatpush.msra.mxu0 %v647
        %1435 = vmatpush.msra.mxu0 %v643
        %1436 = vmatpush.msra.mxu0 %v639
        %1437 = vmatpush.msra.mxu0 %v635
        %1438 = vmatpush.msra.mxu0 %v631
        %1439 = vmatpush.msra.mxu0 %v627
        %1440 = vmatpush.msra.mxu0 %v623
        %1441 = vmatpush.msra.mxu0 %v619
        %1442 = vmatpush.msra.mxu0 %v615
        %1443 = vmatpush.msra.mxu0 %v611
        %1444 = vmatpush.msra.mxu0 %v607
        %1445 = vmatmul.f32.gmra.mxu0 %v1408
        %v1446 = vpop.f32.mrf.mxu0
        %v1447 = vadd.f32 0.0, %v1446
        %1448 = vdwg.mxu0
        %1449 = vmatpush.msra.mxu0 %v668
        %1450 = vmatpush.msra.mxu0 %v664
        %1451 = vmatpush.msra.mxu0 %v660
        %1452 = vmatpush.msra.mxu0 %v656
        %1453 = vmatpush.msra.mxu0 %v652
        %1454 = vmatpush.msra.mxu0 %v648
        %1455 = vmatpush.msra.mxu0 %v644
        %1456 = vmatpush.msra.mxu0 %v640
        %1457 = vmatpush.msra.mxu0 %v636
        %1458 = vmatpush.msra.mxu0 %v632
        %1459 = vmatpush.msra.mxu0 %v628
        %1460 = vmatpush.msra.mxu0 %v624
        %1461 = vmatpush.msra.mxu0 %v620
        %1462 = vmatpush.msra.mxu0 %v616
        %1463 = vmatpush.msra.mxu0 %v612
        %1464 = vmatpush.msra.mxu0 %v608
        %1465 = vmatmul.f32.gmra.mxu0 %v1408
        %v1466 = vpop.f32.mrf.mxu0
        %v1467 = vadd.f32 0.0, %v1466
        %1468 = vdwg.mxu0
        %1469 = vmatpush.msra.mxu0 %v669
        %1470 = vmatpush.msra.mxu0 %v665
        %1471 = vmatpush.msra.mxu0 %v661
        %1472 = vmatpush.msra.mxu0 %v657
        %1473 = vmatpush.msra.mxu0 %v653
        %1474 = vmatpush.msra.mxu0 %v649
        %1475 = vmatpush.msra.mxu0 %v645
        %1476 = vmatpush.msra.mxu0 %v641
        %1477 = vmatpush.msra.mxu0 %v637
        %1478 = vmatpush.msra.mxu0 %v633
        %1479 = vmatpush.msra.mxu0 %v629
        %1480 = vmatpush.msra.mxu0 %v625
        %1481 = vmatpush.msra.mxu0 %v621
        %1482 = vmatpush.msra.mxu0 %v617
        %1483 = vmatpush.msra.mxu0 %v613
        %1484 = vmatpush.msra.mxu0 %v609
        %1485 = vmatmul.f32.gmra.mxu0 %v1408
        %v1486 = vpop.f32.mrf.mxu0
        %v1487 = vadd.f32 0.0, %v1486
        %1488 = vdwg.mxu0
        %v1489 = vadd.f32 %v879, %v1427
        %v1490 = vadd.f32 %v914, %v1447
        %v1491 = vadd.f32 %v949, %v1467
        %v1492 = vadd.f32 %v984, %v1487
        %v1493 = vxor.u32 %v1489, 2147483648
        %v1494 = vxor.u32 %v1490, 2147483648
        %v1495 = vxor.u32 %v1491, 2147483648
        %v1496 = vxor.u32 %v1492, 2147483648
        %v1497 = vmul.f32 %v1493, 1.442695
        %v1498 = vpow.pop %v1497
        %v1499 = vmul.f32 %v1494, 1.442695
        %v1500 = vpow.pop %v1499
        %v1501 = vmul.f32 %v1495, 1.442695
        %v1502 = vpow.pop %v1501
        %v1503 = vmul.f32 %v1496, 1.442695
        %v1504 = vpow.pop %v1503
        %v1505 = vadd.f32 %v1498, 1.0
        %v1506 = vadd.f32 %v1500, 1.0
        %v1507 = vadd.f32 %v1502, 1.0
        %v1508 = vadd.f32 %v1504, 1.0
        %v1509 = vrcp.pop %v1505
        %v1510 = vmul.f32 %v1505, %v1509
        %v1511 = vsub.f32 1.0, %v1510
        %v1512 = vmul.f32 %v1509, %v1511
        %v1513 = vadd.f32 %v1509, %v1512
        %vm1514 = vweird.f32 %v1505
        %vm1515 = vweird.f32 %v1509
        %vm1516 = vmor %vm1514, %vm1515
        %v1517 = vsel %vm1516, %v1509, %v1513
        %v1518 = vand.u32 2147483647, %v1505
        %vm1519 = vcmp.eq.f32.partialorder %v1518, 8.507059e+37
        %v1520 = vand.u32 %v1505, 2147483648
        %v1521 = vor.u32 1.1754944e-38, %v1520
        %v1522 = vsel %vm1519, %v1521, %v1517
        %v1523 = vmul.f32 1.0, %v1522
        %v1524 = vrcp.pop %v1506
        %v1525 = vmul.f32 %v1506, %v1524
        %v1526 = vsub.f32 1.0, %v1525
        %v1527 = vmul.f32 %v1524, %v1526
        %v1528 = vadd.f32 %v1524, %v1527
        %vm1529 = vweird.f32 %v1506
        %vm1530 = vweird.f32 %v1524
        %vm1531 = vmor %vm1529, %vm1530
        %v1532 = vsel %vm1531, %v1524, %v1528
        %v1533 = vand.u32 2147483647, %v1506
        %vm1534 = vcmp.eq.f32.partialorder %v1533, 8.507059e+37
        %v1535 = vand.u32 %v1506, 2147483648
        %v1536 = vor.u32 1.1754944e-38, %v1535
        %v1537 = vsel %vm1534, %v1536, %v1532
        %v1538 = vmul.f32 1.0, %v1537
        %v1539 = vrcp.pop %v1507
        %v1540 = vmul.f32 %v1507, %v1539
        %v1541 = vsub.f32 1.0, %v1540
        %v1542 = vmul.f32 %v1539, %v1541
        %v1543 = vadd.f32 %v1539, %v1542
        %vm1544 = vweird.f32 %v1507
        %vm1545 = vweird.f32 %v1539
        %vm1546 = vmor %vm1544, %vm1545
        %v1547 = vsel %vm1546, %v1539, %v1543
        %v1548 = vand.u32 2147483647, %v1507
        %vm1549 = vcmp.eq.f32.partialorder %v1548, 8.507059e+37
        %v1550 = vand.u32 %v1507, 2147483648
        %v1551 = vor.u32 1.1754944e-38, %v1550
        %v1552 = vsel %vm1549, %v1551, %v1547
        %v1553 = vmul.f32 1.0, %v1552
        %v1554 = vrcp.pop %v1508
        %v1555 = vmul.f32 %v1508, %v1554
        %v1556 = vsub.f32 1.0, %v1555
        %v1557 = vmul.f32 %v1554, %v1556
        %v1558 = vadd.f32 %v1554, %v1557
        %vm1559 = vweird.f32 %v1508
        %vm1560 = vweird.f32 %v1554
        %vm1561 = vmor %vm1559, %vm1560
        %v1562 = vsel %vm1561, %v1554, %v1558
        %v1563 = vand.u32 2147483647, %v1508
        %vm1564 = vcmp.eq.f32.partialorder %v1563, 8.507059e+37
        %v1565 = vand.u32 %v1508, 2147483648
        %v1566 = vor.u32 1.1754944e-38, %v1565
        %v1567 = vsel %vm1564, %v1566, %v1562
        %v1568 = vmul.f32 1.0, %v1567
        %v1569 = vmul.f32 %v1553, 2.0
        %v1570 = vsub.f32 %v1569, 1.0
        %v1571 = vmul.f32 %v1538, %v1406
        %v1572 = vmul.f32 %v1523, %v1570
        %v1573 = vadd.f32 %v1571, %v1572
        %v1574 = vtanh.pop %v1573
        %v1575 = vmul.f32 %v1568, %v1574
        %1576 = vmatpush.msra.mxu0 %v666
        %1577 = vmatpush.msra.mxu0 %v662
        %1578 = vmatpush.msra.mxu0 %v658
        %1579 = vmatpush.msra.mxu0 %v654
        %1580 = vmatpush.msra.mxu0 %v650
        %1581 = vmatpush.msra.mxu0 %v646
        %1582 = vmatpush.msra.mxu0 %v642
        %1583 = vmatpush.msra.mxu0 %v638
        %1584 = vmatpush.msra.mxu0 %v634
        %1585 = vmatpush.msra.mxu0 %v630
        %1586 = vmatpush.msra.mxu0 %v626
        %1587 = vmatpush.msra.mxu0 %v622
        %1588 = vmatpush.msra.mxu0 %v618
        %1589 = vmatpush.msra.mxu0 %v614
        %1590 = vmatpush.msra.mxu0 %v610
        %1591 = vmatpush.msra.mxu0 %v606
        %1592 = vmatmul.f32.gmra.mxu0 %v1575
        %v1593 = vpop.f32.mrf.mxu0
        %v1594 = vadd.f32 0.0, %v1593
        %1595 = vdwg.mxu0
        %1596 = vmatpush.msra.mxu0 %v667
        %1597 = vmatpush.msra.mxu0 %v663
        %1598 = vmatpush.msra.mxu0 %v659
        %1599 = vmatpush.msra.mxu0 %v655
        %1600 = vmatpush.msra.mxu0 %v651
        %1601 = vmatpush.msra.mxu0 %v647
        %1602 = vmatpush.msra.mxu0 %v643
        %1603 = vmatpush.msra.mxu0 %v639
        %1604 = vmatpush.msra.mxu0 %v635
        %1605 = vmatpush.msra.mxu0 %v631
        %1606 = vmatpush.msra.mxu0 %v627
        %1607 = vmatpush.msra.mxu0 %v623
        %1608 = vmatpush.msra.mxu0 %v619
        %1609 = vmatpush.msra.mxu0 %v615
        %1610 = vmatpush.msra.mxu0 %v611
        %1611 = vmatpush.msra.mxu0 %v607
        %1612 = vmatmul.f32.gmra.mxu0 %v1575
        %v1613 = vpop.f32.mrf.mxu0
        %v1614 = vadd.f32 0.0, %v1613
        %1615 = vdwg.mxu0
        %1616 = vmatpush.msra.mxu0 %v668
        %1617 = vmatpush.msra.mxu0 %v664
        %1618 = vmatpush.msra.mxu0 %v660
        %1619 = vmatpush.msra.mxu0 %v656
        %1620 = vmatpush.msra.mxu0 %v652
        %1621 = vmatpush.msra.mxu0 %v648
        %1622 = vmatpush.msra.mxu0 %v644
        %1623 = vmatpush.msra.mxu0 %v640
        %1624 = vmatpush.msra.mxu0 %v636
        %1625 = vmatpush.msra.mxu0 %v632
        %1626 = vmatpush.msra.mxu0 %v628
        %1627 = vmatpush.msra.mxu0 %v624
        %1628 = vmatpush.msra.mxu0 %v620
        %1629 = vmatpush.msra.mxu0 %v616
        %1630 = vmatpush.msra.mxu0 %v612
        %1631 = vmatpush.msra.mxu0 %v608
        %1632 = vmatmul.f32.gmra.mxu0 %v1575
        %v1633 = vpop.f32.mrf.mxu0
        %v1634 = vadd.f32 0.0, %v1633
        %1635 = vdwg.mxu0
        %1636 = vmatpush.msra.mxu0 %v669
        %1637 = vmatpush.msra.mxu0 %v665
        %1638 = vmatpush.msra.mxu0 %v661
        %1639 = vmatpush.msra.mxu0 %v657
        %1640 = vmatpush.msra.mxu0 %v653
        %1641 = vmatpush.msra.mxu0 %v649
        %1642 = vmatpush.msra.mxu0 %v645
        %1643 = vmatpush.msra.mxu0 %v641
        %1644 = vmatpush.msra.mxu0 %v637
        %1645 = vmatpush.msra.mxu0 %v633
        %1646 = vmatpush.msra.mxu0 %v629
        %1647 = vmatpush.msra.mxu0 %v625
        %1648 = vmatpush.msra.mxu0 %v621
        %1649 = vmatpush.msra.mxu0 %v617
        %1650 = vmatpush.msra.mxu0 %v613
        %1651 = vmatpush.msra.mxu0 %v609
        %1652 = vmatmul.f32.gmra.mxu0 %v1575
        %v1653 = vpop.f32.mrf.mxu0
        %v1654 = vadd.f32 0.0, %v1653
        %1655 = vdwg.mxu0
        %v1656 = vadd.f32 %v882, %v1594
        %v1657 = vadd.f32 %v917, %v1614
        %v1658 = vadd.f32 %v952, %v1634
        %v1659 = vadd.f32 %v987, %v1654
        %v1660 = vxor.u32 %v1656, 2147483648
        %v1661 = vxor.u32 %v1657, 2147483648
        %v1662 = vxor.u32 %v1658, 2147483648
        %v1663 = vxor.u32 %v1659, 2147483648
        %v1664 = vmul.f32 %v1660, 1.442695
        %v1665 = vpow.pop %v1664
        %v1666 = vmul.f32 %v1661, 1.442695
        %v1667 = vpow.pop %v1666
        %v1668 = vmul.f32 %v1662, 1.442695
        %v1669 = vpow.pop %v1668
        %v1670 = vmul.f32 %v1663, 1.442695
        %v1671 = vpow.pop %v1670
        %v1672 = vadd.f32 %v1665, 1.0
        %v1673 = vadd.f32 %v1667, 1.0
        %v1674 = vadd.f32 %v1669, 1.0
        %v1675 = vadd.f32 %v1671, 1.0
        %v1676 = vrcp.pop %v1672
        %v1677 = vmul.f32 %v1672, %v1676
        %v1678 = vsub.f32 1.0, %v1677
        %v1679 = vmul.f32 %v1676, %v1678
        %v1680 = vadd.f32 %v1676, %v1679
        %vm1681 = vweird.f32 %v1672
        %vm1682 = vweird.f32 %v1676
        %vm1683 = vmor %vm1681, %vm1682
        %v1684 = vsel %vm1683, %v1676, %v1680
        %v1685 = vand.u32 2147483647, %v1672
        %vm1686 = vcmp.eq.f32.partialorder %v1685, 8.507059e+37
        %v1687 = vand.u32 %v1672, 2147483648
        %v1688 = vor.u32 1.1754944e-38, %v1687
        %v1689 = vsel %vm1686, %v1688, %v1684
        %v1690 = vmul.f32 1.0, %v1689
        %v1691 = vrcp.pop %v1673
        %v1692 = vmul.f32 %v1673, %v1691
        %v1693 = vsub.f32 1.0, %v1692
        %v1694 = vmul.f32 %v1691, %v1693
        %v1695 = vadd.f32 %v1691, %v1694
        %vm1696 = vweird.f32 %v1673
        %vm1697 = vweird.f32 %v1691
        %vm1698 = vmor %vm1696, %vm1697
        %v1699 = vsel %vm1698, %v1691, %v1695
        %v1700 = vand.u32 2147483647, %v1673
        %vm1701 = vcmp.eq.f32.partialorder %v1700, 8.507059e+37
        %v1702 = vand.u32 %v1673, 2147483648
        %v1703 = vor.u32 1.1754944e-38, %v1702
        %v1704 = vsel %vm1701, %v1703, %v1699
        %v1705 = vmul.f32 1.0, %v1704
        %v1706 = vrcp.pop %v1674
        %v1707 = vmul.f32 %v1674, %v1706
        %v1708 = vsub.f32 1.0, %v1707
        %v1709 = vmul.f32 %v1706, %v1708
        %v1710 = vadd.f32 %v1706, %v1709
        %vm1711 = vweird.f32 %v1674
        %vm1712 = vweird.f32 %v1706
        %vm1713 = vmor %vm1711, %vm1712
        %v1714 = vsel %vm1713, %v1706, %v1710
        %v1715 = vand.u32 2147483647, %v1674
        %vm1716 = vcmp.eq.f32.partialorder %v1715, 8.507059e+37
        %v1717 = vand.u32 %v1674, 2147483648
        %v1718 = vor.u32 1.1754944e-38, %v1717
        %v1719 = vsel %vm1716, %v1718, %v1714
        %v1720 = vmul.f32 1.0, %v1719
        %v1721 = vrcp.pop %v1675
        %v1722 = vmul.f32 %v1675, %v1721
        %v1723 = vsub.f32 1.0, %v1722
        %v1724 = vmul.f32 %v1721, %v1723
        %v1725 = vadd.f32 %v1721, %v1724
        %vm1726 = vweird.f32 %v1675
        %vm1727 = vweird.f32 %v1721
        %vm1728 = vmor %vm1726, %vm1727
        %v1729 = vsel %vm1728, %v1721, %v1725
        %v1730 = vand.u32 2147483647, %v1675
        %vm1731 = vcmp.eq.f32.partialorder %v1730, 8.507059e+37
        %v1732 = vand.u32 %v1675, 2147483648
        %v1733 = vor.u32 1.1754944e-38, %v1732
        %v1734 = vsel %vm1731, %v1733, %v1729
        %v1735 = vmul.f32 1.0, %v1734
        %v1736 = vmul.f32 %v1720, 2.0
        %v1737 = vsub.f32 %v1736, 1.0
        %v1738 = vmul.f32 %v1705, %v1573
        %v1739 = vmul.f32 %v1690, %v1737
        %v1740 = vadd.f32 %v1738, %v1739
        %v1741 = vtanh.pop %v1740
        %v1742 = vmul.f32 %v1735, %v1741
        %1743 = vmatpush.msra.mxu0 %v666
        %1744 = vmatpush.msra.mxu0 %v662
        %1745 = vmatpush.msra.mxu0 %v658
        %1746 = vmatpush.msra.mxu0 %v654
        %1747 = vmatpush.msra.mxu0 %v650
        %1748 = vmatpush.msra.mxu0 %v646
        %1749 = vmatpush.msra.mxu0 %v642
        %1750 = vmatpush.msra.mxu0 %v638
        %1751 = vmatpush.msra.mxu0 %v634
        %1752 = vmatpush.msra.mxu0 %v630
        %1753 = vmatpush.msra.mxu0 %v626
        %1754 = vmatpush.msra.mxu0 %v622
        %1755 = vmatpush.msra.mxu0 %v618
        %1756 = vmatpush.msra.mxu0 %v614
        %1757 = vmatpush.msra.mxu0 %v610
        %1758 = vmatpush.msra.mxu0 %v606
        %1759 = vmatmul.f32.gmra.mxu0 %v1742
        %v1760 = vpop.f32.mrf.mxu0
        %v1761 = vadd.f32 0.0, %v1760
        %1762 = vdwg.mxu0
        %1763 = vmatpush.msra.mxu0 %v667
        %1764 = vmatpush.msra.mxu0 %v663
        %1765 = vmatpush.msra.mxu0 %v659
        %1766 = vmatpush.msra.mxu0 %v655
        %1767 = vmatpush.msra.mxu0 %v651
        %1768 = vmatpush.msra.mxu0 %v647
        %1769 = vmatpush.msra.mxu0 %v643
        %1770 = vmatpush.msra.mxu0 %v639
        %1771 = vmatpush.msra.mxu0 %v635
        %1772 = vmatpush.msra.mxu0 %v631
        %1773 = vmatpush.msra.mxu0 %v627
        %1774 = vmatpush.msra.mxu0 %v623
        %1775 = vmatpush.msra.mxu0 %v619
        %1776 = vmatpush.msra.mxu0 %v615
        %1777 = vmatpush.msra.mxu0 %v611
        %1778 = vmatpush.msra.mxu0 %v607
        %1779 = vmatmul.f32.gmra.mxu0 %v1742
        %v1780 = vpop.f32.mrf.mxu0
        %v1781 = vadd.f32 0.0, %v1780
        %1782 = vdwg.mxu0
        %1783 = vmatpush.msra.mxu0 %v668
        %1784 = vmatpush.msra.mxu0 %v664
        %1785 = vmatpush.msra.mxu0 %v660
        %1786 = vmatpush.msra.mxu0 %v656
        %1787 = vmatpush.msra.mxu0 %v652
        %1788 = vmatpush.msra.mxu0 %v648
        %1789 = vmatpush.msra.mxu0 %v644
        %1790 = vmatpush.msra.mxu0 %v640
        %1791 = vmatpush.msra.mxu0 %v636
        %1792 = vmatpush.msra.mxu0 %v632
        %1793 = vmatpush.msra.mxu0 %v628
        %1794 = vmatpush.msra.mxu0 %v624
        %1795 = vmatpush.msra.mxu0 %v620
        %1796 = vmatpush.msra.mxu0 %v616
        %1797 = vmatpush.msra.mxu0 %v612
        %1798 = vmatpush.msra.mxu0 %v608
        %1799 = vmatmul.f32.gmra.mxu0 %v1742
        %v1800 = vpop.f32.mrf.mxu0
        %v1801 = vadd.f32 0.0, %v1800
        %1802 = vdwg.mxu0
        %1803 = vmatpush.msra.mxu0 %v669
        %1804 = vmatpush.msra.mxu0 %v665
        %1805 = vmatpush.msra.mxu0 %v661
        %1806 = vmatpush.msra.mxu0 %v657
        %1807 = vmatpush.msra.mxu0 %v653
        %1808 = vmatpush.msra.mxu0 %v649
        %1809 = vmatpush.msra.mxu0 %v645
        %1810 = vmatpush.msra.mxu0 %v641
        %1811 = vmatpush.msra.mxu0 %v637
        %1812 = vmatpush.msra.mxu0 %v633
        %1813 = vmatpush.msra.mxu0 %v629
        %1814 = vmatpush.msra.mxu0 %v625
        %1815 = vmatpush.msra.mxu0 %v621
        %1816 = vmatpush.msra.mxu0 %v617
        %1817 = vmatpush.msra.mxu0 %v613
        %1818 = vmatpush.msra.mxu0 %v609
        %1819 = vmatmul.f32.gmra.mxu0 %v1742
        %v1820 = vpop.f32.mrf.mxu0
        %v1821 = vadd.f32 0.0, %v1820
        %1822 = vdwg.mxu0
        %v1823 = vadd.f32 %v885, %v1761
        %v1824 = vadd.f32 %v920, %v1781
        %v1825 = vadd.f32 %v955, %v1801
        %v1826 = vadd.f32 %v990, %v1821
        %v1827 = vxor.u32 %v1823, 2147483648
        %v1828 = vxor.u32 %v1824, 2147483648
        %v1829 = vxor.u32 %v1825, 2147483648
        %v1830 = vxor.u32 %v1826, 2147483648
        %v1831 = vmul.f32 %v1827, 1.442695
        %v1832 = vpow.pop %v1831
        %v1833 = vmul.f32 %v1828, 1.442695
        %v1834 = vpow.pop %v1833
        %v1835 = vmul.f32 %v1829, 1.442695
        %v1836 = vpow.pop %v1835
        %v1837 = vmul.f32 %v1830, 1.442695
        %v1838 = vpow.pop %v1837
        %v1839 = vadd.f32 %v1832, 1.0
        %v1840 = vadd.f32 %v1834, 1.0
        %v1841 = vadd.f32 %v1836, 1.0
        %v1842 = vadd.f32 %v1838, 1.0
        %v1843 = vrcp.pop %v1839
        %v1844 = vmul.f32 %v1839, %v1843
        %v1845 = vsub.f32 1.0, %v1844
        %v1846 = vmul.f32 %v1843, %v1845
        %v1847 = vadd.f32 %v1843, %v1846
        %vm1848 = vweird.f32 %v1839
        %vm1849 = vweird.f32 %v1843
        %vm1850 = vmor %vm1848, %vm1849
        %v1851 = vsel %vm1850, %v1843, %v1847
        %v1852 = vand.u32 2147483647, %v1839
        %vm1853 = vcmp.eq.f32.partialorder %v1852, 8.507059e+37
        %v1854 = vand.u32 %v1839, 2147483648
        %v1855 = vor.u32 1.1754944e-38, %v1854
        %v1856 = vsel %vm1853, %v1855, %v1851
        %v1857 = vmul.f32 1.0, %v1856
        %v1858 = vrcp.pop %v1840
        %v1859 = vmul.f32 %v1840, %v1858
        %v1860 = vsub.f32 1.0, %v1859
        %v1861 = vmul.f32 %v1858, %v1860
        %v1862 = vadd.f32 %v1858, %v1861
        %vm1863 = vweird.f32 %v1840
        %vm1864 = vweird.f32 %v1858
        %vm1865 = vmor %vm1863, %vm1864
        %v1866 = vsel %vm1865, %v1858, %v1862
        %v1867 = vand.u32 2147483647, %v1840
        %vm1868 = vcmp.eq.f32.partialorder %v1867, 8.507059e+37
        %v1869 = vand.u32 %v1840, 2147483648
        %v1870 = vor.u32 1.1754944e-38, %v1869
        %v1871 = vsel %vm1868, %v1870, %v1866
        %v1872 = vmul.f32 1.0, %v1871
        %v1873 = vrcp.pop %v1841
        %v1874 = vmul.f32 %v1841, %v1873
        %v1875 = vsub.f32 1.0, %v1874
        %v1876 = vmul.f32 %v1873, %v1875
        %v1877 = vadd.f32 %v1873, %v1876
        %vm1878 = vweird.f32 %v1841
        %vm1879 = vweird.f32 %v1873
        %vm1880 = vmor %vm1878, %vm1879
        %v1881 = vsel %vm1880, %v1873, %v1877
        %v1882 = vand.u32 2147483647, %v1841
        %vm1883 = vcmp.eq.f32.partialorder %v1882, 8.507059e+37
        %v1884 = vand.u32 %v1841, 2147483648
        %v1885 = vor.u32 1.1754944e-38, %v1884
        %v1886 = vsel %vm1883, %v1885, %v1881
        %v1887 = vmul.f32 1.0, %v1886
        %v1888 = vrcp.pop %v1842
        %v1889 = vmul.f32 %v1842, %v1888
        %v1890 = vsub.f32 1.0, %v1889
        %v1891 = vmul.f32 %v1888, %v1890
        %v1892 = vadd.f32 %v1888, %v1891
        %vm1893 = vweird.f32 %v1842
        %vm1894 = vweird.f32 %v1888
        %vm1895 = vmor %vm1893, %vm1894
        %v1896 = vsel %vm1895, %v1888, %v1892
        %v1897 = vand.u32 2147483647, %v1842
        %vm1898 = vcmp.eq.f32.partialorder %v1897, 8.507059e+37
        %v1899 = vand.u32 %v1842, 2147483648
        %v1900 = vor.u32 1.1754944e-38, %v1899
        %v1901 = vsel %vm1898, %v1900, %v1896
        %v1902 = vmul.f32 1.0, %v1901
        %v1903 = vmul.f32 %v1887, 2.0
        %v1904 = vsub.f32 %v1903, 1.0
        %v1905 = vmul.f32 %v1872, %v1740
        %v1906 = vmul.f32 %v1857, %v1904
        %v1907 = vadd.f32 %v1905, %v1906
        %v1908 = vtanh.pop %v1907
        %v1909 = vmul.f32 %v1902, %v1908
        %v1910 = vld [vmem:[%s605] sm:$0xff]
        %v1911 = vadd.f32 %v1909, %v1910
        %v1912 = vld [vmem:[%s546] sm:$0xff]
        %s1913 = scalar_lea.vmem %s546, 8 [#allocation5]
        %v1914 = vld [vmem:[%s1913] sm:$0xff]
        %s1915 = scalar_lea.vmem %s546, 16 [#allocation5]
        %v1916 = vld [vmem:[%s1915] sm:$0xff]
        %s1917 = scalar_lea.vmem %s546, 24 [#allocation5]
        %v1918 = vld [vmem:[%s1917] sm:$0xff]
        %s1919 = scalar_lea.vmem %s546, 32 [#allocation5]
        %v1920 = vld [vmem:[%s1919] sm:$0xff]
        %s1921 = scalar_lea.vmem %s546, 40 [#allocation5]
        %v1922 = vld [vmem:[%s1921] sm:$0xff]
        %s1923 = scalar_lea.vmem %s546, 48 [#allocation5]
        %v1924 = vld [vmem:[%s1923] sm:$0xff]
        %v1925 = vld [vmem:[%s7] sm:$0xff]
        %v1926 = vld [vmem:[%s7 + $0x8] sm:$0xff]
        %v1927 = vld [vmem:[%s8] sm:$0xf]
        %v1929 = vperm.slane %v1927, 0
        %v1930 = vperm.slane %v1927, 1
        %v1931 = vperm.slane %v1927, 2
        %v1932 = vperm.slane %v1927, 3
        %1939 = vst [vmem:[#allocation1] ss:$2 sm:$0xff] %v1925
        %s1940 = scalar_lea.vmem [#allocation1], 16
        %1941 = vst [vmem:[%s1940] ss:$2 sm:$0xff] %v1926
        %v1942 = vld.sshfl [vmem:[#allocation1] sm:$0xff pattern:$0x75316420]
        %v1943 = vld.sshfl [vmem:[#allocation1 + $0x8] sm:$0xff pattern:$0x75316420]
        %v1944 = vld.sshfl [vmem:[#allocation1 + $0x10] sm:$0xff pattern:$0x75316420]
        %v1945 = vld.sshfl [vmem:[#allocation1 + $0x18] sm:$0xff pattern:$0x75316420]
        %vm1946 = vcmask 31744
        %v1948 = vsel %vm1946, %v1912, 0
        %v1951 = vsel %vm1946, %v1914, 0
        %v1954 = vsel %vm1946, %v1916, 0
        %v1957 = vsel %vm1946, %v1918, 0
        %v1960 = vsel %vm1946, %v1920, 0
        %v1963 = vsel %vm1946, %v1922, 0
        %v1966 = vsel %vm1946, %v1924, 0
        %vm1968 = vcmask 1043456
        %v1969 = vsel %vm1968, %v1942, 0
        %v1971 = vsel %vm1968, %v1943, 0
        %v1973 = vsel %vm1968, %v1944, 0
        %v1975 = vsel %vm1968, %v1945, 0
        %1977 = vmatpush.msra.mxu0 0.0
        %1978 = vmatpush.msra.mxu0 0.0
        %1979 = vmatpush.msra.mxu0 0.0
        %1980 = vmatpush.msra.mxu0 0.0
        %1981 = vmatpush.msra.mxu0 0.0
        %1982 = vmatpush.msra.mxu0 0.0
        %1983 = vmatpush.msra.mxu0 0.0
        %1984 = vmatpush.msra.mxu0 0.0
        %1985 = vmatpush.msra.mxu0 0.0
        %1986 = vmatpush.msra.mxu0 0.0
        %1987 = vmatpush.msra.mxu0 0.0
        %1988 = vmatpush.msra.mxu0 0.0
        %1989 = vmatpush.msra.mxu0 0.0
        %1990 = vmatpush.msra.mxu0 0.0
        %1991 = vmatpush.msra.mxu0 0.0
        %1992 = vmatpush.msra.mxu0 %v1969
        %1993 = vmatmul.f32.gmra.mxu0 %v1948
        %v1994 = vpop.f32.mrf.mxu0
        %v1995 = vadd.f32 %v1929, %v1994
        %1996 = vmatmul.f32.gmra.mxu0 %v1951
        %v1997 = vpop.f32.mrf.mxu0
        %v1998 = vadd.f32 %v1929, %v1997
        %1999 = vmatmul.f32.gmra.mxu0 %v1954
        %v2000 = vpop.f32.mrf.mxu0
        %v2001 = vadd.f32 %v1929, %v2000
        %2002 = vmatmul.f32.gmra.mxu0 %v1957
        %v2003 = vpop.f32.mrf.mxu0
        %v2004 = vadd.f32 %v1929, %v2003
        %2005 = vmatmul.f32.gmra.mxu0 %v1960
        %v2006 = vpop.f32.mrf.mxu0
        %v2007 = vadd.f32 %v1929, %v2006
        %2008 = vmatmul.f32.gmra.mxu0 %v1963
        %v2009 = vpop.f32.mrf.mxu0
        %v2010 = vadd.f32 %v1929, %v2009
        %2011 = vmatmul.f32.gmra.mxu0 %v1966
        %v2012 = vpop.f32.mrf.mxu0
        %v2013 = vadd.f32 %v1929, %v2012
        %2014 = vdwg.mxu0
        %2015 = vmatpush.msra.mxu0 0.0
        %2016 = vmatpush.msra.mxu0 0.0
        %2017 = vmatpush.msra.mxu0 0.0
        %2018 = vmatpush.msra.mxu0 0.0
        %2019 = vmatpush.msra.mxu0 0.0
        %2020 = vmatpush.msra.mxu0 0.0
        %2021 = vmatpush.msra.mxu0 0.0
        %2022 = vmatpush.msra.mxu0 0.0
        %2023 = vmatpush.msra.mxu0 0.0
        %2024 = vmatpush.msra.mxu0 0.0
        %2025 = vmatpush.msra.mxu0 0.0
        %2026 = vmatpush.msra.mxu0 0.0
        %2027 = vmatpush.msra.mxu0 0.0
        %2028 = vmatpush.msra.mxu0 0.0
        %2029 = vmatpush.msra.mxu0 0.0
        %2030 = vmatpush.msra.mxu0 %v1971
        %2031 = vmatmul.f32.gmra.mxu0 %v1948
        %v2032 = vpop.f32.mrf.mxu0
        %v2033 = vadd.f32 %v1930, %v2032
        %2034 = vmatmul.f32.gmra.mxu0 %v1951
        %v2035 = vpop.f32.mrf.mxu0
        %v2036 = vadd.f32 %v1930, %v2035
        %2037 = vmatmul.f32.gmra.mxu0 %v1954
        %v2038 = vpop.f32.mrf.mxu0
        %v2039 = vadd.f32 %v1930, %v2038
        %2040 = vmatmul.f32.gmra.mxu0 %v1957
        %v2041 = vpop.f32.mrf.mxu0
        %v2042 = vadd.f32 %v1930, %v2041
        %2043 = vmatmul.f32.gmra.mxu0 %v1960
        %v2044 = vpop.f32.mrf.mxu0
        %v2045 = vadd.f32 %v1930, %v2044
        %2046 = vmatmul.f32.gmra.mxu0 %v1963
        %v2047 = vpop.f32.mrf.mxu0
        %v2048 = vadd.f32 %v1930, %v2047
        %2049 = vmatmul.f32.gmra.mxu0 %v1966
        %v2050 = vpop.f32.mrf.mxu0
        %v2051 = vadd.f32 %v1930, %v2050
        %2052 = vdwg.mxu0
        %2053 = vmatpush.msra.mxu0 0.0
        %2054 = vmatpush.msra.mxu0 0.0
        %2055 = vmatpush.msra.mxu0 0.0
        %2056 = vmatpush.msra.mxu0 0.0
        %2057 = vmatpush.msra.mxu0 0.0
        %2058 = vmatpush.msra.mxu0 0.0
        %2059 = vmatpush.msra.mxu0 0.0
        %2060 = vmatpush.msra.mxu0 0.0
        %2061 = vmatpush.msra.mxu0 0.0
        %2062 = vmatpush.msra.mxu0 0.0
        %2063 = vmatpush.msra.mxu0 0.0
        %2064 = vmatpush.msra.mxu0 0.0
        %2065 = vmatpush.msra.mxu0 0.0
        %2066 = vmatpush.msra.mxu0 0.0
        %2067 = vmatpush.msra.mxu0 0.0
        %2068 = vmatpush.msra.mxu0 %v1973
        %2069 = vmatmul.f32.gmra.mxu0 %v1948
        %v2070 = vpop.f32.mrf.mxu0
        %v2071 = vadd.f32 %v1931, %v2070
        %2072 = vmatmul.f32.gmra.mxu0 %v1951
        %v2073 = vpop.f32.mrf.mxu0
        %v2074 = vadd.f32 %v1931, %v2073
        %2075 = vmatmul.f32.gmra.mxu0 %v1954
        %v2076 = vpop.f32.mrf.mxu0
        %v2077 = vadd.f32 %v1931, %v2076
        %2078 = vmatmul.f32.gmra.mxu0 %v1957
        %v2079 = vpop.f32.mrf.mxu0
        %v2080 = vadd.f32 %v1931, %v2079
        %2081 = vmatmul.f32.gmra.mxu0 %v1960
        %v2082 = vpop.f32.mrf.mxu0
        %v2083 = vadd.f32 %v1931, %v2082
        %2084 = vmatmul.f32.gmra.mxu0 %v1963
        %v2085 = vpop.f32.mrf.mxu0
        %v2086 = vadd.f32 %v1931, %v2085
        %2087 = vmatmul.f32.gmra.mxu0 %v1966
        %v2088 = vpop.f32.mrf.mxu0
        %v2089 = vadd.f32 %v1931, %v2088
        %2090 = vdwg.mxu0
        %2091 = vmatpush.msra.mxu0 0.0
        %2092 = vmatpush.msra.mxu0 0.0
        %2093 = vmatpush.msra.mxu0 0.0
        %2094 = vmatpush.msra.mxu0 0.0
        %2095 = vmatpush.msra.mxu0 0.0
        %2096 = vmatpush.msra.mxu0 0.0
        %2097 = vmatpush.msra.mxu0 0.0
        %2098 = vmatpush.msra.mxu0 0.0
        %2099 = vmatpush.msra.mxu0 0.0
        %2100 = vmatpush.msra.mxu0 0.0
        %2101 = vmatpush.msra.mxu0 0.0
        %2102 = vmatpush.msra.mxu0 0.0
        %2103 = vmatpush.msra.mxu0 0.0
        %2104 = vmatpush.msra.mxu0 0.0
        %2105 = vmatpush.msra.mxu0 0.0
        %2106 = vmatpush.msra.mxu0 %v1975
        %2107 = vmatmul.f32.gmra.mxu0 %v1948
        %v2108 = vpop.f32.mrf.mxu0
        %v2109 = vadd.f32 %v1932, %v2108
        %2110 = vmatmul.f32.gmra.mxu0 %v1951
        %v2111 = vpop.f32.mrf.mxu0
        %v2112 = vadd.f32 %v1932, %v2111
        %2113 = vmatmul.f32.gmra.mxu0 %v1954
        %v2114 = vpop.f32.mrf.mxu0
        %v2115 = vadd.f32 %v1932, %v2114
        %2116 = vmatmul.f32.gmra.mxu0 %v1957
        %v2117 = vpop.f32.mrf.mxu0
        %v2118 = vadd.f32 %v1932, %v2117
        %2119 = vmatmul.f32.gmra.mxu0 %v1960
        %v2120 = vpop.f32.mrf.mxu0
        %v2121 = vadd.f32 %v1932, %v2120
        %2122 = vmatmul.f32.gmra.mxu0 %v1963
        %v2123 = vpop.f32.mrf.mxu0
        %v2124 = vadd.f32 %v1932, %v2123
        %2125 = vmatmul.f32.gmra.mxu0 %v1966
        %v2126 = vpop.f32.mrf.mxu0
        %v2127 = vadd.f32 %v1932, %v2126
        %2128 = vdwg.mxu0
        %2129 = vmatpush.msra.mxu0 %v790
        %2130 = vmatpush.msra.mxu0 %v782
        %2131 = vmatpush.msra.mxu0 %v774
        %2132 = vmatpush.msra.mxu0 %v766
        %2133 = vmatpush.msra.mxu0 %v758
        %2134 = vmatpush.msra.mxu0 %v750
        %2135 = vmatpush.msra.mxu0 %v742
        %2136 = vmatpush.msra.mxu0 %v734
        %2137 = vmatpush.msra.mxu0 %v726
        %2138 = vmatpush.msra.mxu0 %v718
        %2139 = vmatpush.msra.mxu0 %v710
        %2140 = vmatpush.msra.mxu0 %v702
        %2141 = vmatpush.msra.mxu0 %v694
        %2142 = vmatpush.msra.mxu0 %v686
        %2143 = vmatpush.msra.mxu0 %v678
        %2144 = vmatpush.msra.mxu0 %v670
        %2145 = vmatmul.f32.gmra.mxu0 %v1911
        %v2146 = vpop.f32.mrf.mxu0
        %v2147 = vadd.f32 0.0, %v2146
        %2148 = vdwg.mxu0
        %2149 = vmatpush.msra.mxu0 %v791
        %2150 = vmatpush.msra.mxu0 %v783
        %2151 = vmatpush.msra.mxu0 %v775
        %2152 = vmatpush.msra.mxu0 %v767
        %2153 = vmatpush.msra.mxu0 %v759
        %2154 = vmatpush.msra.mxu0 %v751
        %2155 = vmatpush.msra.mxu0 %v743
        %2156 = vmatpush.msra.mxu0 %v735
        %2157 = vmatpush.msra.mxu0 %v727
        %2158 = vmatpush.msra.mxu0 %v719
        %2159 = vmatpush.msra.mxu0 %v711
        %2160 = vmatpush.msra.mxu0 %v703
        %2161 = vmatpush.msra.mxu0 %v695
        %2162 = vmatpush.msra.mxu0 %v687
        %2163 = vmatpush.msra.mxu0 %v679
        %2164 = vmatpush.msra.mxu0 %v671
        %2165 = vmatmul.f32.gmra.mxu0 %v1911
        %v2166 = vpop.f32.mrf.mxu0
        %v2167 = vadd.f32 0.0, %v2166
        %2168 = vdwg.mxu0
        %2169 = vmatpush.msra.mxu0 %v792
        %2170 = vmatpush.msra.mxu0 %v784
        %2171 = vmatpush.msra.mxu0 %v776
        %2172 = vmatpush.msra.mxu0 %v768
        %2173 = vmatpush.msra.mxu0 %v760
        %2174 = vmatpush.msra.mxu0 %v752
        %2175 = vmatpush.msra.mxu0 %v744
        %2176 = vmatpush.msra.mxu0 %v736
        %2177 = vmatpush.msra.mxu0 %v728
        %2178 = vmatpush.msra.mxu0 %v720
        %2179 = vmatpush.msra.mxu0 %v712
        %2180 = vmatpush.msra.mxu0 %v704
        %2181 = vmatpush.msra.mxu0 %v696
        %2182 = vmatpush.msra.mxu0 %v688
        %2183 = vmatpush.msra.mxu0 %v680
        %2184 = vmatpush.msra.mxu0 %v672
        %2185 = vmatmul.f32.gmra.mxu0 %v1911
        %v2186 = vpop.f32.mrf.mxu0
        %v2187 = vadd.f32 0.0, %v2186
        %2188 = vdwg.mxu0
        %2189 = vmatpush.msra.mxu0 %v793
        %2190 = vmatpush.msra.mxu0 %v785
        %2191 = vmatpush.msra.mxu0 %v777
        %2192 = vmatpush.msra.mxu0 %v769
        %2193 = vmatpush.msra.mxu0 %v761
        %2194 = vmatpush.msra.mxu0 %v753
        %2195 = vmatpush.msra.mxu0 %v745
        %2196 = vmatpush.msra.mxu0 %v737
        %2197 = vmatpush.msra.mxu0 %v729
        %2198 = vmatpush.msra.mxu0 %v721
        %2199 = vmatpush.msra.mxu0 %v713
        %2200 = vmatpush.msra.mxu0 %v705
        %2201 = vmatpush.msra.mxu0 %v697
        %2202 = vmatpush.msra.mxu0 %v689
        %2203 = vmatpush.msra.mxu0 %v681
        %2204 = vmatpush.msra.mxu0 %v673
        %2205 = vmatmul.f32.gmra.mxu0 %v1911
        %v2206 = vpop.f32.mrf.mxu0
        %v2207 = vadd.f32 0.0, %v2206
        %2208 = vdwg.mxu0
        %v2209 = vadd.f32 %v2147, %v1995
        %v2210 = vadd.f32 %v2167, %v2033
        %v2211 = vadd.f32 %v2187, %v2071
        %v2212 = vadd.f32 %v2207, %v2109
        %v2213 = vxor.u32 %v2209, 2147483648
        %v2214 = vxor.u32 %v2210, 2147483648
        %v2215 = vxor.u32 %v2211, 2147483648
        %v2216 = vxor.u32 %v2212, 2147483648
        %v2217 = vmul.f32 %v2213, 1.442695
        %v2218 = vpow.pop %v2217
        %v2219 = vmul.f32 %v2214, 1.442695
        %v2220 = vpow.pop %v2219
        %v2221 = vmul.f32 %v2215, 1.442695
        %v2222 = vpow.pop %v2221
        %v2223 = vmul.f32 %v2216, 1.442695
        %v2224 = vpow.pop %v2223
        %v2225 = vadd.f32 %v2218, 1.0
        %v2226 = vadd.f32 %v2220, 1.0
        %v2227 = vadd.f32 %v2222, 1.0
        %v2228 = vadd.f32 %v2224, 1.0
        %v2229 = vrcp.pop %v2225
        %v2230 = vmul.f32 %v2225, %v2229
        %v2231 = vsub.f32 1.0, %v2230
        %v2232 = vmul.f32 %v2229, %v2231
        %v2233 = vadd.f32 %v2229, %v2232
        %vm2234 = vweird.f32 %v2225
        %vm2235 = vweird.f32 %v2229
        %vm2236 = vmor %vm2234, %vm2235
        %v2237 = vsel %vm2236, %v2229, %v2233
        %v2238 = vand.u32 2147483647, %v2225
        %vm2239 = vcmp.eq.f32.partialorder %v2238, 8.507059e+37
        %v2240 = vand.u32 %v2225, 2147483648
        %v2241 = vor.u32 1.1754944e-38, %v2240
        %v2242 = vsel %vm2239, %v2241, %v2237
        %v2243 = vmul.f32 1.0, %v2242
        %v2244 = vrcp.pop %v2226
        %v2245 = vmul.f32 %v2226, %v2244
        %v2246 = vsub.f32 1.0, %v2245
        %v2247 = vmul.f32 %v2244, %v2246
        %v2248 = vadd.f32 %v2244, %v2247
        %vm2249 = vweird.f32 %v2226
        %vm2250 = vweird.f32 %v2244
        %vm2251 = vmor %vm2249, %vm2250
        %v2252 = vsel %vm2251, %v2244, %v2248
        %v2253 = vand.u32 2147483647, %v2226
        %vm2254 = vcmp.eq.f32.partialorder %v2253, 8.507059e+37
        %v2255 = vand.u32 %v2226, 2147483648
        %v2256 = vor.u32 1.1754944e-38, %v2255
        %v2257 = vsel %vm2254, %v2256, %v2252
        %v2258 = vmul.f32 1.0, %v2257
        %v2259 = vrcp.pop %v2227
        %v2260 = vmul.f32 %v2227, %v2259
        %v2261 = vsub.f32 1.0, %v2260
        %v2262 = vmul.f32 %v2259, %v2261
        %v2263 = vadd.f32 %v2259, %v2262
        %vm2264 = vweird.f32 %v2227
        %vm2265 = vweird.f32 %v2259
        %vm2266 = vmor %vm2264, %vm2265
        %v2267 = vsel %vm2266, %v2259, %v2263
        %v2268 = vand.u32 2147483647, %v2227
        %vm2269 = vcmp.eq.f32.partialorder %v2268, 8.507059e+37
        %v2270 = vand.u32 %v2227, 2147483648
        %v2271 = vor.u32 1.1754944e-38, %v2270
        %v2272 = vsel %vm2269, %v2271, %v2267
        %v2273 = vmul.f32 1.0, %v2272
        %v2274 = vrcp.pop %v2228
        %v2275 = vmul.f32 %v2228, %v2274
        %v2276 = vsub.f32 1.0, %v2275
        %v2277 = vmul.f32 %v2274, %v2276
        %v2278 = vadd.f32 %v2274, %v2277
        %vm2279 = vweird.f32 %v2228
        %vm2280 = vweird.f32 %v2274
        %vm2281 = vmor %vm2279, %vm2280
        %v2282 = vsel %vm2281, %v2274, %v2278
        %v2283 = vand.u32 2147483647, %v2228
        %vm2284 = vcmp.eq.f32.partialorder %v2283, 8.507059e+37
        %v2285 = vand.u32 %v2228, 2147483648
        %v2286 = vor.u32 1.1754944e-38, %v2285
        %v2287 = vsel %vm2284, %v2286, %v2282
        %v2288 = vmul.f32 1.0, %v2287
        %v2289 = vmul.f32 %v2273, 2.0
        %v2290 = vsub.f32 %v2289, 1.0
        %v2291 = vmul.f32 %v2258, %v1911
        %v2292 = vmul.f32 %v2243, %v2290
        %v2293 = vadd.f32 %v2291, %v2292
        %v2294 = vtanh.pop %v2293
        %v2295 = vmul.f32 %v2288, %v2294
        %2296 = vmatpush.msra.mxu0 %v790
        %2297 = vmatpush.msra.mxu0 %v782
        %2298 = vmatpush.msra.mxu0 %v774
        %2299 = vmatpush.msra.mxu0 %v766
        %2300 = vmatpush.msra.mxu0 %v758
        %2301 = vmatpush.msra.mxu0 %v750
        %2302 = vmatpush.msra.mxu0 %v742
        %2303 = vmatpush.msra.mxu0 %v734
        %2304 = vmatpush.msra.mxu0 %v726
        %2305 = vmatpush.msra.mxu0 %v718
        %2306 = vmatpush.msra.mxu0 %v710
        %2307 = vmatpush.msra.mxu0 %v702
        %2308 = vmatpush.msra.mxu0 %v694
        %2309 = vmatpush.msra.mxu0 %v686
        %2310 = vmatpush.msra.mxu0 %v678
        %2311 = vmatpush.msra.mxu0 %v670
        %2312 = vmatmul.f32.gmra.mxu0 %v2295
        %v2313 = vpop.f32.mrf.mxu0
        %v2314 = vadd.f32 0.0, %v2313
        %2315 = vdwg.mxu0
        %2316 = vmatpush.msra.mxu0 %v791
        %2317 = vmatpush.msra.mxu0 %v783
        %2318 = vmatpush.msra.mxu0 %v775
        %2319 = vmatpush.msra.mxu0 %v767
        %2320 = vmatpush.msra.mxu0 %v759
        %2321 = vmatpush.msra.mxu0 %v751
        %2322 = vmatpush.msra.mxu0 %v743
        %2323 = vmatpush.msra.mxu0 %v735
        %2324 = vmatpush.msra.mxu0 %v727
        %2325 = vmatpush.msra.mxu0 %v719
        %2326 = vmatpush.msra.mxu0 %v711
        %2327 = vmatpush.msra.mxu0 %v703
        %2328 = vmatpush.msra.mxu0 %v695
        %2329 = vmatpush.msra.mxu0 %v687
        %2330 = vmatpush.msra.mxu0 %v679
        %2331 = vmatpush.msra.mxu0 %v671
        %2332 = vmatmul.f32.gmra.mxu0 %v2295
        %v2333 = vpop.f32.mrf.mxu0
        %v2334 = vadd.f32 0.0, %v2333
        %2335 = vdwg.mxu0
        %2336 = vmatpush.msra.mxu0 %v792
        %2337 = vmatpush.msra.mxu0 %v784
        %2338 = vmatpush.msra.mxu0 %v776
        %2339 = vmatpush.msra.mxu0 %v768
        %2340 = vmatpush.msra.mxu0 %v760
        %2341 = vmatpush.msra.mxu0 %v752
        %2342 = vmatpush.msra.mxu0 %v744
        %2343 = vmatpush.msra.mxu0 %v736
        %2344 = vmatpush.msra.mxu0 %v728
        %2345 = vmatpush.msra.mxu0 %v720
        %2346 = vmatpush.msra.mxu0 %v712
        %2347 = vmatpush.msra.mxu0 %v704
        %2348 = vmatpush.msra.mxu0 %v696
        %2349 = vmatpush.msra.mxu0 %v688
        %2350 = vmatpush.msra.mxu0 %v680
        %2351 = vmatpush.msra.mxu0 %v672
        %2352 = vmatmul.f32.gmra.mxu0 %v2295
        %v2353 = vpop.f32.mrf.mxu0
        %v2354 = vadd.f32 0.0, %v2353
        %2355 = vdwg.mxu0
        %2356 = vmatpush.msra.mxu0 %v793
        %2357 = vmatpush.msra.mxu0 %v785
        %2358 = vmatpush.msra.mxu0 %v777
        %2359 = vmatpush.msra.mxu0 %v769
        %2360 = vmatpush.msra.mxu0 %v761
        %2361 = vmatpush.msra.mxu0 %v753
        %2362 = vmatpush.msra.mxu0 %v745
        %2363 = vmatpush.msra.mxu0 %v737
        %2364 = vmatpush.msra.mxu0 %v729
        %2365 = vmatpush.msra.mxu0 %v721
        %2366 = vmatpush.msra.mxu0 %v713
        %2367 = vmatpush.msra.mxu0 %v705
        %2368 = vmatpush.msra.mxu0 %v697
        %2369 = vmatpush.msra.mxu0 %v689
        %2370 = vmatpush.msra.mxu0 %v681
        %2371 = vmatpush.msra.mxu0 %v673
        %2372 = vmatmul.f32.gmra.mxu0 %v2295
        %v2373 = vpop.f32.mrf.mxu0
        %v2374 = vadd.f32 0.0, %v2373
        %2375 = vdwg.mxu0
        %2376 = vmatpush.msra.mxu0 %v794
        %2377 = vmatpush.msra.mxu0 %v786
        %2378 = vmatpush.msra.mxu0 %v778
        %2379 = vmatpush.msra.mxu0 %v770
        %2380 = vmatpush.msra.mxu0 %v762
        %2381 = vmatpush.msra.mxu0 %v754
        %2382 = vmatpush.msra.mxu0 %v746
        %2383 = vmatpush.msra.mxu0 %v738
        %2384 = vmatpush.msra.mxu0 %v730
        %2385 = vmatpush.msra.mxu0 %v722
        %2386 = vmatpush.msra.mxu0 %v714
        %2387 = vmatpush.msra.mxu0 %v706
        %2388 = vmatpush.msra.mxu0 %v698
        %2389 = vmatpush.msra.mxu0 %v690
        %2390 = vmatpush.msra.mxu0 %v682
        %2391 = vmatpush.msra.mxu0 %v674
        %2392 = vmatmul.f32.gmra.mxu0 %v2295
        %v2393 = vpop.f32.mrf.mxu0
        %v2394 = vadd.f32 0.0, %v2393
        %2395 = vdwg.mxu0
        %2396 = vmatpush.msra.mxu0 %v795
        %2397 = vmatpush.msra.mxu0 %v787
        %2398 = vmatpush.msra.mxu0 %v779
        %2399 = vmatpush.msra.mxu0 %v771
        %2400 = vmatpush.msra.mxu0 %v763
        %2401 = vmatpush.msra.mxu0 %v755
        %2402 = vmatpush.msra.mxu0 %v747
        %2403 = vmatpush.msra.mxu0 %v739
        %2404 = vmatpush.msra.mxu0 %v731
        %2405 = vmatpush.msra.mxu0 %v723
        %2406 = vmatpush.msra.mxu0 %v715
        %2407 = vmatpush.msra.mxu0 %v707
        %2408 = vmatpush.msra.mxu0 %v699
        %2409 = vmatpush.msra.mxu0 %v691
        %2410 = vmatpush.msra.mxu0 %v683
        %2411 = vmatpush.msra.mxu0 %v675
        %2412 = vmatmul.f32.gmra.mxu0 %v2295
        %v2413 = vpop.f32.mrf.mxu0
        %v2414 = vadd.f32 0.0, %v2413
        %2415 = vdwg.mxu0
        %2416 = vmatpush.msra.mxu0 %v796
        %2417 = vmatpush.msra.mxu0 %v788
        %2418 = vmatpush.msra.mxu0 %v780
        %2419 = vmatpush.msra.mxu0 %v772
        %2420 = vmatpush.msra.mxu0 %v764
        %2421 = vmatpush.msra.mxu0 %v756
        %2422 = vmatpush.msra.mxu0 %v748
        %2423 = vmatpush.msra.mxu0 %v740
        %2424 = vmatpush.msra.mxu0 %v732
        %2425 = vmatpush.msra.mxu0 %v724
        %2426 = vmatpush.msra.mxu0 %v716
        %2427 = vmatpush.msra.mxu0 %v708
        %2428 = vmatpush.msra.mxu0 %v700
        %2429 = vmatpush.msra.mxu0 %v692
        %2430 = vmatpush.msra.mxu0 %v684
        %2431 = vmatpush.msra.mxu0 %v676
        %2432 = vmatmul.f32.gmra.mxu0 %v2295
        %v2433 = vpop.f32.mrf.mxu0
        %v2434 = vadd.f32 0.0, %v2433
        %2435 = vdwg.mxu0
        %2436 = vmatpush.msra.mxu0 %v797
        %2437 = vmatpush.msra.mxu0 %v789
        %2438 = vmatpush.msra.mxu0 %v781
        %2439 = vmatpush.msra.mxu0 %v773
        %2440 = vmatpush.msra.mxu0 %v765
        %2441 = vmatpush.msra.mxu0 %v757
        %2442 = vmatpush.msra.mxu0 %v749
        %2443 = vmatpush.msra.mxu0 %v741
        %2444 = vmatpush.msra.mxu0 %v733
        %2445 = vmatpush.msra.mxu0 %v725
        %2446 = vmatpush.msra.mxu0 %v717
        %2447 = vmatpush.msra.mxu0 %v709
        %2448 = vmatpush.msra.mxu0 %v701
        %2449 = vmatpush.msra.mxu0 %v693
        %2450 = vmatpush.msra.mxu0 %v685
        %2451 = vmatpush.msra.mxu0 %v677
        %2452 = vmatmul.f32.gmra.mxu0 %v2295
        %v2453 = vpop.f32.mrf.mxu0
        %v2454 = vadd.f32 0.0, %v2453
        %2455 = vdwg.mxu0
        %v2456 = vadd.f32 %v2394, %v800
        %v2457 = vadd.f32 %v2414, %v801
        %v2458 = vadd.f32 %v2434, %v802
        %v2459 = vadd.f32 %v2454, %v803
        %s2460 = sld [smem:[#allocation3]]
        %p2461 = scmp.eq.s32.totalorder %s2460, 1
        %s2462 = scalar_select %p2461, 1, 0
        %v2463 = vstv %s2462
        %vm2464 = vcmp.eq.s32.totalorder %v2463, 1
        %v2465 = vsel %vm2464, %v1998, %v2456
        %v2466 = vsel %vm2464, %v2036, %v2457
        %v2467 = vsel %vm2464, %v2074, %v2458
        %v2468 = vsel %vm2464, %v2112, %v2459
        %v2469 = vadd.f32 %v2314, %v2465
        %v2470 = vadd.f32 %v2334, %v2466
        %v2471 = vadd.f32 %v2354, %v2467
        %v2472 = vadd.f32 %v2374, %v2468
        %v2473 = vxor.u32 %v2469, 2147483648
        %v2474 = vxor.u32 %v2470, 2147483648
        %v2475 = vxor.u32 %v2471, 2147483648
        %v2476 = vxor.u32 %v2472, 2147483648
        %v2477 = vmul.f32 %v2473, 1.442695
        %v2478 = vpow.pop %v2477
        %v2479 = vmul.f32 %v2474, 1.442695
        %v2480 = vpow.pop %v2479
        %v2481 = vmul.f32 %v2475, 1.442695
        %v2482 = vpow.pop %v2481
        %v2483 = vmul.f32 %v2476, 1.442695
        %v2484 = vpow.pop %v2483
        %v2485 = vadd.f32 %v2478, 1.0
        %v2486 = vadd.f32 %v2480, 1.0
        %v2487 = vadd.f32 %v2482, 1.0
        %v2488 = vadd.f32 %v2484, 1.0
        %v2489 = vrcp.pop %v2485
        %v2490 = vmul.f32 %v2485, %v2489
        %v2491 = vsub.f32 1.0, %v2490
        %v2492 = vmul.f32 %v2489, %v2491
        %v2493 = vadd.f32 %v2489, %v2492
        %vm2494 = vweird.f32 %v2485
        %vm2495 = vweird.f32 %v2489
        %vm2496 = vmor %vm2494, %vm2495
        %v2497 = vsel %vm2496, %v2489, %v2493
        %v2498 = vand.u32 2147483647, %v2485
        %vm2499 = vcmp.eq.f32.partialorder %v2498, 8.507059e+37
        %v2500 = vand.u32 %v2485, 2147483648
        %v2501 = vor.u32 1.1754944e-38, %v2500
        %v2502 = vsel %vm2499, %v2501, %v2497
        %v2503 = vmul.f32 1.0, %v2502
        %v2504 = vrcp.pop %v2486
        %v2505 = vmul.f32 %v2486, %v2504
        %v2506 = vsub.f32 1.0, %v2505
        %v2507 = vmul.f32 %v2504, %v2506
        %v2508 = vadd.f32 %v2504, %v2507
        %vm2509 = vweird.f32 %v2486
        %vm2510 = vweird.f32 %v2504
        %vm2511 = vmor %vm2509, %vm2510
        %v2512 = vsel %vm2511, %v2504, %v2508
        %v2513 = vand.u32 2147483647, %v2486
        %vm2514 = vcmp.eq.f32.partialorder %v2513, 8.507059e+37
        %v2515 = vand.u32 %v2486, 2147483648
        %v2516 = vor.u32 1.1754944e-38, %v2515
        %v2517 = vsel %vm2514, %v2516, %v2512
        %v2518 = vmul.f32 1.0, %v2517
        %v2519 = vrcp.pop %v2487
        %v2520 = vmul.f32 %v2487, %v2519
        %v2521 = vsub.f32 1.0, %v2520
        %v2522 = vmul.f32 %v2519, %v2521
        %v2523 = vadd.f32 %v2519, %v2522
        %vm2524 = vweird.f32 %v2487
        %vm2525 = vweird.f32 %v2519
        %vm2526 = vmor %vm2524, %vm2525
        %v2527 = vsel %vm2526, %v2519, %v2523
        %v2528 = vand.u32 2147483647, %v2487
        %vm2529 = vcmp.eq.f32.partialorder %v2528, 8.507059e+37
        %v2530 = vand.u32 %v2487, 2147483648
        %v2531 = vor.u32 1.1754944e-38, %v2530
        %v2532 = vsel %vm2529, %v2531, %v2527
        %v2533 = vmul.f32 1.0, %v2532
        %v2534 = vrcp.pop %v2488
        %v2535 = vmul.f32 %v2488, %v2534
        %v2536 = vsub.f32 1.0, %v2535
        %v2537 = vmul.f32 %v2534, %v2536
        %v2538 = vadd.f32 %v2534, %v2537
        %vm2539 = vweird.f32 %v2488
        %vm2540 = vweird.f32 %v2534
        %vm2541 = vmor %vm2539, %vm2540
        %v2542 = vsel %vm2541, %v2534, %v2538
        %v2543 = vand.u32 2147483647, %v2488
        %vm2544 = vcmp.eq.f32.partialorder %v2543, 8.507059e+37
        %v2545 = vand.u32 %v2488, 2147483648
        %v2546 = vor.u32 1.1754944e-38, %v2545
        %v2547 = vsel %vm2544, %v2546, %v2542
        %v2548 = vmul.f32 1.0, %v2547
        %v2549 = vmul.f32 %v2533, 2.0
        %v2550 = vsub.f32 %v2549, 1.0
        %v2551 = vmul.f32 %v2518, %v2293
        %v2552 = vmul.f32 %v2503, %v2550
        %v2553 = vadd.f32 %v2551, %v2552
        %v2554 = vtanh.pop %v2553
        %v2555 = vmul.f32 %v2548, %v2554
        %2556 = vmatpush.msra.mxu0 %v790
        %2557 = vmatpush.msra.mxu0 %v782
        %2558 = vmatpush.msra.mxu0 %v774
        %2559 = vmatpush.msra.mxu0 %v766
        %2560 = vmatpush.msra.mxu0 %v758
        %2561 = vmatpush.msra.mxu0 %v750
        %2562 = vmatpush.msra.mxu0 %v742
        %2563 = vmatpush.msra.mxu0 %v734
        %2564 = vmatpush.msra.mxu0 %v726
        %2565 = vmatpush.msra.mxu0 %v718
        %2566 = vmatpush.msra.mxu0 %v710
        %2567 = vmatpush.msra.mxu0 %v702
        %2568 = vmatpush.msra.mxu0 %v694
        %2569 = vmatpush.msra.mxu0 %v686
        %2570 = vmatpush.msra.mxu0 %v678
        %2571 = vmatpush.msra.mxu0 %v670
        %2572 = vmatmul.f32.gmra.mxu0 %v2555
        %v2573 = vpop.f32.mrf.mxu0
        %v2574 = vadd.f32 0.0, %v2573
        %2575 = vdwg.mxu0
        %2576 = vmatpush.msra.mxu0 %v791
        %2577 = vmatpush.msra.mxu0 %v783
        %2578 = vmatpush.msra.mxu0 %v775
        %2579 = vmatpush.msra.mxu0 %v767
        %2580 = vmatpush.msra.mxu0 %v759
        %2581 = vmatpush.msra.mxu0 %v751
        %2582 = vmatpush.msra.mxu0 %v743
        %2583 = vmatpush.msra.mxu0 %v735
        %2584 = vmatpush.msra.mxu0 %v727
        %2585 = vmatpush.msra.mxu0 %v719
        %2586 = vmatpush.msra.mxu0 %v711
        %2587 = vmatpush.msra.mxu0 %v703
        %2588 = vmatpush.msra.mxu0 %v695
        %2589 = vmatpush.msra.mxu0 %v687
        %2590 = vmatpush.msra.mxu0 %v679
        %2591 = vmatpush.msra.mxu0 %v671
        %2592 = vmatmul.f32.gmra.mxu0 %v2555
        %v2593 = vpop.f32.mrf.mxu0
        %v2594 = vadd.f32 0.0, %v2593
        %2595 = vdwg.mxu0
        %2596 = vmatpush.msra.mxu0 %v792
        %2597 = vmatpush.msra.mxu0 %v784
        %2598 = vmatpush.msra.mxu0 %v776
        %2599 = vmatpush.msra.mxu0 %v768
        %2600 = vmatpush.msra.mxu0 %v760
        %2601 = vmatpush.msra.mxu0 %v752
        %2602 = vmatpush.msra.mxu0 %v744
        %2603 = vmatpush.msra.mxu0 %v736
        %2604 = vmatpush.msra.mxu0 %v728
        %2605 = vmatpush.msra.mxu0 %v720
        %2606 = vmatpush.msra.mxu0 %v712
        %2607 = vmatpush.msra.mxu0 %v704
        %2608 = vmatpush.msra.mxu0 %v696
        %2609 = vmatpush.msra.mxu0 %v688
        %2610 = vmatpush.msra.mxu0 %v680
        %2611 = vmatpush.msra.mxu0 %v672
        %2612 = vmatmul.f32.gmra.mxu0 %v2555
        %v2613 = vpop.f32.mrf.mxu0
        %v2614 = vadd.f32 0.0, %v2613
        %2615 = vdwg.mxu0
        %2616 = vmatpush.msra.mxu0 %v793
        %2617 = vmatpush.msra.mxu0 %v785
        %2618 = vmatpush.msra.mxu0 %v777
        %2619 = vmatpush.msra.mxu0 %v769
        %2620 = vmatpush.msra.mxu0 %v761
        %2621 = vmatpush.msra.mxu0 %v753
        %2622 = vmatpush.msra.mxu0 %v745
        %2623 = vmatpush.msra.mxu0 %v737
        %2624 = vmatpush.msra.mxu0 %v729
        %2625 = vmatpush.msra.mxu0 %v721
        %2626 = vmatpush.msra.mxu0 %v713
        %2627 = vmatpush.msra.mxu0 %v705
        %2628 = vmatpush.msra.mxu0 %v697
        %2629 = vmatpush.msra.mxu0 %v689
        %2630 = vmatpush.msra.mxu0 %v681
        %2631 = vmatpush.msra.mxu0 %v673
        %2632 = vmatmul.f32.gmra.mxu0 %v2555
        %v2633 = vpop.f32.mrf.mxu0
        %v2634 = vadd.f32 0.0, %v2633
        %2635 = vdwg.mxu0
        %2636 = vmatpush.msra.mxu0 %v794
        %2637 = vmatpush.msra.mxu0 %v786
        %2638 = vmatpush.msra.mxu0 %v778
        %2639 = vmatpush.msra.mxu0 %v770
        %2640 = vmatpush.msra.mxu0 %v762
        %2641 = vmatpush.msra.mxu0 %v754
        %2642 = vmatpush.msra.mxu0 %v746
        %2643 = vmatpush.msra.mxu0 %v738
        %2644 = vmatpush.msra.mxu0 %v730
        %2645 = vmatpush.msra.mxu0 %v722
        %2646 = vmatpush.msra.mxu0 %v714
        %2647 = vmatpush.msra.mxu0 %v706
        %2648 = vmatpush.msra.mxu0 %v698
        %2649 = vmatpush.msra.mxu0 %v690
        %2650 = vmatpush.msra.mxu0 %v682
        %2651 = vmatpush.msra.mxu0 %v674
        %2652 = vmatmul.f32.gmra.mxu0 %v2555
        %v2653 = vpop.f32.mrf.mxu0
        %v2654 = vadd.f32 0.0, %v2653
        %2655 = vdwg.mxu0
        %2656 = vmatpush.msra.mxu0 %v795
        %2657 = vmatpush.msra.mxu0 %v787
        %2658 = vmatpush.msra.mxu0 %v779
        %2659 = vmatpush.msra.mxu0 %v771
        %2660 = vmatpush.msra.mxu0 %v763
        %2661 = vmatpush.msra.mxu0 %v755
        %2662 = vmatpush.msra.mxu0 %v747
        %2663 = vmatpush.msra.mxu0 %v739
        %2664 = vmatpush.msra.mxu0 %v731
        %2665 = vmatpush.msra.mxu0 %v723
        %2666 = vmatpush.msra.mxu0 %v715
        %2667 = vmatpush.msra.mxu0 %v707
        %2668 = vmatpush.msra.mxu0 %v699
        %2669 = vmatpush.msra.mxu0 %v691
        %2670 = vmatpush.msra.mxu0 %v683
        %2671 = vmatpush.msra.mxu0 %v675
        %2672 = vmatmul.f32.gmra.mxu0 %v2555
        %v2673 = vpop.f32.mrf.mxu0
        %v2674 = vadd.f32 0.0, %v2673
        %2675 = vdwg.mxu0
        %2676 = vmatpush.msra.mxu0 %v796
        %2677 = vmatpush.msra.mxu0 %v788
        %2678 = vmatpush.msra.mxu0 %v780
        %2679 = vmatpush.msra.mxu0 %v772
        %2680 = vmatpush.msra.mxu0 %v764
        %2681 = vmatpush.msra.mxu0 %v756
        %2682 = vmatpush.msra.mxu0 %v748
        %2683 = vmatpush.msra.mxu0 %v740
        %2684 = vmatpush.msra.mxu0 %v732
        %2685 = vmatpush.msra.mxu0 %v724
        %2686 = vmatpush.msra.mxu0 %v716
        %2687 = vmatpush.msra.mxu0 %v708
        %2688 = vmatpush.msra.mxu0 %v700
        %2689 = vmatpush.msra.mxu0 %v692
        %2690 = vmatpush.msra.mxu0 %v684
        %2691 = vmatpush.msra.mxu0 %v676
        %2692 = vmatmul.f32.gmra.mxu0 %v2555
        %v2693 = vpop.f32.mrf.mxu0
        %v2694 = vadd.f32 0.0, %v2693
        %2695 = vdwg.mxu0
        %2696 = vmatpush.msra.mxu0 %v797
        %2697 = vmatpush.msra.mxu0 %v789
        %2698 = vmatpush.msra.mxu0 %v781
        %2699 = vmatpush.msra.mxu0 %v773
        %2700 = vmatpush.msra.mxu0 %v765
        %2701 = vmatpush.msra.mxu0 %v757
        %2702 = vmatpush.msra.mxu0 %v749
        %2703 = vmatpush.msra.mxu0 %v741
        %2704 = vmatpush.msra.mxu0 %v733
        %2705 = vmatpush.msra.mxu0 %v725
        %2706 = vmatpush.msra.mxu0 %v717
        %2707 = vmatpush.msra.mxu0 %v709
        %2708 = vmatpush.msra.mxu0 %v701
        %2709 = vmatpush.msra.mxu0 %v693
        %2710 = vmatpush.msra.mxu0 %v685
        %2711 = vmatpush.msra.mxu0 %v677
        %2712 = vmatmul.f32.gmra.mxu0 %v2555
        %v2713 = vpop.f32.mrf.mxu0
        %v2714 = vadd.f32 0.0, %v2713
        %2715 = vdwg.mxu0
        %v2716 = vadd.f32 %v2654, %v800
        %v2717 = vadd.f32 %v2674, %v801
        %v2718 = vadd.f32 %v2694, %v802
        %v2719 = vadd.f32 %v2714, %v803
        %s2720 = sld [smem:[#allocation3 + $0x1]]
        %p2721 = scmp.eq.s32.totalorder %s2720, 1
        %s2722 = scalar_select %p2721, 1, 0
        %v2723 = vstv %s2722
        %vm2724 = vcmp.eq.s32.totalorder %v2723, 1
        %v2725 = vsel %vm2724, %v2001, %v2716
        %v2726 = vsel %vm2724, %v2039, %v2717
        %v2727 = vsel %vm2724, %v2077, %v2718
        %v2728 = vsel %vm2724, %v2115, %v2719
        %v2729 = vadd.f32 %v2574, %v2725
        %v2730 = vadd.f32 %v2594, %v2726
        %v2731 = vadd.f32 %v2614, %v2727
        %v2732 = vadd.f32 %v2634, %v2728
        %v2733 = vxor.u32 %v2729, 2147483648
        %v2734 = vxor.u32 %v2730, 2147483648
        %v2735 = vxor.u32 %v2731, 2147483648
        %v2736 = vxor.u32 %v2732, 2147483648
        %v2737 = vmul.f32 %v2733, 1.442695
        %v2738 = vpow.pop %v2737
        %v2739 = vmul.f32 %v2734, 1.442695
        %v2740 = vpow.pop %v2739
        %v2741 = vmul.f32 %v2735, 1.442695
        %v2742 = vpow.pop %v2741
        %v2743 = vmul.f32 %v2736, 1.442695
        %v2744 = vpow.pop %v2743
        %v2745 = vadd.f32 %v2738, 1.0
        %v2746 = vadd.f32 %v2740, 1.0
        %v2747 = vadd.f32 %v2742, 1.0
        %v2748 = vadd.f32 %v2744, 1.0
        %v2749 = vrcp.pop %v2745
        %v2750 = vmul.f32 %v2745, %v2749
        %v2751 = vsub.f32 1.0, %v2750
        %v2752 = vmul.f32 %v2749, %v2751
        %v2753 = vadd.f32 %v2749, %v2752
        %vm2754 = vweird.f32 %v2745
        %vm2755 = vweird.f32 %v2749
        %vm2756 = vmor %vm2754, %vm2755
        %v2757 = vsel %vm2756, %v2749, %v2753
        %v2758 = vand.u32 2147483647, %v2745
        %vm2759 = vcmp.eq.f32.partialorder %v2758, 8.507059e+37
        %v2760 = vand.u32 %v2745, 2147483648
        %v2761 = vor.u32 1.1754944e-38, %v2760
        %v2762 = vsel %vm2759, %v2761, %v2757
        %v2763 = vmul.f32 1.0, %v2762
        %v2764 = vrcp.pop %v2746
        %v2765 = vmul.f32 %v2746, %v2764
        %v2766 = vsub.f32 1.0, %v2765
        %v2767 = vmul.f32 %v2764, %v2766
        %v2768 = vadd.f32 %v2764, %v2767
        %vm2769 = vweird.f32 %v2746
        %vm2770 = vweird.f32 %v2764
        %vm2771 = vmor %vm2769, %vm2770
        %v2772 = vsel %vm2771, %v2764, %v2768
        %v2773 = vand.u32 2147483647, %v2746
        %vm2774 = vcmp.eq.f32.partialorder %v2773, 8.507059e+37
        %v2775 = vand.u32 %v2746, 2147483648
        %v2776 = vor.u32 1.1754944e-38, %v2775
        %v2777 = vsel %vm2774, %v2776, %v2772
        %v2778 = vmul.f32 1.0, %v2777
        %v2779 = vrcp.pop %v2747
        %v2780 = vmul.f32 %v2747, %v2779
        %v2781 = vsub.f32 1.0, %v2780
        %v2782 = vmul.f32 %v2779, %v2781
        %v2783 = vadd.f32 %v2779, %v2782
        %vm2784 = vweird.f32 %v2747
        %vm2785 = vweird.f32 %v2779
        %vm2786 = vmor %vm2784, %vm2785
        %v2787 = vsel %vm2786, %v2779, %v2783
        %v2788 = vand.u32 2147483647, %v2747
        %vm2789 = vcmp.eq.f32.partialorder %v2788, 8.507059e+37
        %v2790 = vand.u32 %v2747, 2147483648
        %v2791 = vor.u32 1.1754944e-38, %v2790
        %v2792 = vsel %vm2789, %v2791, %v2787
        %v2793 = vmul.f32 1.0, %v2792
        %v2794 = vrcp.pop %v2748
        %v2795 = vmul.f32 %v2748, %v2794
        %v2796 = vsub.f32 1.0, %v2795
        %v2797 = vmul.f32 %v2794, %v2796
        %v2798 = vadd.f32 %v2794, %v2797
        %vm2799 = vweird.f32 %v2748
        %vm2800 = vweird.f32 %v2794
        %vm2801 = vmor %vm2799, %vm2800
        %v2802 = vsel %vm2801, %v2794, %v2798
        %v2803 = vand.u32 2147483647, %v2748
        %vm2804 = vcmp.eq.f32.partialorder %v2803, 8.507059e+37
        %v2805 = vand.u32 %v2748, 2147483648
        %v2806 = vor.u32 1.1754944e-38, %v2805
        %v2807 = vsel %vm2804, %v2806, %v2802
        %v2808 = vmul.f32 1.0, %v2807
        %v2809 = vmul.f32 %v2793, 2.0
        %v2810 = vsub.f32 %v2809, 1.0
        %v2811 = vmul.f32 %v2778, %v2553
        %v2812 = vmul.f32 %v2763, %v2810
        %v2813 = vadd.f32 %v2811, %v2812
        %v2814 = vtanh.pop %v2813
        %v2815 = vmul.f32 %v2808, %v2814
        %2816 = vmatpush.msra.mxu0 %v790
        %2817 = vmatpush.msra.mxu0 %v782
        %2818 = vmatpush.msra.mxu0 %v774
        %2819 = vmatpush.msra.mxu0 %v766
        %2820 = vmatpush.msra.mxu0 %v758
        %2821 = vmatpush.msra.mxu0 %v750
        %2822 = vmatpush.msra.mxu0 %v742
        %2823 = vmatpush.msra.mxu0 %v734
        %2824 = vmatpush.msra.mxu0 %v726
        %2825 = vmatpush.msra.mxu0 %v718
        %2826 = vmatpush.msra.mxu0 %v710
        %2827 = vmatpush.msra.mxu0 %v702
        %2828 = vmatpush.msra.mxu0 %v694
        %2829 = vmatpush.msra.mxu0 %v686
        %2830 = vmatpush.msra.mxu0 %v678
        %2831 = vmatpush.msra.mxu0 %v670
        %2832 = vmatmul.f32.gmra.mxu0 %v2815
        %v2833 = vpop.f32.mrf.mxu0
        %v2834 = vadd.f32 0.0, %v2833
        %2835 = vdwg.mxu0
        %2836 = vmatpush.msra.mxu0 %v791
        %2837 = vmatpush.msra.mxu0 %v783
        %2838 = vmatpush.msra.mxu0 %v775
        %2839 = vmatpush.msra.mxu0 %v767
        %2840 = vmatpush.msra.mxu0 %v759
        %2841 = vmatpush.msra.mxu0 %v751
        %2842 = vmatpush.msra.mxu0 %v743
        %2843 = vmatpush.msra.mxu0 %v735
        %2844 = vmatpush.msra.mxu0 %v727
        %2845 = vmatpush.msra.mxu0 %v719
        %2846 = vmatpush.msra.mxu0 %v711
        %2847 = vmatpush.msra.mxu0 %v703
        %2848 = vmatpush.msra.mxu0 %v695
        %2849 = vmatpush.msra.mxu0 %v687
        %2850 = vmatpush.msra.mxu0 %v679
        %2851 = vmatpush.msra.mxu0 %v671
        %2852 = vmatmul.f32.gmra.mxu0 %v2815
        %v2853 = vpop.f32.mrf.mxu0
        %v2854 = vadd.f32 0.0, %v2853
        %2855 = vdwg.mxu0
        %2856 = vmatpush.msra.mxu0 %v792
        %2857 = vmatpush.msra.mxu0 %v784
        %2858 = vmatpush.msra.mxu0 %v776
        %2859 = vmatpush.msra.mxu0 %v768
        %2860 = vmatpush.msra.mxu0 %v760
        %2861 = vmatpush.msra.mxu0 %v752
        %2862 = vmatpush.msra.mxu0 %v744
        %2863 = vmatpush.msra.mxu0 %v736
        %2864 = vmatpush.msra.mxu0 %v728
        %2865 = vmatpush.msra.mxu0 %v720
        %2866 = vmatpush.msra.mxu0 %v712
        %2867 = vmatpush.msra.mxu0 %v704
        %2868 = vmatpush.msra.mxu0 %v696
        %2869 = vmatpush.msra.mxu0 %v688
        %2870 = vmatpush.msra.mxu0 %v680
        %2871 = vmatpush.msra.mxu0 %v672
        %2872 = vmatmul.f32.gmra.mxu0 %v2815
        %v2873 = vpop.f32.mrf.mxu0
        %v2874 = vadd.f32 0.0, %v2873
        %2875 = vdwg.mxu0
        %2876 = vmatpush.msra.mxu0 %v793
        %2877 = vmatpush.msra.mxu0 %v785
        %2878 = vmatpush.msra.mxu0 %v777
        %2879 = vmatpush.msra.mxu0 %v769
        %2880 = vmatpush.msra.mxu0 %v761
        %2881 = vmatpush.msra.mxu0 %v753
        %2882 = vmatpush.msra.mxu0 %v745
        %2883 = vmatpush.msra.mxu0 %v737
        %2884 = vmatpush.msra.mxu0 %v729
        %2885 = vmatpush.msra.mxu0 %v721
        %2886 = vmatpush.msra.mxu0 %v713
        %2887 = vmatpush.msra.mxu0 %v705
        %2888 = vmatpush.msra.mxu0 %v697
        %2889 = vmatpush.msra.mxu0 %v689
        %2890 = vmatpush.msra.mxu0 %v681
        %2891 = vmatpush.msra.mxu0 %v673
        %2892 = vmatmul.f32.gmra.mxu0 %v2815
        %v2893 = vpop.f32.mrf.mxu0
        %v2894 = vadd.f32 0.0, %v2893
        %2895 = vdwg.mxu0
        %2896 = vmatpush.msra.mxu0 %v794
        %2897 = vmatpush.msra.mxu0 %v786
        %2898 = vmatpush.msra.mxu0 %v778
        %2899 = vmatpush.msra.mxu0 %v770
        %2900 = vmatpush.msra.mxu0 %v762
        %2901 = vmatpush.msra.mxu0 %v754
        %2902 = vmatpush.msra.mxu0 %v746
        %2903 = vmatpush.msra.mxu0 %v738
        %2904 = vmatpush.msra.mxu0 %v730
        %2905 = vmatpush.msra.mxu0 %v722
        %2906 = vmatpush.msra.mxu0 %v714
        %2907 = vmatpush.msra.mxu0 %v706
        %2908 = vmatpush.msra.mxu0 %v698
        %2909 = vmatpush.msra.mxu0 %v690
        %2910 = vmatpush.msra.mxu0 %v682
        %2911 = vmatpush.msra.mxu0 %v674
        %2912 = vmatmul.f32.gmra.mxu0 %v2815
        %v2913 = vpop.f32.mrf.mxu0
        %v2914 = vadd.f32 0.0, %v2913
        %2915 = vdwg.mxu0
        %2916 = vmatpush.msra.mxu0 %v795
        %2917 = vmatpush.msra.mxu0 %v787
        %2918 = vmatpush.msra.mxu0 %v779
        %2919 = vmatpush.msra.mxu0 %v771
        %2920 = vmatpush.msra.mxu0 %v763
        %2921 = vmatpush.msra.mxu0 %v755
        %2922 = vmatpush.msra.mxu0 %v747
        %2923 = vmatpush.msra.mxu0 %v739
        %2924 = vmatpush.msra.mxu0 %v731
        %2925 = vmatpush.msra.mxu0 %v723
        %2926 = vmatpush.msra.mxu0 %v715
        %2927 = vmatpush.msra.mxu0 %v707
        %2928 = vmatpush.msra.mxu0 %v699
        %2929 = vmatpush.msra.mxu0 %v691
        %2930 = vmatpush.msra.mxu0 %v683
        %2931 = vmatpush.msra.mxu0 %v675
        %2932 = vmatmul.f32.gmra.mxu0 %v2815
        %v2933 = vpop.f32.mrf.mxu0
        %v2934 = vadd.f32 0.0, %v2933
        %2935 = vdwg.mxu0
        %2936 = vmatpush.msra.mxu0 %v796
        %2937 = vmatpush.msra.mxu0 %v788
        %2938 = vmatpush.msra.mxu0 %v780
        %2939 = vmatpush.msra.mxu0 %v772
        %2940 = vmatpush.msra.mxu0 %v764
        %2941 = vmatpush.msra.mxu0 %v756
        %2942 = vmatpush.msra.mxu0 %v748
        %2943 = vmatpush.msra.mxu0 %v740
        %2944 = vmatpush.msra.mxu0 %v732
        %2945 = vmatpush.msra.mxu0 %v724
        %2946 = vmatpush.msra.mxu0 %v716
        %2947 = vmatpush.msra.mxu0 %v708
        %2948 = vmatpush.msra.mxu0 %v700
        %2949 = vmatpush.msra.mxu0 %v692
        %2950 = vmatpush.msra.mxu0 %v684
        %2951 = vmatpush.msra.mxu0 %v676
        %2952 = vmatmul.f32.gmra.mxu0 %v2815
        %v2953 = vpop.f32.mrf.mxu0
        %v2954 = vadd.f32 0.0, %v2953
        %2955 = vdwg.mxu0
        %2956 = vmatpush.msra.mxu0 %v797
        %2957 = vmatpush.msra.mxu0 %v789
        %2958 = vmatpush.msra.mxu0 %v781
        %2959 = vmatpush.msra.mxu0 %v773
        %2960 = vmatpush.msra.mxu0 %v765
        %2961 = vmatpush.msra.mxu0 %v757
        %2962 = vmatpush.msra.mxu0 %v749
        %2963 = vmatpush.msra.mxu0 %v741
        %2964 = vmatpush.msra.mxu0 %v733
        %2965 = vmatpush.msra.mxu0 %v725
        %2966 = vmatpush.msra.mxu0 %v717
        %2967 = vmatpush.msra.mxu0 %v709
        %2968 = vmatpush.msra.mxu0 %v701
        %2969 = vmatpush.msra.mxu0 %v693
        %2970 = vmatpush.msra.mxu0 %v685
        %2971 = vmatpush.msra.mxu0 %v677
        %2972 = vmatmul.f32.gmra.mxu0 %v2815
        %v2973 = vpop.f32.mrf.mxu0
        %v2974 = vadd.f32 0.0, %v2973
        %2975 = vdwg.mxu0
        %v2976 = vadd.f32 %v2914, %v800
        %v2977 = vadd.f32 %v2934, %v801
        %v2978 = vadd.f32 %v2954, %v802
        %v2979 = vadd.f32 %v2974, %v803
        %s2980 = sld [smem:[#allocation3 + $0x2]]
        %p2981 = scmp.eq.s32.totalorder %s2980, 1
        %s2982 = scalar_select %p2981, 1, 0
        %v2983 = vstv %s2982
        %vm2984 = vcmp.eq.s32.totalorder %v2983, 1
        %v2985 = vsel %vm2984, %v2004, %v2976
        %v2986 = vsel %vm2984, %v2042, %v2977
        %v2987 = vsel %vm2984, %v2080, %v2978
        %v2988 = vsel %vm2984, %v2118, %v2979
        %v2989 = vadd.f32 %v2834, %v2985
        %v2990 = vadd.f32 %v2854, %v2986
        %v2991 = vadd.f32 %v2874, %v2987
        %v2992 = vadd.f32 %v2894, %v2988
        %v2993 = vxor.u32 %v2989, 2147483648
        %v2994 = vxor.u32 %v2990, 2147483648
        %v2995 = vxor.u32 %v2991, 2147483648
        %v2996 = vxor.u32 %v2992, 2147483648
        %v2997 = vmul.f32 %v2993, 1.442695
        %v2998 = vpow.pop %v2997
        %v2999 = vmul.f32 %v2994, 1.442695
        %v3000 = vpow.pop %v2999
        %v3001 = vmul.f32 %v2995, 1.442695
        %v3002 = vpow.pop %v3001
        %v3003 = vmul.f32 %v2996, 1.442695
        %v3004 = vpow.pop %v3003
        %v3005 = vadd.f32 %v2998, 1.0
        %v3006 = vadd.f32 %v3000, 1.0
        %v3007 = vadd.f32 %v3002, 1.0
        %v3008 = vadd.f32 %v3004, 1.0
        %v3009 = vrcp.pop %v3005
        %v3010 = vmul.f32 %v3005, %v3009
        %v3011 = vsub.f32 1.0, %v3010
        %v3012 = vmul.f32 %v3009, %v3011
        %v3013 = vadd.f32 %v3009, %v3012
        %vm3014 = vweird.f32 %v3005
        %vm3015 = vweird.f32 %v3009
        %vm3016 = vmor %vm3014, %vm3015
        %v3017 = vsel %vm3016, %v3009, %v3013
        %v3018 = vand.u32 2147483647, %v3005
        %vm3019 = vcmp.eq.f32.partialorder %v3018, 8.507059e+37
        %v3020 = vand.u32 %v3005, 2147483648
        %v3021 = vor.u32 1.1754944e-38, %v3020
        %v3022 = vsel %vm3019, %v3021, %v3017
        %v3023 = vmul.f32 1.0, %v3022
        %v3024 = vrcp.pop %v3006
        %v3025 = vmul.f32 %v3006, %v3024
        %v3026 = vsub.f32 1.0, %v3025
        %v3027 = vmul.f32 %v3024, %v3026
        %v3028 = vadd.f32 %v3024, %v3027
        %vm3029 = vweird.f32 %v3006
        %vm3030 = vweird.f32 %v3024
        %vm3031 = vmor %vm3029, %vm3030
        %v3032 = vsel %vm3031, %v3024, %v3028
        %v3033 = vand.u32 2147483647, %v3006
        %vm3034 = vcmp.eq.f32.partialorder %v3033, 8.507059e+37
        %v3035 = vand.u32 %v3006, 2147483648
        %v3036 = vor.u32 1.1754944e-38, %v3035
        %v3037 = vsel %vm3034, %v3036, %v3032
        %v3038 = vmul.f32 1.0, %v3037
        %v3039 = vrcp.pop %v3007
        %v3040 = vmul.f32 %v3007, %v3039
        %v3041 = vsub.f32 1.0, %v3040
        %v3042 = vmul.f32 %v3039, %v3041
        %v3043 = vadd.f32 %v3039, %v3042
        %vm3044 = vweird.f32 %v3007
        %vm3045 = vweird.f32 %v3039
        %vm3046 = vmor %vm3044, %vm3045
        %v3047 = vsel %vm3046, %v3039, %v3043
        %v3048 = vand.u32 2147483647, %v3007
        %vm3049 = vcmp.eq.f32.partialorder %v3048, 8.507059e+37
        %v3050 = vand.u32 %v3007, 2147483648
        %v3051 = vor.u32 1.1754944e-38, %v3050
        %v3052 = vsel %vm3049, %v3051, %v3047
        %v3053 = vmul.f32 1.0, %v3052
        %v3054 = vrcp.pop %v3008
        %v3055 = vmul.f32 %v3008, %v3054
        %v3056 = vsub.f32 1.0, %v3055
        %v3057 = vmul.f32 %v3054, %v3056
        %v3058 = vadd.f32 %v3054, %v3057
        %vm3059 = vweird.f32 %v3008
        %vm3060 = vweird.f32 %v3054
        %vm3061 = vmor %vm3059, %vm3060
        %v3062 = vsel %vm3061, %v3054, %v3058
        %v3063 = vand.u32 2147483647, %v3008
        %vm3064 = vcmp.eq.f32.partialorder %v3063, 8.507059e+37
        %v3065 = vand.u32 %v3008, 2147483648
        %v3066 = vor.u32 1.1754944e-38, %v3065
        %v3067 = vsel %vm3064, %v3066, %v3062
        %v3068 = vmul.f32 1.0, %v3067
        %v3069 = vmul.f32 %v3053, 2.0
        %v3070 = vsub.f32 %v3069, 1.0
        %v3071 = vmul.f32 %v3038, %v2813
        %v3072 = vmul.f32 %v3023, %v3070
        %v3073 = vadd.f32 %v3071, %v3072
        %v3074 = vtanh.pop %v3073
        %v3075 = vmul.f32 %v3068, %v3074
        %3076 = vmatpush.msra.mxu0 %v790
        %3077 = vmatpush.msra.mxu0 %v782
        %3078 = vmatpush.msra.mxu0 %v774
        %3079 = vmatpush.msra.mxu0 %v766
        %3080 = vmatpush.msra.mxu0 %v758
        %3081 = vmatpush.msra.mxu0 %v750
        %3082 = vmatpush.msra.mxu0 %v742
        %3083 = vmatpush.msra.mxu0 %v734
        %3084 = vmatpush.msra.mxu0 %v726
        %3085 = vmatpush.msra.mxu0 %v718
        %3086 = vmatpush.msra.mxu0 %v710
        %3087 = vmatpush.msra.mxu0 %v702
        %3088 = vmatpush.msra.mxu0 %v694
        %3089 = vmatpush.msra.mxu0 %v686
        %3090 = vmatpush.msra.mxu0 %v678
        %3091 = vmatpush.msra.mxu0 %v670
        %3092 = vmatmul.f32.gmra.mxu0 %v3075
        %v3093 = vpop.f32.mrf.mxu0
        %v3094 = vadd.f32 0.0, %v3093
        %3095 = vdwg.mxu0
        %3096 = vmatpush.msra.mxu0 %v791
        %3097 = vmatpush.msra.mxu0 %v783
        %3098 = vmatpush.msra.mxu0 %v775
        %3099 = vmatpush.msra.mxu0 %v767
        %3100 = vmatpush.msra.mxu0 %v759
        %3101 = vmatpush.msra.mxu0 %v751
        %3102 = vmatpush.msra.mxu0 %v743
        %3103 = vmatpush.msra.mxu0 %v735
        %3104 = vmatpush.msra.mxu0 %v727
        %3105 = vmatpush.msra.mxu0 %v719
        %3106 = vmatpush.msra.mxu0 %v711
        %3107 = vmatpush.msra.mxu0 %v703
        %3108 = vmatpush.msra.mxu0 %v695
        %3109 = vmatpush.msra.mxu0 %v687
        %3110 = vmatpush.msra.mxu0 %v679
        %3111 = vmatpush.msra.mxu0 %v671
        %3112 = vmatmul.f32.gmra.mxu0 %v3075
        %v3113 = vpop.f32.mrf.mxu0
        %v3114 = vadd.f32 0.0, %v3113
        %3115 = vdwg.mxu0
        %3116 = vmatpush.msra.mxu0 %v792
        %3117 = vmatpush.msra.mxu0 %v784
        %3118 = vmatpush.msra.mxu0 %v776
        %3119 = vmatpush.msra.mxu0 %v768
        %3120 = vmatpush.msra.mxu0 %v760
        %3121 = vmatpush.msra.mxu0 %v752
        %3122 = vmatpush.msra.mxu0 %v744
        %3123 = vmatpush.msra.mxu0 %v736
        %3124 = vmatpush.msra.mxu0 %v728
        %3125 = vmatpush.msra.mxu0 %v720
        %3126 = vmatpush.msra.mxu0 %v712
        %3127 = vmatpush.msra.mxu0 %v704
        %3128 = vmatpush.msra.mxu0 %v696
        %3129 = vmatpush.msra.mxu0 %v688
        %3130 = vmatpush.msra.mxu0 %v680
        %3131 = vmatpush.msra.mxu0 %v672
        %3132 = vmatmul.f32.gmra.mxu0 %v3075
        %v3133 = vpop.f32.mrf.mxu0
        %v3134 = vadd.f32 0.0, %v3133
        %3135 = vdwg.mxu0
        %3136 = vmatpush.msra.mxu0 %v793
        %3137 = vmatpush.msra.mxu0 %v785
        %3138 = vmatpush.msra.mxu0 %v777
        %3139 = vmatpush.msra.mxu0 %v769
        %3140 = vmatpush.msra.mxu0 %v761
        %3141 = vmatpush.msra.mxu0 %v753
        %3142 = vmatpush.msra.mxu0 %v745
        %3143 = vmatpush.msra.mxu0 %v737
        %3144 = vmatpush.msra.mxu0 %v729
        %3145 = vmatpush.msra.mxu0 %v721
        %3146 = vmatpush.msra.mxu0 %v713
        %3147 = vmatpush.msra.mxu0 %v705
        %3148 = vmatpush.msra.mxu0 %v697
        %3149 = vmatpush.msra.mxu0 %v689
        %3150 = vmatpush.msra.mxu0 %v681
        %3151 = vmatpush.msra.mxu0 %v673
        %3152 = vmatmul.f32.gmra.mxu0 %v3075
        %v3153 = vpop.f32.mrf.mxu0
        %v3154 = vadd.f32 0.0, %v3153
        %3155 = vdwg.mxu0
        %3156 = vmatpush.msra.mxu0 %v794
        %3157 = vmatpush.msra.mxu0 %v786
        %3158 = vmatpush.msra.mxu0 %v778
        %3159 = vmatpush.msra.mxu0 %v770
        %3160 = vmatpush.msra.mxu0 %v762
        %3161 = vmatpush.msra.mxu0 %v754
        %3162 = vmatpush.msra.mxu0 %v746
        %3163 = vmatpush.msra.mxu0 %v738
        %3164 = vmatpush.msra.mxu0 %v730
        %3165 = vmatpush.msra.mxu0 %v722
        %3166 = vmatpush.msra.mxu0 %v714
        %3167 = vmatpush.msra.mxu0 %v706
        %3168 = vmatpush.msra.mxu0 %v698
        %3169 = vmatpush.msra.mxu0 %v690
        %3170 = vmatpush.msra.mxu0 %v682
        %3171 = vmatpush.msra.mxu0 %v674
        %3172 = vmatmul.f32.gmra.mxu0 %v3075
        %v3173 = vpop.f32.mrf.mxu0
        %v3174 = vadd.f32 0.0, %v3173
        %3175 = vdwg.mxu0
        %3176 = vmatpush.msra.mxu0 %v795
        %3177 = vmatpush.msra.mxu0 %v787
        %3178 = vmatpush.msra.mxu0 %v779
        %3179 = vmatpush.msra.mxu0 %v771
        %3180 = vmatpush.msra.mxu0 %v763
        %3181 = vmatpush.msra.mxu0 %v755
        %3182 = vmatpush.msra.mxu0 %v747
        %3183 = vmatpush.msra.mxu0 %v739
        %3184 = vmatpush.msra.mxu0 %v731
        %3185 = vmatpush.msra.mxu0 %v723
        %3186 = vmatpush.msra.mxu0 %v715
        %3187 = vmatpush.msra.mxu0 %v707
        %3188 = vmatpush.msra.mxu0 %v699
        %3189 = vmatpush.msra.mxu0 %v691
        %3190 = vmatpush.msra.mxu0 %v683
        %3191 = vmatpush.msra.mxu0 %v675
        %3192 = vmatmul.f32.gmra.mxu0 %v3075
        %v3193 = vpop.f32.mrf.mxu0
        %v3194 = vadd.f32 0.0, %v3193
        %3195 = vdwg.mxu0
        %3196 = vmatpush.msra.mxu0 %v796
        %3197 = vmatpush.msra.mxu0 %v788
        %3198 = vmatpush.msra.mxu0 %v780
        %3199 = vmatpush.msra.mxu0 %v772
        %3200 = vmatpush.msra.mxu0 %v764
        %3201 = vmatpush.msra.mxu0 %v756
        %3202 = vmatpush.msra.mxu0 %v748
        %3203 = vmatpush.msra.mxu0 %v740
        %3204 = vmatpush.msra.mxu0 %v732
        %3205 = vmatpush.msra.mxu0 %v724
        %3206 = vmatpush.msra.mxu0 %v716
        %3207 = vmatpush.msra.mxu0 %v708
        %3208 = vmatpush.msra.mxu0 %v700
        %3209 = vmatpush.msra.mxu0 %v692
        %3210 = vmatpush.msra.mxu0 %v684
        %3211 = vmatpush.msra.mxu0 %v676
        %3212 = vmatmul.f32.gmra.mxu0 %v3075
        %v3213 = vpop.f32.mrf.mxu0
        %v3214 = vadd.f32 0.0, %v3213
        %3215 = vdwg.mxu0
        %3216 = vmatpush.msra.mxu0 %v797
        %3217 = vmatpush.msra.mxu0 %v789
        %3218 = vmatpush.msra.mxu0 %v781
        %3219 = vmatpush.msra.mxu0 %v773
        %3220 = vmatpush.msra.mxu0 %v765
        %3221 = vmatpush.msra.mxu0 %v757
        %3222 = vmatpush.msra.mxu0 %v749
        %3223 = vmatpush.msra.mxu0 %v741
        %3224 = vmatpush.msra.mxu0 %v733
        %3225 = vmatpush.msra.mxu0 %v725
        %3226 = vmatpush.msra.mxu0 %v717
        %3227 = vmatpush.msra.mxu0 %v709
        %3228 = vmatpush.msra.mxu0 %v701
        %3229 = vmatpush.msra.mxu0 %v693
        %3230 = vmatpush.msra.mxu0 %v685
        %3231 = vmatpush.msra.mxu0 %v677
        %3232 = vmatmul.f32.gmra.mxu0 %v3075
        %v3233 = vpop.f32.mrf.mxu0
        %v3234 = vadd.f32 0.0, %v3233
        %3235 = vdwg.mxu0
        %v3236 = vadd.f32 %v3174, %v800
        %v3237 = vadd.f32 %v3194, %v801
        %v3238 = vadd.f32 %v3214, %v802
        %v3239 = vadd.f32 %v3234, %v803
        %s3240 = sld [smem:[#allocation3 + $0x3]]
        %p3241 = scmp.eq.s32.totalorder %s3240, 1
        %s3242 = scalar_select %p3241, 1, 0
        %v3243 = vstv %s3242
        %vm3244 = vcmp.eq.s32.totalorder %v3243, 1
        %v3245 = vsel %vm3244, %v2007, %v3236
        %v3246 = vsel %vm3244, %v2045, %v3237
        %v3247 = vsel %vm3244, %v2083, %v3238
        %v3248 = vsel %vm3244, %v2121, %v3239
        %v3249 = vadd.f32 %v3094, %v3245
        %v3250 = vadd.f32 %v3114, %v3246
        %v3251 = vadd.f32 %v3134, %v3247
        %v3252 = vadd.f32 %v3154, %v3248
        %v3253 = vxor.u32 %v3249, 2147483648
        %v3254 = vxor.u32 %v3250, 2147483648
        %v3255 = vxor.u32 %v3251, 2147483648
        %v3256 = vxor.u32 %v3252, 2147483648
        %v3257 = vmul.f32 %v3253, 1.442695
        %v3258 = vpow.pop %v3257
        %v3259 = vmul.f32 %v3254, 1.442695
        %v3260 = vpow.pop %v3259
        %v3261 = vmul.f32 %v3255, 1.442695
        %v3262 = vpow.pop %v3261
        %v3263 = vmul.f32 %v3256, 1.442695
        %v3264 = vpow.pop %v3263
        %v3265 = vadd.f32 %v3258, 1.0
        %v3266 = vadd.f32 %v3260, 1.0
        %v3267 = vadd.f32 %v3262, 1.0
        %v3268 = vadd.f32 %v3264, 1.0
        %v3269 = vrcp.pop %v3265
        %v3270 = vmul.f32 %v3265, %v3269
        %v3271 = vsub.f32 1.0, %v3270
        %v3272 = vmul.f32 %v3269, %v3271
        %v3273 = vadd.f32 %v3269, %v3272
        %vm3274 = vweird.f32 %v3265
        %vm3275 = vweird.f32 %v3269
        %vm3276 = vmor %vm3274, %vm3275
        %v3277 = vsel %vm3276, %v3269, %v3273
        %v3278 = vand.u32 2147483647, %v3265
        %vm3279 = vcmp.eq.f32.partialorder %v3278, 8.507059e+37
        %v3280 = vand.u32 %v3265, 2147483648
        %v3281 = vor.u32 1.1754944e-38, %v3280
        %v3282 = vsel %vm3279, %v3281, %v3277
        %v3283 = vmul.f32 1.0, %v3282
        %v3284 = vrcp.pop %v3266
        %v3285 = vmul.f32 %v3266, %v3284
        %v3286 = vsub.f32 1.0, %v3285
        %v3287 = vmul.f32 %v3284, %v3286
        %v3288 = vadd.f32 %v3284, %v3287
        %vm3289 = vweird.f32 %v3266
        %vm3290 = vweird.f32 %v3284
        %vm3291 = vmor %vm3289, %vm3290
        %v3292 = vsel %vm3291, %v3284, %v3288
        %v3293 = vand.u32 2147483647, %v3266
        %vm3294 = vcmp.eq.f32.partialorder %v3293, 8.507059e+37
        %v3295 = vand.u32 %v3266, 2147483648
        %v3296 = vor.u32 1.1754944e-38, %v3295
        %v3297 = vsel %vm3294, %v3296, %v3292
        %v3298 = vmul.f32 1.0, %v3297
        %v3299 = vrcp.pop %v3267
        %v3300 = vmul.f32 %v3267, %v3299
        %v3301 = vsub.f32 1.0, %v3300
        %v3302 = vmul.f32 %v3299, %v3301
        %v3303 = vadd.f32 %v3299, %v3302
        %vm3304 = vweird.f32 %v3267
        %vm3305 = vweird.f32 %v3299
        %vm3306 = vmor %vm3304, %vm3305
        %v3307 = vsel %vm3306, %v3299, %v3303
        %v3308 = vand.u32 2147483647, %v3267
        %vm3309 = vcmp.eq.f32.partialorder %v3308, 8.507059e+37
        %v3310 = vand.u32 %v3267, 2147483648
        %v3311 = vor.u32 1.1754944e-38, %v3310
        %v3312 = vsel %vm3309, %v3311, %v3307
        %v3313 = vmul.f32 1.0, %v3312
        %v3314 = vrcp.pop %v3268
        %v3315 = vmul.f32 %v3268, %v3314
        %v3316 = vsub.f32 1.0, %v3315
        %v3317 = vmul.f32 %v3314, %v3316
        %v3318 = vadd.f32 %v3314, %v3317
        %vm3319 = vweird.f32 %v3268
        %vm3320 = vweird.f32 %v3314
        %vm3321 = vmor %vm3319, %vm3320
        %v3322 = vsel %vm3321, %v3314, %v3318
        %v3323 = vand.u32 2147483647, %v3268
        %vm3324 = vcmp.eq.f32.partialorder %v3323, 8.507059e+37
        %v3325 = vand.u32 %v3268, 2147483648
        %v3326 = vor.u32 1.1754944e-38, %v3325
        %v3327 = vsel %vm3324, %v3326, %v3322
        %v3328 = vmul.f32 1.0, %v3327
        %v3329 = vmul.f32 %v3313, 2.0
        %v3330 = vsub.f32 %v3329, 1.0
        %v3331 = vmul.f32 %v3298, %v3073
        %v3332 = vmul.f32 %v3283, %v3330
        %v3333 = vadd.f32 %v3331, %v3332
        %v3334 = vtanh.pop %v3333
        %v3335 = vmul.f32 %v3328, %v3334
        %3336 = vmatpush.msra.mxu0 %v790
        %3337 = vmatpush.msra.mxu0 %v782
        %3338 = vmatpush.msra.mxu0 %v774
        %3339 = vmatpush.msra.mxu0 %v766
        %3340 = vmatpush.msra.mxu0 %v758
        %3341 = vmatpush.msra.mxu0 %v750
        %3342 = vmatpush.msra.mxu0 %v742
        %3343 = vmatpush.msra.mxu0 %v734
        %3344 = vmatpush.msra.mxu0 %v726
        %3345 = vmatpush.msra.mxu0 %v718
        %3346 = vmatpush.msra.mxu0 %v710
        %3347 = vmatpush.msra.mxu0 %v702
        %3348 = vmatpush.msra.mxu0 %v694
        %3349 = vmatpush.msra.mxu0 %v686
        %3350 = vmatpush.msra.mxu0 %v678
        %3351 = vmatpush.msra.mxu0 %v670
        %3352 = vmatmul.f32.gmra.mxu0 %v3335
        %v3353 = vpop.f32.mrf.mxu0
        %v3354 = vadd.f32 0.0, %v3353
        %3355 = vdwg.mxu0
        %3356 = vmatpush.msra.mxu0 %v791
        %3357 = vmatpush.msra.mxu0 %v783
        %3358 = vmatpush.msra.mxu0 %v775
        %3359 = vmatpush.msra.mxu0 %v767
        %3360 = vmatpush.msra.mxu0 %v759
        %3361 = vmatpush.msra.mxu0 %v751
        %3362 = vmatpush.msra.mxu0 %v743
        %3363 = vmatpush.msra.mxu0 %v735
        %3364 = vmatpush.msra.mxu0 %v727
        %3365 = vmatpush.msra.mxu0 %v719
        %3366 = vmatpush.msra.mxu0 %v711
        %3367 = vmatpush.msra.mxu0 %v703
        %3368 = vmatpush.msra.mxu0 %v695
        %3369 = vmatpush.msra.mxu0 %v687
        %3370 = vmatpush.msra.mxu0 %v679
        %3371 = vmatpush.msra.mxu0 %v671
        %3372 = vmatmul.f32.gmra.mxu0 %v3335
        %v3373 = vpop.f32.mrf.mxu0
        %v3374 = vadd.f32 0.0, %v3373
        %3375 = vdwg.mxu0
        %3376 = vmatpush.msra.mxu0 %v792
        %3377 = vmatpush.msra.mxu0 %v784
        %3378 = vmatpush.msra.mxu0 %v776
        %3379 = vmatpush.msra.mxu0 %v768
        %3380 = vmatpush.msra.mxu0 %v760
        %3381 = vmatpush.msra.mxu0 %v752
        %3382 = vmatpush.msra.mxu0 %v744
        %3383 = vmatpush.msra.mxu0 %v736
        %3384 = vmatpush.msra.mxu0 %v728
        %3385 = vmatpush.msra.mxu0 %v720
        %3386 = vmatpush.msra.mxu0 %v712
        %3387 = vmatpush.msra.mxu0 %v704
        %3388 = vmatpush.msra.mxu0 %v696
        %3389 = vmatpush.msra.mxu0 %v688
        %3390 = vmatpush.msra.mxu0 %v680
        %3391 = vmatpush.msra.mxu0 %v672
        %3392 = vmatmul.f32.gmra.mxu0 %v3335
        %v3393 = vpop.f32.mrf.mxu0
        %v3394 = vadd.f32 0.0, %v3393
        %3395 = vdwg.mxu0
        %3396 = vmatpush.msra.mxu0 %v793
        %3397 = vmatpush.msra.mxu0 %v785
        %3398 = vmatpush.msra.mxu0 %v777
        %3399 = vmatpush.msra.mxu0 %v769
        %3400 = vmatpush.msra.mxu0 %v761
        %3401 = vmatpush.msra.mxu0 %v753
        %3402 = vmatpush.msra.mxu0 %v745
        %3403 = vmatpush.msra.mxu0 %v737
        %3404 = vmatpush.msra.mxu0 %v729
        %3405 = vmatpush.msra.mxu0 %v721
        %3406 = vmatpush.msra.mxu0 %v713
        %3407 = vmatpush.msra.mxu0 %v705
        %3408 = vmatpush.msra.mxu0 %v697
        %3409 = vmatpush.msra.mxu0 %v689
        %3410 = vmatpush.msra.mxu0 %v681
        %3411 = vmatpush.msra.mxu0 %v673
        %3412 = vmatmul.f32.gmra.mxu0 %v3335
        %v3413 = vpop.f32.mrf.mxu0
        %v3414 = vadd.f32 0.0, %v3413
        %3415 = vdwg.mxu0
        %3416 = vmatpush.msra.mxu0 %v794
        %3417 = vmatpush.msra.mxu0 %v786
        %3418 = vmatpush.msra.mxu0 %v778
        %3419 = vmatpush.msra.mxu0 %v770
        %3420 = vmatpush.msra.mxu0 %v762
        %3421 = vmatpush.msra.mxu0 %v754
        %3422 = vmatpush.msra.mxu0 %v746
        %3423 = vmatpush.msra.mxu0 %v738
        %3424 = vmatpush.msra.mxu0 %v730
        %3425 = vmatpush.msra.mxu0 %v722
        %3426 = vmatpush.msra.mxu0 %v714
        %3427 = vmatpush.msra.mxu0 %v706
        %3428 = vmatpush.msra.mxu0 %v698
        %3429 = vmatpush.msra.mxu0 %v690
        %3430 = vmatpush.msra.mxu0 %v682
        %3431 = vmatpush.msra.mxu0 %v674
        %3432 = vmatmul.f32.gmra.mxu0 %v3335
        %v3433 = vpop.f32.mrf.mxu0
        %v3434 = vadd.f32 0.0, %v3433
        %3435 = vdwg.mxu0
        %3436 = vmatpush.msra.mxu0 %v795
        %3437 = vmatpush.msra.mxu0 %v787
        %3438 = vmatpush.msra.mxu0 %v779
        %3439 = vmatpush.msra.mxu0 %v771
        %3440 = vmatpush.msra.mxu0 %v763
        %3441 = vmatpush.msra.mxu0 %v755
        %3442 = vmatpush.msra.mxu0 %v747
        %3443 = vmatpush.msra.mxu0 %v739
        %3444 = vmatpush.msra.mxu0 %v731
        %3445 = vmatpush.msra.mxu0 %v723
        %3446 = vmatpush.msra.mxu0 %v715
        %3447 = vmatpush.msra.mxu0 %v707
        %3448 = vmatpush.msra.mxu0 %v699
        %3449 = vmatpush.msra.mxu0 %v691
        %3450 = vmatpush.msra.mxu0 %v683
        %3451 = vmatpush.msra.mxu0 %v675
        %3452 = vmatmul.f32.gmra.mxu0 %v3335
        %v3453 = vpop.f32.mrf.mxu0
        %v3454 = vadd.f32 0.0, %v3453
        %3455 = vdwg.mxu0
        %3456 = vmatpush.msra.mxu0 %v796
        %3457 = vmatpush.msra.mxu0 %v788
        %3458 = vmatpush.msra.mxu0 %v780
        %3459 = vmatpush.msra.mxu0 %v772
        %3460 = vmatpush.msra.mxu0 %v764
        %3461 = vmatpush.msra.mxu0 %v756
        %3462 = vmatpush.msra.mxu0 %v748
        %3463 = vmatpush.msra.mxu0 %v740
        %3464 = vmatpush.msra.mxu0 %v732
        %3465 = vmatpush.msra.mxu0 %v724
        %3466 = vmatpush.msra.mxu0 %v716
        %3467 = vmatpush.msra.mxu0 %v708
        %3468 = vmatpush.msra.mxu0 %v700
        %3469 = vmatpush.msra.mxu0 %v692
        %3470 = vmatpush.msra.mxu0 %v684
        %3471 = vmatpush.msra.mxu0 %v676
        %3472 = vmatmul.f32.gmra.mxu0 %v3335
        %v3473 = vpop.f32.mrf.mxu0
        %v3474 = vadd.f32 0.0, %v3473
        %3475 = vdwg.mxu0
        %3476 = vmatpush.msra.mxu0 %v797
        %3477 = vmatpush.msra.mxu0 %v789
        %3478 = vmatpush.msra.mxu0 %v781
        %3479 = vmatpush.msra.mxu0 %v773
        %3480 = vmatpush.msra.mxu0 %v765
        %3481 = vmatpush.msra.mxu0 %v757
        %3482 = vmatpush.msra.mxu0 %v749
        %3483 = vmatpush.msra.mxu0 %v741
        %3484 = vmatpush.msra.mxu0 %v733
        %3485 = vmatpush.msra.mxu0 %v725
        %3486 = vmatpush.msra.mxu0 %v717
        %3487 = vmatpush.msra.mxu0 %v709
        %3488 = vmatpush.msra.mxu0 %v701
        %3489 = vmatpush.msra.mxu0 %v693
        %3490 = vmatpush.msra.mxu0 %v685
        %3491 = vmatpush.msra.mxu0 %v677
        %3492 = vmatmul.f32.gmra.mxu0 %v3335
        %v3493 = vpop.f32.mrf.mxu0
        %v3494 = vadd.f32 0.0, %v3493
        %3495 = vdwg.mxu0
        %v3496 = vadd.f32 %v3434, %v800
        %v3497 = vadd.f32 %v3454, %v801
        %v3498 = vadd.f32 %v3474, %v802
        %v3499 = vadd.f32 %v3494, %v803
        %s3500 = sld [smem:[#allocation3 + $0x4]]
        %p3501 = scmp.eq.s32.totalorder %s3500, 1
        %s3502 = scalar_select %p3501, 1, 0
        %v3503 = vstv %s3502
        %vm3504 = vcmp.eq.s32.totalorder %v3503, 1
        %v3505 = vsel %vm3504, %v2010, %v3496
        %v3506 = vsel %vm3504, %v2048, %v3497
        %v3507 = vsel %vm3504, %v2086, %v3498
        %v3508 = vsel %vm3504, %v2124, %v3499
        %v3509 = vadd.f32 %v3354, %v3505
        %v3510 = vadd.f32 %v3374, %v3506
        %v3511 = vadd.f32 %v3394, %v3507
        %v3512 = vadd.f32 %v3414, %v3508
        %v3513 = vxor.u32 %v3509, 2147483648
        %v3514 = vxor.u32 %v3510, 2147483648
        %v3515 = vxor.u32 %v3511, 2147483648
        %v3516 = vxor.u32 %v3512, 2147483648
        %v3517 = vmul.f32 %v3513, 1.442695
        %v3518 = vpow.pop %v3517
        %v3519 = vmul.f32 %v3514, 1.442695
        %v3520 = vpow.pop %v3519
        %v3521 = vmul.f32 %v3515, 1.442695
        %v3522 = vpow.pop %v3521
        %v3523 = vmul.f32 %v3516, 1.442695
        %v3524 = vpow.pop %v3523
        %v3525 = vadd.f32 %v3518, 1.0
        %v3526 = vadd.f32 %v3520, 1.0
        %v3527 = vadd.f32 %v3522, 1.0
        %v3528 = vadd.f32 %v3524, 1.0
        %v3529 = vrcp.pop %v3525
        %v3530 = vmul.f32 %v3525, %v3529
        %v3531 = vsub.f32 1.0, %v3530
        %v3532 = vmul.f32 %v3529, %v3531
        %v3533 = vadd.f32 %v3529, %v3532
        %vm3534 = vweird.f32 %v3525
        %vm3535 = vweird.f32 %v3529
        %vm3536 = vmor %vm3534, %vm3535
        %v3537 = vsel %vm3536, %v3529, %v3533
        %v3538 = vand.u32 2147483647, %v3525
        %vm3539 = vcmp.eq.f32.partialorder %v3538, 8.507059e+37
        %v3540 = vand.u32 %v3525, 2147483648
        %v3541 = vor.u32 1.1754944e-38, %v3540
        %v3542 = vsel %vm3539, %v3541, %v3537
        %v3543 = vmul.f32 1.0, %v3542
        %v3544 = vrcp.pop %v3526
        %v3545 = vmul.f32 %v3526, %v3544
        %v3546 = vsub.f32 1.0, %v3545
        %v3547 = vmul.f32 %v3544, %v3546
        %v3548 = vadd.f32 %v3544, %v3547
        %vm3549 = vweird.f32 %v3526
        %vm3550 = vweird.f32 %v3544
        %vm3551 = vmor %vm3549, %vm3550
        %v3552 = vsel %vm3551, %v3544, %v3548
        %v3553 = vand.u32 2147483647, %v3526
        %vm3554 = vcmp.eq.f32.partialorder %v3553, 8.507059e+37
        %v3555 = vand.u32 %v3526, 2147483648
        %v3556 = vor.u32 1.1754944e-38, %v3555
        %v3557 = vsel %vm3554, %v3556, %v3552
        %v3558 = vmul.f32 1.0, %v3557
        %v3559 = vrcp.pop %v3527
        %v3560 = vmul.f32 %v3527, %v3559
        %v3561 = vsub.f32 1.0, %v3560
        %v3562 = vmul.f32 %v3559, %v3561
        %v3563 = vadd.f32 %v3559, %v3562
        %vm3564 = vweird.f32 %v3527
        %vm3565 = vweird.f32 %v3559
        %vm3566 = vmor %vm3564, %vm3565
        %v3567 = vsel %vm3566, %v3559, %v3563
        %v3568 = vand.u32 2147483647, %v3527
        %vm3569 = vcmp.eq.f32.partialorder %v3568, 8.507059e+37
        %v3570 = vand.u32 %v3527, 2147483648
        %v3571 = vor.u32 1.1754944e-38, %v3570
        %v3572 = vsel %vm3569, %v3571, %v3567
        %v3573 = vmul.f32 1.0, %v3572
        %v3574 = vrcp.pop %v3528
        %v3575 = vmul.f32 %v3528, %v3574
        %v3576 = vsub.f32 1.0, %v3575
        %v3577 = vmul.f32 %v3574, %v3576
        %v3578 = vadd.f32 %v3574, %v3577
        %vm3579 = vweird.f32 %v3528
        %vm3580 = vweird.f32 %v3574
        %vm3581 = vmor %vm3579, %vm3580
        %v3582 = vsel %vm3581, %v3574, %v3578
        %v3583 = vand.u32 2147483647, %v3528
        %vm3584 = vcmp.eq.f32.partialorder %v3583, 8.507059e+37
        %v3585 = vand.u32 %v3528, 2147483648
        %v3586 = vor.u32 1.1754944e-38, %v3585
        %v3587 = vsel %vm3584, %v3586, %v3582
        %v3588 = vmul.f32 1.0, %v3587
        %v3589 = vmul.f32 %v3573, 2.0
        %v3590 = vsub.f32 %v3589, 1.0
        %v3591 = vmul.f32 %v3558, %v3333
        %v3592 = vmul.f32 %v3543, %v3590
        %v3593 = vadd.f32 %v3591, %v3592
        %v3594 = vtanh.pop %v3593
        %v3595 = vmul.f32 %v3588, %v3594
        %3596 = vmatpush.msra.mxu0 %v790
        %3597 = vmatpush.msra.mxu0 %v782
        %3598 = vmatpush.msra.mxu0 %v774
        %3599 = vmatpush.msra.mxu0 %v766
        %3600 = vmatpush.msra.mxu0 %v758
        %3601 = vmatpush.msra.mxu0 %v750
        %3602 = vmatpush.msra.mxu0 %v742
        %3603 = vmatpush.msra.mxu0 %v734
        %3604 = vmatpush.msra.mxu0 %v726
        %3605 = vmatpush.msra.mxu0 %v718
        %3606 = vmatpush.msra.mxu0 %v710
        %3607 = vmatpush.msra.mxu0 %v702
        %3608 = vmatpush.msra.mxu0 %v694
        %3609 = vmatpush.msra.mxu0 %v686
        %3610 = vmatpush.msra.mxu0 %v678
        %3611 = vmatpush.msra.mxu0 %v670
        %3612 = vmatmul.f32.gmra.mxu0 %v3595
        %v3613 = vpop.f32.mrf.mxu0
        %v3614 = vadd.f32 0.0, %v3613
        %3615 = vdwg.mxu0
        %3616 = vmatpush.msra.mxu0 %v791
        %3617 = vmatpush.msra.mxu0 %v783
        %3618 = vmatpush.msra.mxu0 %v775
        %3619 = vmatpush.msra.mxu0 %v767
        %3620 = vmatpush.msra.mxu0 %v759
        %3621 = vmatpush.msra.mxu0 %v751
        %3622 = vmatpush.msra.mxu0 %v743
        %3623 = vmatpush.msra.mxu0 %v735
        %3624 = vmatpush.msra.mxu0 %v727
        %3625 = vmatpush.msra.mxu0 %v719
        %3626 = vmatpush.msra.mxu0 %v711
        %3627 = vmatpush.msra.mxu0 %v703
        %3628 = vmatpush.msra.mxu0 %v695
        %3629 = vmatpush.msra.mxu0 %v687
        %3630 = vmatpush.msra.mxu0 %v679
        %3631 = vmatpush.msra.mxu0 %v671
        %3632 = vmatmul.f32.gmra.mxu0 %v3595
        %v3633 = vpop.f32.mrf.mxu0
        %v3634 = vadd.f32 0.0, %v3633
        %3635 = vdwg.mxu0
        %3636 = vmatpush.msra.mxu0 %v792
        %3637 = vmatpush.msra.mxu0 %v784
        %3638 = vmatpush.msra.mxu0 %v776
        %3639 = vmatpush.msra.mxu0 %v768
        %3640 = vmatpush.msra.mxu0 %v760
        %3641 = vmatpush.msra.mxu0 %v752
        %3642 = vmatpush.msra.mxu0 %v744
        %3643 = vmatpush.msra.mxu0 %v736
        %3644 = vmatpush.msra.mxu0 %v728
        %3645 = vmatpush.msra.mxu0 %v720
        %3646 = vmatpush.msra.mxu0 %v712
        %3647 = vmatpush.msra.mxu0 %v704
        %3648 = vmatpush.msra.mxu0 %v696
        %3649 = vmatpush.msra.mxu0 %v688
        %3650 = vmatpush.msra.mxu0 %v680
        %3651 = vmatpush.msra.mxu0 %v672
        %3652 = vmatmul.f32.gmra.mxu0 %v3595
        %v3653 = vpop.f32.mrf.mxu0
        %v3654 = vadd.f32 0.0, %v3653
        %3655 = vdwg.mxu0
        %3656 = vmatpush.msra.mxu0 %v793
        %3657 = vmatpush.msra.mxu0 %v785
        %3658 = vmatpush.msra.mxu0 %v777
        %3659 = vmatpush.msra.mxu0 %v769
        %3660 = vmatpush.msra.mxu0 %v761
        %3661 = vmatpush.msra.mxu0 %v753
        %3662 = vmatpush.msra.mxu0 %v745
        %3663 = vmatpush.msra.mxu0 %v737
        %3664 = vmatpush.msra.mxu0 %v729
        %3665 = vmatpush.msra.mxu0 %v721
        %3666 = vmatpush.msra.mxu0 %v713
        %3667 = vmatpush.msra.mxu0 %v705
        %3668 = vmatpush.msra.mxu0 %v697
        %3669 = vmatpush.msra.mxu0 %v689
        %3670 = vmatpush.msra.mxu0 %v681
        %3671 = vmatpush.msra.mxu0 %v673
        %3672 = vmatmul.f32.gmra.mxu0 %v3595
        %v3673 = vpop.f32.mrf.mxu0
        %v3674 = vadd.f32 0.0, %v3673
        %3675 = vdwg.mxu0
        %3676 = vmatpush.msra.mxu0 %v794
        %3677 = vmatpush.msra.mxu0 %v786
        %3678 = vmatpush.msra.mxu0 %v778
        %3679 = vmatpush.msra.mxu0 %v770
        %3680 = vmatpush.msra.mxu0 %v762
        %3681 = vmatpush.msra.mxu0 %v754
        %3682 = vmatpush.msra.mxu0 %v746
        %3683 = vmatpush.msra.mxu0 %v738
        %3684 = vmatpush.msra.mxu0 %v730
        %3685 = vmatpush.msra.mxu0 %v722
        %3686 = vmatpush.msra.mxu0 %v714
        %3687 = vmatpush.msra.mxu0 %v706
        %3688 = vmatpush.msra.mxu0 %v698
        %3689 = vmatpush.msra.mxu0 %v690
        %3690 = vmatpush.msra.mxu0 %v682
        %3691 = vmatpush.msra.mxu0 %v674
        %3692 = vmatmul.f32.gmra.mxu0 %v3595
        %v3693 = vpop.f32.mrf.mxu0
        %v3694 = vadd.f32 0.0, %v3693
        %3695 = vdwg.mxu0
        %3696 = vmatpush.msra.mxu0 %v795
        %3697 = vmatpush.msra.mxu0 %v787
        %3698 = vmatpush.msra.mxu0 %v779
        %3699 = vmatpush.msra.mxu0 %v771
        %3700 = vmatpush.msra.mxu0 %v763
        %3701 = vmatpush.msra.mxu0 %v755
        %3702 = vmatpush.msra.mxu0 %v747
        %3703 = vmatpush.msra.mxu0 %v739
        %3704 = vmatpush.msra.mxu0 %v731
        %3705 = vmatpush.msra.mxu0 %v723
        %3706 = vmatpush.msra.mxu0 %v715
        %3707 = vmatpush.msra.mxu0 %v707
        %3708 = vmatpush.msra.mxu0 %v699
        %3709 = vmatpush.msra.mxu0 %v691
        %3710 = vmatpush.msra.mxu0 %v683
        %3711 = vmatpush.msra.mxu0 %v675
        %3712 = vmatmul.f32.gmra.mxu0 %v3595
        %v3713 = vpop.f32.mrf.mxu0
        %v3714 = vadd.f32 0.0, %v3713
        %3715 = vdwg.mxu0
        %3716 = vmatpush.msra.mxu0 %v796
        %3717 = vmatpush.msra.mxu0 %v788
        %3718 = vmatpush.msra.mxu0 %v780
        %3719 = vmatpush.msra.mxu0 %v772
        %3720 = vmatpush.msra.mxu0 %v764
        %3721 = vmatpush.msra.mxu0 %v756
        %3722 = vmatpush.msra.mxu0 %v748
        %3723 = vmatpush.msra.mxu0 %v740
        %3724 = vmatpush.msra.mxu0 %v732
        %3725 = vmatpush.msra.mxu0 %v724
        %3726 = vmatpush.msra.mxu0 %v716
        %3727 = vmatpush.msra.mxu0 %v708
        %3728 = vmatpush.msra.mxu0 %v700
        %3729 = vmatpush.msra.mxu0 %v692
        %3730 = vmatpush.msra.mxu0 %v684
        %3731 = vmatpush.msra.mxu0 %v676
        %3732 = vmatmul.f32.gmra.mxu0 %v3595
        %v3733 = vpop.f32.mrf.mxu0
        %v3734 = vadd.f32 0.0, %v3733
        %3735 = vdwg.mxu0
        %3736 = vmatpush.msra.mxu0 %v797
        %3737 = vmatpush.msra.mxu0 %v789
        %3738 = vmatpush.msra.mxu0 %v781
        %3739 = vmatpush.msra.mxu0 %v773
        %3740 = vmatpush.msra.mxu0 %v765
        %3741 = vmatpush.msra.mxu0 %v757
        %3742 = vmatpush.msra.mxu0 %v749
        %3743 = vmatpush.msra.mxu0 %v741
        %3744 = vmatpush.msra.mxu0 %v733
        %3745 = vmatpush.msra.mxu0 %v725
        %3746 = vmatpush.msra.mxu0 %v717
        %3747 = vmatpush.msra.mxu0 %v709
        %3748 = vmatpush.msra.mxu0 %v701
        %3749 = vmatpush.msra.mxu0 %v693
        %3750 = vmatpush.msra.mxu0 %v685
        %3751 = vmatpush.msra.mxu0 %v677
        %3752 = vmatmul.f32.gmra.mxu0 %v3595
        %v3753 = vpop.f32.mrf.mxu0
        %v3754 = vadd.f32 0.0, %v3753
        %3755 = vdwg.mxu0
        %v3756 = vadd.f32 %v3694, %v800
        %v3757 = vadd.f32 %v3714, %v801
        %v3758 = vadd.f32 %v3734, %v802
        %v3759 = vadd.f32 %v3754, %v803
        %s3760 = sld [smem:[#allocation3 + $0x5]]
        %p3761 = scmp.eq.s32.totalorder %s3760, 1
        %s3762 = scalar_select %p3761, 1, 0
        %v3763 = vstv %s3762
        %vm3764 = vcmp.eq.s32.totalorder %v3763, 1
        %v3765 = vsel %vm3764, %v2013, %v3756
        %v3766 = vsel %vm3764, %v2051, %v3757
        %v3767 = vsel %vm3764, %v2089, %v3758
        %v3768 = vsel %vm3764, %v2127, %v3759
        %v3769 = vadd.f32 %v3614, %v3765
        %v3770 = vadd.f32 %v3634, %v3766
        %v3771 = vadd.f32 %v3654, %v3767
        %v3772 = vadd.f32 %v3674, %v3768
        %v3773 = vxor.u32 %v3769, 2147483648
        %v3774 = vxor.u32 %v3770, 2147483648
        %v3775 = vxor.u32 %v3771, 2147483648
        %v3776 = vxor.u32 %v3772, 2147483648
        %v3777 = vmul.f32 %v3773, 1.442695
        %v3778 = vpow.pop %v3777
        %v3779 = vmul.f32 %v3774, 1.442695
        %v3780 = vpow.pop %v3779
        %v3781 = vmul.f32 %v3775, 1.442695
        %v3782 = vpow.pop %v3781
        %v3783 = vmul.f32 %v3776, 1.442695
        %v3784 = vpow.pop %v3783
        %v3785 = vadd.f32 %v3778, 1.0
        %v3786 = vadd.f32 %v3780, 1.0
        %v3787 = vadd.f32 %v3782, 1.0
        %v3788 = vadd.f32 %v3784, 1.0
        %v3789 = vrcp.pop %v3785
        %v3790 = vmul.f32 %v3785, %v3789
        %v3791 = vsub.f32 1.0, %v3790
        %v3792 = vmul.f32 %v3789, %v3791
        %v3793 = vadd.f32 %v3789, %v3792
        %vm3794 = vweird.f32 %v3785
        %vm3795 = vweird.f32 %v3789
        %vm3796 = vmor %vm3794, %vm3795
        %v3797 = vsel %vm3796, %v3789, %v3793
        %v3798 = vand.u32 2147483647, %v3785
        %vm3799 = vcmp.eq.f32.partialorder %v3798, 8.507059e+37
        %v3800 = vand.u32 %v3785, 2147483648
        %v3801 = vor.u32 1.1754944e-38, %v3800
        %v3802 = vsel %vm3799, %v3801, %v3797
        %v3803 = vmul.f32 1.0, %v3802
        %v3804 = vrcp.pop %v3786
        %v3805 = vmul.f32 %v3786, %v3804
        %v3806 = vsub.f32 1.0, %v3805
        %v3807 = vmul.f32 %v3804, %v3806
        %v3808 = vadd.f32 %v3804, %v3807
        %vm3809 = vweird.f32 %v3786
        %vm3810 = vweird.f32 %v3804
        %vm3811 = vmor %vm3809, %vm3810
        %v3812 = vsel %vm3811, %v3804, %v3808
        %v3813 = vand.u32 2147483647, %v3786
        %vm3814 = vcmp.eq.f32.partialorder %v3813, 8.507059e+37
        %v3815 = vand.u32 %v3786, 2147483648
        %v3816 = vor.u32 1.1754944e-38, %v3815
        %v3817 = vsel %vm3814, %v3816, %v3812
        %v3818 = vmul.f32 1.0, %v3817
        %v3819 = vrcp.pop %v3787
        %v3820 = vmul.f32 %v3787, %v3819
        %v3821 = vsub.f32 1.0, %v3820
        %v3822 = vmul.f32 %v3819, %v3821
        %v3823 = vadd.f32 %v3819, %v3822
        %vm3824 = vweird.f32 %v3787
        %vm3825 = vweird.f32 %v3819
        %vm3826 = vmor %vm3824, %vm3825
        %v3827 = vsel %vm3826, %v3819, %v3823
        %v3828 = vand.u32 2147483647, %v3787
        %vm3829 = vcmp.eq.f32.partialorder %v3828, 8.507059e+37
        %v3830 = vand.u32 %v3787, 2147483648
        %v3831 = vor.u32 1.1754944e-38, %v3830
        %v3832 = vsel %vm3829, %v3831, %v3827
        %v3833 = vmul.f32 1.0, %v3832
        %v3834 = vrcp.pop %v3788
        %v3835 = vmul.f32 %v3788, %v3834
        %v3836 = vsub.f32 1.0, %v3835
        %v3837 = vmul.f32 %v3834, %v3836
        %v3838 = vadd.f32 %v3834, %v3837
        %vm3839 = vweird.f32 %v3788
        %vm3840 = vweird.f32 %v3834
        %vm3841 = vmor %vm3839, %vm3840
        %v3842 = vsel %vm3841, %v3834, %v3838
        %v3843 = vand.u32 2147483647, %v3788
        %vm3844 = vcmp.eq.f32.partialorder %v3843, 8.507059e+37
        %v3845 = vand.u32 %v3788, 2147483648
        %v3846 = vor.u32 1.1754944e-38, %v3845
        %v3847 = vsel %vm3844, %v3846, %v3842
        %v3848 = vmul.f32 1.0, %v3847
        %v3849 = vmul.f32 %v3833, 2.0
        %v3850 = vsub.f32 %v3849, 1.0
        %v3851 = vmul.f32 %v3818, %v3593
        %v3852 = vmul.f32 %v3803, %v3850
        %v3853 = vadd.f32 %v3851, %v3852
        %v3854 = vtanh.pop %v3853
        %v3855 = vmul.f32 %v3848, %v3854
        %v3856 = vld [vmem:[%s11] sm:$0xff]
        %v3857 = vld [vmem:[%s11 + $0x8] sm:$0xff]
        %v3858 = vld [vmem:[%s11 + $0x10] sm:$0xff]
        %v3859 = vld [vmem:[%s11 + $0x18] sm:$0xff]
        %v3860 = vld [vmem:[%s11 + $0x20] sm:$0xff]
        %v3861 = vld [vmem:[%s11 + $0x28] sm:$0xff]
        %v3862 = vld [vmem:[%s11 + $0x30] sm:$0xff]
        %v3863 = vld [vmem:[%s11 + $0x38] sm:$0xff]
        %v3864 = vld [vmem:[%s11 + $0x40] sm:$0xff]
        %v3865 = vld [vmem:[%s11 + $0x48] sm:$0xff]
        %v3866 = vld [vmem:[%s11 + $0x50] sm:$0xff]
        %v3867 = vld [vmem:[%s11 + $0x58] sm:$0xff]
        %v3868 = vld [vmem:[%s11 + $0x60] sm:$0xff]
        %v3869 = vld [vmem:[%s11 + $0x68] sm:$0xff]
        %v3870 = vld [vmem:[%s11 + $0x70] sm:$0xff]
        %v3871 = vld [vmem:[%s11 + $0x78] sm:$0xff]
        %v3872 = vld [vmem:[%s12] sm:$0x1]
        %v3874 = vperm.slane %v3872, 0
        %3876 = vmatpush.msra.mxu0 %v3871
        %3877 = vmatpush.msra.mxu0 %v3870
        %3878 = vmatpush.msra.mxu0 %v3869
        %3879 = vmatpush.msra.mxu0 %v3868
        %3880 = vmatpush.msra.mxu0 %v3867
        %3881 = vmatpush.msra.mxu0 %v3866
        %3882 = vmatpush.msra.mxu0 %v3865
        %3883 = vmatpush.msra.mxu0 %v3864
        %3884 = vmatpush.msra.mxu0 %v3863
        %3885 = vmatpush.msra.mxu0 %v3862
        %3886 = vmatpush.msra.mxu0 %v3861
        %3887 = vmatpush.msra.mxu0 %v3860
        %3888 = vmatpush.msra.mxu0 %v3859
        %3889 = vmatpush.msra.mxu0 %v3858
        %3890 = vmatpush.msra.mxu0 %v3857
        %3891 = vmatpush.msra.mxu0 %v3856
        %3892 = vmatmul.f32.gmra.mxu0 %v2295
        %v3893 = vpop.f32.mrf.mxu0
        %v3894 = vadd.f32 %v3874, %v3893
        %3895 = vmatmul.f32.gmra.mxu0 %v2555
        %v3896 = vpop.f32.mrf.mxu0
        %v3897 = vadd.f32 %v3874, %v3896
        %3898 = vmatmul.f32.gmra.mxu0 %v2815
        %v3899 = vpop.f32.mrf.mxu0
        %v3900 = vadd.f32 %v3874, %v3899
        %3901 = vmatmul.f32.gmra.mxu0 %v3075
        %v3902 = vpop.f32.mrf.mxu0
        %v3903 = vadd.f32 %v3874, %v3902
        %3904 = vmatmul.f32.gmra.mxu0 %v3335
        %v3905 = vpop.f32.mrf.mxu0
        %v3906 = vadd.f32 %v3874, %v3905
        %3907 = vmatmul.f32.gmra.mxu0 %v3595
        %v3908 = vpop.f32.mrf.mxu0
        %v3909 = vadd.f32 %v3874, %v3908
        %3910 = vmatmul.f32.gmra.mxu0 %v3855
        %v3911 = vpop.f32.mrf.mxu0
        %v3912 = vadd.f32 %v3874, %v3911
        %3913 = vdwg.mxu0
        %3914 = vst.msk [vmem:[%s601] sm:$0xff] %vm1946, 0.0
        %s3915 = scalar_lea.vmem %s601, 8 [#allocation10]
        %3916 = vst.msk [vmem:[%s3915] sm:$0xff] %vm1946, %v3894
        %s3917 = scalar_lea.vmem %s601, 16 [#allocation10]
        %3918 = vst.msk [vmem:[%s3917] sm:$0xff] %vm1946, %v3897
        %s3919 = scalar_lea.vmem %s601, 24 [#allocation10]
        %3920 = vst.msk [vmem:[%s3919] sm:$0xff] %vm1946, %v3900
        %s3921 = scalar_lea.vmem %s601, 32 [#allocation10]
        %3922 = vst.msk [vmem:[%s3921] sm:$0xff] %vm1946, %v3903
        %s3923 = scalar_lea.vmem %s601, 40 [#allocation10]
        %3924 = vst.msk [vmem:[%s3923] sm:$0xff] %vm1946, %v3906
        %s3925 = scalar_lea.vmem %s601, 48 [#allocation10]
        %3926 = vst.msk [vmem:[%s3925] sm:$0xff] %vm1946, %v3909
        %s3927 = scalar_lea.vmem %s601, 56 [#allocation10]
        %3928 = vst.msk [vmem:[%s3927] sm:$0xff] %vm1946, %v3912
        %s3929 = sand.u32 %s309, 1
        %s3930 = sand.u32 %s309, 1
        %s3931 = smul.addr %s3930, 64
        %s3932 = scalar_lea.vmem [#allocation10], %s3931
        // Predicated region
        $region153: #{trajectory_generator_forward.1} parent=135 // pred_check
          %p3933 = pneg %p319
        $region154: #{trajectory_generator_forward.1} parent=135 // pred_check_branch
          %3935 = sbr.rel (%p3933) target = $region156
        $region155: #{trajectory_generator_forward.1} parent=135 // pred_region
          %s3936 = smul.addr %s34, 8
          %s3937 = scalar_lea.vmem %s13, %s3936
          // Predicated region
          $region157: #{trajectory_generator_forward.1} parent=155 // pred_check
            _
          $region158: #{trajectory_generator_forward.1} parent=155 // pred_check_branch
            %3939 = sbr.rel (0) target = $region160
          $region159: #{trajectory_generator_forward.1} parent=155 // pred_region
            // Predicated region
            $region161: #{trajectory_generator_forward.1} parent=159 // pred_check
              _
            $region162: #{trajectory_generator_forward.1} parent=159 // pred_check_branch
              %3941 = sbr.rel (0) target = $region164
            $region163: #{trajectory_generator_forward.1} parent=159 // pred_region
              // Predicated region
              $region176: #{trajectory_generator_forward.1} parent=163 // pred_check
                _
              $region177: #{trajectory_generator_forward.1} parent=163 // pred_check_branch
                %3971 = sbr.rel (0) target = $region179
              $region178: #{trajectory_generator_forward.1} parent=163 // pred_region
                loop: start=0, step=1, limit=1
                $region180: #{trajectory_generator_forward.1} parent=178 // loop_pre_header
                  _
                $region181: #{trajectory_generator_forward.1} parent=178 // loop_header
                  %s3973 = sphi 0, %s3977
                  %p3974 = scmp.ge.s32.totalorder %s3973, 1
                  %s3978 = sphi %s3932, %s3932
                  %s3979 = sphi %s3937, %s3937
                $region182: #{trajectory_generator_forward.1} parent=178 // loop_header_branch
                  %3976 = sbr.rel (%p3974) target = $region186
                $region183: #{trajectory_generator_forward.1} parent=178 // loop_body
                  %v3980 = vld [vmem:[%s3978] sm:$0xff]
                  %3981 = vst [vmem:[%s3979] sm:$0xff] %v3980
                  %v3982 = vld [vmem:[%s3978 + $0x8] sm:$0xff]
                  %3983 = vst [vmem:[%s3979 + $0x10] sm:$0xff] %v3982
                  %v3984 = vld [vmem:[%s3978 + $0x10] sm:$0xff]
                  %3985 = vst [vmem:[%s3979 + $0x20] sm:$0xff] %v3984
                  %v3986 = vld [vmem:[%s3978 + $0x18] sm:$0xff]
                  %3987 = vst [vmem:[%s3979 + $0x30] sm:$0xff] %v3986
                  %v3988 = vld [vmem:[%s3978 + $0x20] sm:$0xff]
                  %3989 = vst [vmem:[%s3979 + $0x40] sm:$0xff] %v3988
                  %v3990 = vld [vmem:[%s3978 + $0x28] sm:$0xff]
                  %3991 = vst [vmem:[%s3979 + $0x50] sm:$0xff] %v3990
                  %v3992 = vld [vmem:[%s3978 + $0x30] sm:$0xff]
                  %3993 = vst [vmem:[%s3979 + $0x60] sm:$0xff] %v3992
                  %v3994 = vld [vmem:[%s3978 + $0x38] sm:$0xff]
                  %3995 = vst [vmem:[%s3979 + $0x70] sm:$0xff] %v3994
                $region184: #{trajectory_generator_forward.1} parent=178 // loop_footer
                  %s3977 = sadd.s32 1, %s3973
                $region185: #{trajectory_generator_forward.1} parent=178 // loop_footer_branch
                  %3972 = sbr.rel target = $region181
                $region186: #{trajectory_generator_forward.1} parent=178 // loop_exit
                  _
              $region179: #{trajectory_generator_forward.1} parent=163 // pred_fallthru
                _
              // Predicated region
              $region187: #{trajectory_generator_forward.1} parent=163 // pred_check
                _
              $region188: #{trajectory_generator_forward.1} parent=163 // pred_check_branch
                %3997 = sbr.rel target = $region190
              $region189: #{trajectory_generator_forward.1} parent=163 // pred_region
                _
              $region190: #{trajectory_generator_forward.1} parent=163 // pred_fallthru
                _
            $region164: #{trajectory_generator_forward.1} parent=159 // pred_fallthru
              _
            // Predicated region
            $region165: #{trajectory_generator_forward.1} parent=159 // pred_check
              _
            $region166: #{trajectory_generator_forward.1} parent=159 // pred_check_branch
              %3943 = sbr.rel target = $region168
            $region167: #{trajectory_generator_forward.1} parent=159 // pred_region
              %s3945 = ssub.s32 256, 1
              loop: start=0, step=1, limit=1
              $region169: #{trajectory_generator_forward.1} parent=167 // loop_pre_header
                _
              $region170: #{trajectory_generator_forward.1} parent=167 // loop_header
                %s3947 = sphi 0, %s3951
                %p3948 = scmp.ge.s32.totalorder %s3947, 1
                %s3952 = sphi %s3932, %s3932
                %s3953 = sphi %s3937, %s3937
              $region171: #{trajectory_generator_forward.1} parent=167 // loop_header_branch
                %3950 = sbr.rel (%p3948) target = $region175
              $region172: #{trajectory_generator_forward.1} parent=167 // loop_body
                %v3954 = vld [vmem:[%s3952] sm:%s3945]
                %3955 = vst [vmem:[%s3953] sm:%s3945] %v3954
                %v3956 = vld [vmem:[%s3952 + $0x8] sm:%s3945]
                %3957 = vst [vmem:[%s3953 + $0x10] sm:%s3945] %v3956
                %v3958 = vld [vmem:[%s3952 + $0x10] sm:%s3945]
                %3959 = vst [vmem:[%s3953 + $0x20] sm:%s3945] %v3958
                %v3960 = vld [vmem:[%s3952 + $0x18] sm:%s3945]
                %3961 = vst [vmem:[%s3953 + $0x30] sm:%s3945] %v3960
                %v3962 = vld [vmem:[%s3952 + $0x20] sm:%s3945]
                %3963 = vst [vmem:[%s3953 + $0x40] sm:%s3945] %v3962
                %v3964 = vld [vmem:[%s3952 + $0x28] sm:%s3945]
                %3965 = vst [vmem:[%s3953 + $0x50] sm:%s3945] %v3964
                %v3966 = vld [vmem:[%s3952 + $0x30] sm:%s3945]
                %3967 = vst [vmem:[%s3953 + $0x60] sm:%s3945] %v3966
                %v3968 = vld [vmem:[%s3952 + $0x38] sm:%s3945]
                %3969 = vst [vmem:[%s3953 + $0x70] sm:%s3945] %v3968
              $region173: #{trajectory_generator_forward.1} parent=167 // loop_footer
                %s3951 = sadd.s32 1, %s3947
              $region174: #{trajectory_generator_forward.1} parent=167 // loop_footer_branch
                %3946 = sbr.rel target = $region170
              $region175: #{trajectory_generator_forward.1} parent=167 // loop_exit
                _
            $region168: #{trajectory_generator_forward.1} parent=159 // pred_fallthru
              _
          $region160: #{trajectory_generator_forward.1} parent=155 // pred_fallthru
            _
          %3998 = vnop
        $region156: #{trajectory_generator_forward.1} parent=135 // pred_fallthru
          _
      $region136: #{trajectory_generator_forward.1} parent=5 // pred_fallthru
        _
      %p3999 = scmp.le.s32.totalorder 2, %s29
      // Predicated region
      $region191: #{trajectory_generator_forward.1} parent=5 // pred_check
        %p4000 = pneg %p3999
      $region192: #{trajectory_generator_forward.1} parent=5 // pred_check_branch
        %4002 = sbr.rel (%p4000) target = $region194
      $region193: #{trajectory_generator_forward.1} parent=5 // pred_region
        %s4003 = ssub.s32 %s29, 2
        // Predicated region
        $region195: #{trajectory_generator_forward.1} parent=193 // pred_check
          %p4004 = pneg %p325
        $region196: #{trajectory_generator_forward.1} parent=193 // pred_check_branch
          %4006 = sbr.rel (%p4004) target = $region198
        $region197: #{trajectory_generator_forward.1} parent=193 // pred_region
          %s4007 = sand.u32 %s310, 1
          %s4008 = sand.u32 %s310, 1
          %s4009 = smul.addr %s4008, 64
          %s4010 = scalar_lea.vmem [#allocation10], %s4009
        $region198: #{trajectory_generator_forward.1} parent=193 // pred_fallthru
          _
      $region194: #{trajectory_generator_forward.1} parent=5 // pred_fallthru
        _
    $region6: #{trajectory_generator_forward.1} parent=1 // loop_footer
      %s33 = sadd.s32 1, %s29
    $region7: #{trajectory_generator_forward.1} parent=1 // loop_footer_branch
      %28 = sbr.rel target = $region3
    $region8: #{trajectory_generator_forward.1} parent=1 // loop_exit
      _
    %4011 = vsyncpa [#allocation7], 1
    %s4012 = scalar_lea.sflag [#allocation7], 1
    %4013 = vsyncpa %s4012, 1
    %4014 = vsyncpa [#allocation9], 1

</llo_original>
